<compile_context>
chip_gen: v5e
topology: v5e:2x2
jax: 0.10.0
libtpu: 0.0.40
codegen_flags: <defaults>
</compile_context>

<pallas_src>
from functools import partial

import jax
import jax.numpy as jnp
from jax import lax
from jax.experimental import pallas as pl
from jax.experimental.pallas import tpu as pltpu


_INV_SQRT2 = 0.7071067811865476
_SQRT_2_OVER_PI = 0.7978845608028654


def _layernorm(x, gamma, beta, eps):
    # x: (T, C) f32; gamma/beta: (1, C) f32.  Matches torch.nn.LayerNorm(dim).
    mean = jnp.mean(x, axis=-1, keepdims=True)
    xc = x - mean
    var = jnp.mean(xc * xc, axis=-1, keepdims=True)
    return xc * lax.rsqrt(var + eps) * gamma + beta


def _gelu(x, exact):
    if exact:
        # torch.nn.GELU() default = exact (erf) formulation, in f32.
        return 0.5 * x * (1.0 + lax.erf(x * _INV_SQRT2))
    # tanh approximation (EUP slot, cheaper); deviates slightly from torch.
    return 0.5 * x * (1.0 + jnp.tanh(_SQRT_2_OVER_PI * (x + 0.044715 * x * x * x)))


def respost_block_kernel(
    # inputs
    x_ref,       # (1, TN, C)      f32  residual-stream token tile
    q_ref,       # (1, H, TN, hd)  bf16 (softmax scale already folded in)
    k_ref,       # (1, H, N, hd)   bf16 full sequence of this batch element
    v_ref,       # (1, H, N, hd)   bf16
    wproj_ref,   # (H, hd, C)      bf16 head-major attention output projection
    bproj_ref,   # (1, C)          f32
    g1_ref,      # (1, C)          f32  LayerNorm1 weight
    b1_ref,      # (1, C)          f32  LayerNorm1 bias
    wfc1_ref,    # (C, Hd)         bf16
    bfc1_ref,    # (1, Hd)         f32
    wfc2_ref,    # (Hd, C)         bf16
    bfc2_ref,    # (1, C)          f32
    g2_ref,      # (1, C)          f32  LayerNorm2 weight
    b2_ref,      # (1, C)          f32  LayerNorm2 bias
    # outputs
    o_ref,       # (1, TN, C)
    *,
    num_heads,
    ln_eps,
    exact_gelu,
):
    f32, bf16 = jnp.float32, jnp.bfloat16

    x_t = x_ref[0]                       # (TN, C) f32
    q = q_ref[0]                         # (H, TN, hd) bf16
    k = k_ref[0]                         # (H, N, hd)  bf16
    v = v_ref[0]                         # (H, N, hd)  bf16

    # ---- attention: one head-batched matmul pair -----------------------------
    s = jnp.einsum("htd,hnd->htn", q, k, preferred_element_type=f32)  # (H,TN,N)
    s = s - jnp.max(s, axis=-1, keepdims=True)
    p = jnp.exp(s)
    p = p * pl.reciprocal(jnp.sum(p, axis=-1, keepdims=True), approx=True)
    ctx = jnp.einsum("htn,hnd->htd", p.astype(bf16), v,
                     preferred_element_type=f32)                      # (H,TN,hd)
    ctx = ctx.astype(bf16)

    # ---- output projection: accumulate per head ------------------------------
    # Equivalent to concat(heads) @ Wproj, but with no head-concat scratch and
    # no masked sub-128-lane stores; the serial accumulate bounds live ranges.
    attn = bproj_ref[...]                                             # (1, C)
    for h in range(num_heads):
        attn = attn + jnp.dot(ctx[h], wproj_ref[h],
                              preferred_element_type=f32)             # (TN, C)

    # residual + post-norm 1
    y = x_t + _layernorm(attn, g1_ref[...], b1_ref[...], ln_eps)

    # ---- MLP: fc1 -> GELU -> fc2 (bf16 operands, f32 accumulation/math) ------
    h1 = jnp.dot(y.astype(bf16), wfc1_ref[...],
                 preferred_element_type=f32) + bfc1_ref[...]
    h1 = _gelu(h1, exact_gelu)
    h2 = jnp.dot(h1.astype(bf16), wfc2_ref[...],
                 preferred_element_type=f32) + bfc2_ref[...]

    # residual + post-norm 2
    o_ref[0] = (y + _layernorm(h2, g2_ref[...], b2_ref[...], ln_eps)).astype(o_ref.dtype)


def prepare_params(params, num_heads):
    """One-time parameter preparation (do at load time, NOT per call):
    bf16 master copies of the matmul weights and a head-major (H, hd, C)
    reshape of the attention output projection."""
    bf16, f32 = jnp.bfloat16, jnp.float32
    C = params["wproj"].shape[0]
    hd = C // num_heads
    hidden = params["wfc1"].shape[1]
    return {
        "wqkv": params["wqkv"].astype(bf16),                              # (C, 3C)
        "wproj_r": params["wproj"].astype(bf16).reshape(num_heads, hd, C),
        "bproj": params["bproj"].astype(f32).reshape(1, C),
        "g1": params["g1"].astype(f32).reshape(1, C),
        "b1": params["b1"].astype(f32).reshape(1, C),
        "wfc1": params["wfc1"].astype(bf16),                              # (C, Hd)
        "bfc1": params["bfc1"].astype(f32).reshape(1, hidden),
        "wfc2": params["wfc2"].astype(bf16),                              # (Hd, C)
        "bfc2": params["bfc2"].astype(f32).reshape(1, C),
        "g2": params["g2"].astype(f32).reshape(1, C),
        "b2": params["b2"].astype(f32).reshape(1, C),
    }


def _default_vmem_limit_bytes():
    cap = 128 * 1024 * 1024
    try:
        cap = int(pltpu.get_tpu_info().vmem_capacity_bytes)
    except Exception:
        pass
    # Leave DMA/compiler headroom: ~56 MiB on 64-MiB parts (v7x),
    # ~110 MiB on 128-MiB parts (v5e/v6e).
    return int(min(cap - 8 * 1024 * 1024, 110 * 1024 * 1024))


def respost_block(x, prepared, *, num_heads, token_tile=128,
                  vmem_limit_bytes=None, ln_eps=1e-5, exact_gelu=True,
                  single_buffer_weights=True):
    """ResPostBlock forward.  x: (B, N, C) f32; `prepared` from
    prepare_params() (bf16 weights, (in, out) layout)."""
    B, N, C = x.shape
    assert C % num_heads == 0, "dim must be divisible by num_heads"
    H = num_heads
    hd = C // H
    hidden = prepared["wfc1"].shape[1]
    bf16, f32 = jnp.bfloat16, jnp.float32

    # Token tile: multiple of 8 (sublanes) dividing N, else fall back to full N.
    tn = min(token_tile, N)
    if N % tn != 0 or (tn != N and tn % 8 != 0):
        tn = N  # TODO(synk): support padded N with an attention key mask.

    if vmem_limit_bytes is None:
        vmem_limit_bytes = _default_vmem_limit_bytes()

    # ---- QKV projection hoisted out of the kernel (plain XLA, bf16 out) ------
    qkv = jnp.dot(x.astype(bf16), prepared["wqkv"],
                  preferred_element_type=f32)                          # (B, N, 3C)
    qkv = qkv.reshape(B, N, 3, H, hd).transpose(2, 0, 3, 1, 4)         # (3,B,H,N,hd)
    q = (qkv[0] * (hd ** -0.5)).astype(bf16)                           # scale folded
    k = qkv[1].astype(bf16)
    v = qkv[2].astype(bf16)

    kernel = partial(respost_block_kernel, num_heads=H, ln_eps=ln_eps,
                     exact_gelu=exact_gelu)

    flops = 2 * B * N * (2 * N * C + C * C + 2 * C * hidden)
    transcendentals = B * N * (H * N + hidden)
    bytes_accessed = (2 * B * N * C * 4          # x in + out (f32)
                      + 3 * B * N * C * 2        # q, k, v (bf16)
                      + (C * C + 2 * C * hidden) * 2 + 16 * C * 4)
    cost = pl.CostEstimate(flops=flops, transcendentals=transcendentals,
                           bytes_accessed=bytes_accessed)

    def build(single_buffer):
        # Grid-invariant weights are DMA'd once; double-buffering them only
        # wastes VMEM (the review's top item), so request 1 buffer.
        wkw = dict(pipeline_mode=pl.Buffered(1)) if single_buffer else {}

        def const_spec(shape):
            return pl.BlockSpec(shape, lambda b, t: tuple(0 for _ in shape), **wkw)

        grid_spec = pltpu.PrefetchScalarGridSpec(
            num_scalar_prefetch=0,
            grid=(B, N // tn),                       # (batch, token tiles)
            in_specs=[
                pl.BlockSpec((1, tn, C), lambda b, t: (b, t, 0)),         # x tile
                pl.BlockSpec((1, H, tn, hd), lambda b, t: (b, 0, t, 0)),  # q tile
                pl.BlockSpec((1, H, N, hd), lambda b, t: (b, 0, 0, 0)),   # k (full)
                pl.BlockSpec((1, H, N, hd), lambda b, t: (b, 0, 0, 0)),   # v (full)
                const_spec((H, hd, C)),      # wproj (head-major, bf16)
                const_spec((1, C)),          # bproj
                const_spec((1, C)),          # ln1 gamma
                const_spec((1, C)),          # ln1 beta
                const_spec((C, hidden)),     # wfc1 (bf16)
                const_spec((1, hidden)),     # bfc1
                const_spec((hidden, C)),     # wfc2 (bf16)
                const_spec((1, C)),          # bfc2
                const_spec((1, C)),          # ln2 gamma
                const_spec((1, C)),          # ln2 beta
            ],
            out_specs=pl.BlockSpec((1, tn, C), lambda b, t: (b, t, 0)),
        )
        return pl.pallas_call(
            kernel,
            out_shape=jax.ShapeDtypeStruct((B, N, C), x.dtype),
            grid_spec=grid_spec,
            compiler_params=pltpu.CompilerParams(
                # No cross-iteration carry anymore: both axes can shard across
                # TensorCores (megacore / v7x 2-TC friendly).
                dimension_semantics=("parallel", "parallel"),
                vmem_limit_bytes=int(vmem_limit_bytes),
            ),
            cost_estimate=cost,
        )

    args = (x, q, k, v,
            prepared["wproj_r"], prepared["bproj"],
            prepared["g1"], prepared["b1"],
            prepared["wfc1"], prepared["bfc1"],
            prepared["wfc2"], prepared["bfc2"],
            prepared["g2"], prepared["b2"])

    if single_buffer_weights:
        try:
            return build(True)(*args)
        except Exception:
            # Fallback for Pallas versions without BlockSpec(pipeline_mode=...):
            # default double-buffering (costs VMEM, still correct).
            pass
    return build(False)(*args)


def _reference(x, p, num_heads):
    """Pure-JAX f32 reference for sanity checking."""
    B, N, C = x.shape
    hd = C // num_heads
    scale = hd ** (-0.5)

    def ln(z, g, b, eps=1e-5):
        m = jnp.mean(z, -1, keepdims=True)
        v = jnp.mean((z - m) ** 2, -1, keepdims=True)
        return (z - m) / jnp.sqrt(v + eps) * g + b

    qkv = x @ p["wqkv"]
    qkv = qkv.reshape(B, N, 3, num_heads, hd).transpose(2, 0, 3, 1, 4)
    q, k, v = qkv[0], qkv[1], qkv[2]
    attn = jnp.einsum("bhnd,bhmd->bhnm", q, k) * scale
    attn = jax.nn.softmax(attn, axis=-1)
    o = jnp.einsum("bhnm,bhmd->bhnd", attn, v)
    o = o.transpose(0, 2, 1, 3).reshape(B, N, C)
    o = o @ p["wproj"] + p["bproj"]
    y = x + ln(o, p["g1"], p["b1"])
    h = jax.nn.gelu(y @ p["wfc1"] + p["bfc1"], approximate=False)
    h = h @ p["wfc2"] + p["bfc2"]
    return y + ln(h, p["g2"], p["b2"])


if __name__ == "__main__":
    B, N, C = 2, 16, 32
    num_heads = 4
    hidden = int(C * 4.0)

    key = jax.random.PRNGKey(0)
    ks = jax.random.split(key, 8)

    params = {
        "wqkv": 0.05 * jax.random.normal(ks[0], (C, 3 * C), jnp.float32),
        "wproj": 0.05 * jax.random.normal(ks[1], (C, C), jnp.float32),
        "bproj": 0.01 * jax.random.normal(ks[2], (1, C), jnp.float32),
        "g1": jnp.ones((1, C), jnp.float32),
        "b1": jnp.zeros((1, C), jnp.float32),
        "wfc1": 0.05 * jax.random.normal(ks[3], (C, hidden), jnp.float32),
        "bfc1": 0.01 * jax.random.normal(ks[4], (1, hidden), jnp.float32),
        "wfc2": 0.05 * jax.random.normal(ks[5], (hidden, C), jnp.float32),
        "bfc2": 0.01 * jax.random.normal(ks[6], (1, C), jnp.float32),
        "g2": jnp.ones((1, C), jnp.float32),
        "b2": jnp.zeros((1, C), jnp.float32),
    }

    x = jax.random.normal(ks[7], (B, N, C), jnp.float32)

    # bf16 weight casts / head-major reshape done once, outside the call.
    prepared = prepare_params(params, num_heads)

    # token_tile=8 -> 2 token tiles per batch element (exercises the grid).
    out = respost_block(x, prepared, num_heads=num_heads, token_tile=8)
    out = jax.block_until_ready(out)

    ref = _reference(x, params, num_heads)
    assert out.shape == (B, N, C)
    # bf16 matmul operands + approx reciprocal -> slightly looser tolerance.
    err = float(jnp.max(jnp.abs(out - ref)))
    assert jnp.allclose(out, ref, rtol=3e-2, atol=3e-2), \
        f"mismatch vs reference (max abs err {err})"

    print("KERNEL_OK")
</pallas_src>

<mosaic_0001>
module attributes {stable_mosaic.version = 11 : i64} {
  func.func @respost_block_kernel(%arg0: i32, %arg1: i32, %arg2: memref<1x8x32xf32, #tpu.memory_space<vmem>>, %arg3: memref<1x4x8x8xbf16, #tpu.memory_space<vmem>>, %arg4: memref<1x4x16x8xbf16, #tpu.memory_space<vmem>>, %arg5: memref<1x4x16x8xbf16, #tpu.memory_space<vmem>>, %arg6: memref<4x8x32xbf16, #tpu.memory_space<vmem>>, %arg7: memref<1x32xf32, #tpu.memory_space<vmem>>, %arg8: memref<1x32xf32, #tpu.memory_space<vmem>>, %arg9: memref<1x32xf32, #tpu.memory_space<vmem>>, %arg10: memref<32x128xbf16, #tpu.memory_space<vmem>>, %arg11: memref<1x128xf32, #tpu.memory_space<vmem>>, %arg12: memref<128x32xbf16, #tpu.memory_space<vmem>>, %arg13: memref<1x32xf32, #tpu.memory_space<vmem>>, %arg14: memref<1x32xf32, #tpu.memory_space<vmem>>, %arg15: memref<1x32xf32, #tpu.memory_space<vmem>>, %arg16: memref<1x8x32xf32, #tpu.memory_space<vmem>>) attributes {dimension_semantics = [#tpu.dimension_semantics<parallel>, #tpu.dimension_semantics<parallel>], iteration_bounds = array<i64: 2, 2>, scalar_prefetch = 0 : i64, scratch_operands = 0 : i64, tpu.core_type = #tpu.core_type<tc>, window_params = [{transform_indices = @transform_0, window_bounds = array<i64: 1, 8, 32>}, {transform_indices = @transform_1, window_bounds = array<i64: 1, 4, 8, 8>}, {transform_indices = @transform_2, window_bounds = array<i64: 1, 4, 16, 8>}, {transform_indices = @transform_3, window_bounds = array<i64: 1, 4, 16, 8>}, {pipeline_mode = #tpu.pipeline_mode<synchronous>, transform_indices = @transform_4, window_bounds = array<i64: 4, 8, 32>}, {pipeline_mode = #tpu.pipeline_mode<synchronous>, transform_indices = @transform_5, window_bounds = array<i64: 1, 32>}, {pipeline_mode = #tpu.pipeline_mode<synchronous>, transform_indices = @transform_6, window_bounds = array<i64: 1, 32>}, {pipeline_mode = #tpu.pipeline_mode<synchronous>, transform_indices = @transform_7, window_bounds = array<i64: 1, 32>}, {pipeline_mode = #tpu.pipeline_mode<synchronous>, transform_indices = @transform_8, window_bounds = array<i64: 32, 128>}, {pipeline_mode = #tpu.pipeline_mode<synchronous>, transform_indices = @transform_9, window_bounds = array<i64: 1, 128>}, {pipeline_mode = #tpu.pipeline_mode<synchronous>, transform_indices = @transform_10, window_bounds = array<i64: 128, 32>}, {pipeline_mode = #tpu.pipeline_mode<synchronous>, transform_indices = @transform_11, window_bounds = array<i64: 1, 32>}, {pipeline_mode = #tpu.pipeline_mode<synchronous>, transform_indices = @transform_12, window_bounds = array<i64: 1, 32>}, {pipeline_mode = #tpu.pipeline_mode<synchronous>, transform_indices = @transform_13, window_bounds = array<i64: 1, 32>}, {transform_indices = @transform_14, window_bounds = array<i64: 1, 8, 32>}]} {
    %c0 = arith.constant 0 : index
    %c0_0 = arith.constant 0 : index
    %c0_1 = arith.constant 0 : index
    %0 = vector.load %arg2[%c0, %c0_0, %c0_1] : memref<1x8x32xf32, #tpu.memory_space<vmem>>, vector<1x8x32xf32>
    %1 = vector.shape_cast %0 : vector<1x8x32xf32> to vector<8x32xf32>
    %c0_2 = arith.constant 0 : index
    %c0_3 = arith.constant 0 : index
    %c0_4 = arith.constant 0 : index
    %c0_5 = arith.constant 0 : index
    %2 = vector.load %arg3[%c0_2, %c0_3, %c0_4, %c0_5] : memref<1x4x8x8xbf16, #tpu.memory_space<vmem>>, vector<1x4x8x8xbf16>
    %3 = vector.shape_cast %2 : vector<1x4x8x8xbf16> to vector<4x8x8xbf16>
    %c0_6 = arith.constant 0 : index
    %c0_7 = arith.constant 0 : index
    %c0_8 = arith.constant 0 : index
    %c0_9 = arith.constant 0 : index
    %4 = vector.load %arg4[%c0_6, %c0_7, %c0_8, %c0_9] : memref<1x4x16x8xbf16, #tpu.memory_space<vmem>>, vector<1x4x16x8xbf16>
    %5 = vector.shape_cast %4 : vector<1x4x16x8xbf16> to vector<4x16x8xbf16>
    %c0_10 = arith.constant 0 : index
    %c0_11 = arith.constant 0 : index
    %c0_12 = arith.constant 0 : index
    %c0_13 = arith.constant 0 : index
    %6 = vector.load %arg5[%c0_10, %c0_11, %c0_12, %c0_13] : memref<1x4x16x8xbf16, #tpu.memory_space<vmem>>, vector<1x4x16x8xbf16>
    %7 = vector.shape_cast %6 : vector<1x4x16x8xbf16> to vector<4x16x8xbf16>
    "tpu.trace_start"() <{level = 10 : i32, message = "htd,hnd->htn"}> : () -> ()
    %cst = arith.constant dense<0.000000e+00> : vector<4x8x16xf32>
    %8 = tpu.matmul %3, %5, %cst {dimension_numbers = #tpu.dot_dimension_numbers<[2], [2], [1], [1], [0, 0, 0, 1, 1, 1], [0], [0]>} : vector<4x8x8xbf16>, vector<4x16x8xbf16>, vector<4x8x16xf32> -> vector<4x8x16xf32>
    "tpu.trace_stop"() : () -> ()
    %cst_14 = arith.constant dense<0xFF800000> : vector<4x8xf32>
    %9 = vector.multi_reduction <maximumf>, %8, %cst_14 [2] : vector<4x8x16xf32> to vector<4x8xf32>
    %10 = vector.shape_cast %9 : vector<4x8xf32> to vector<4x8x1xf32>
    %11 = vector.broadcast %10 : vector<4x8x1xf32> to vector<4x8x16xf32>
    %12 = arith.subf %8, %11 : vector<4x8x16xf32>
    %13 = math.exp %12 : vector<4x8x16xf32>
    %cst_15 = arith.constant dense<0.000000e+00> : vector<4x8xf32>
    %14 = vector.multi_reduction <add>, %13, %cst_15 [2] : vector<4x8x16xf32> to vector<4x8xf32>
    %15 = vector.shape_cast %14 : vector<4x8xf32> to vector<4x8x1xf32>
    %16 = tpu.reciprocal %15 {approx = true} : vector<4x8x1xf32> -> vector<4x8x1xf32>
    %17 = vector.broadcast %16 : vector<4x8x1xf32> to vector<4x8x16xf32>
    %18 = arith.mulf %13, %17 : vector<4x8x16xf32>
    %19 = arith.truncf %18 : vector<4x8x16xf32> to vector<4x8x16xbf16>
    "tpu.trace_start"() <{level = 10 : i32, message = "htn,hnd->htd"}> : () -> ()
    %cst_16 = arith.constant dense<0.000000e+00> : vector<4x8x8xf32>
    %20 = tpu.matmul %19, %7, %cst_16 {dimension_numbers = #tpu.dot_dimension_numbers<[2], [1], [1], [2], [0, 0, 0, 1, 1, 2], [0], [0]>} : vector<4x8x16xbf16>, vector<4x16x8xbf16>, vector<4x8x8xf32> -> vector<4x8x8xf32>
    "tpu.trace_stop"() : () -> ()
    %21 = arith.truncf %20 : vector<4x8x8xf32> to vector<4x8x8xbf16>
    %c0_17 = arith.constant 0 : index
    %c0_18 = arith.constant 0 : index
    %22 = vector.load %arg7[%c0_17, %c0_18] : memref<1x32xf32, #tpu.memory_space<vmem>>, vector<1x32xf32>
    %23 = vector.extract_strided_slice %21 {offsets = [0, 0, 0], sizes = [1, 8, 8], strides = [1, 1, 1]} : vector<4x8x8xbf16> to vector<1x8x8xbf16>
    %24 = vector.shape_cast %23 : vector<1x8x8xbf16> to vector<8x8xbf16>
    %c0_19 = arith.constant 0 : index
    %c0_20 = arith.constant 0 : index
    %c0_21 = arith.constant 0 : index
    %25 = vector.load %arg6[%c0_19, %c0_20, %c0_21] : memref<4x8x32xbf16, #tpu.memory_space<vmem>>, vector<1x8x32xbf16>
    %26 = vector.shape_cast %25 : vector<1x8x32xbf16> to vector<8x32xbf16>
    %cst_22 = arith.constant dense<0.000000e+00> : vector<8x32xf32>
    %27 = tpu.matmul %24, %26, %cst_22 {dimension_numbers = #tpu.dot_dimension_numbers<[1], [0], [0], [1], [0, 0, 1, 1], [], []>} : vector<8x8xbf16>, vector<8x32xbf16>, vector<8x32xf32> -> vector<8x32xf32>
    %28 = vector.broadcast %22 : vector<1x32xf32> to vector<8x32xf32>
    %29 = arith.addf %28, %27 : vector<8x32xf32>
    %30 = vector.extract_strided_slice %21 {offsets = [1, 0, 0], sizes = [1, 8, 8], strides = [1, 1, 1]} : vector<4x8x8xbf16> to vector<1x8x8xbf16>
    %31 = vector.shape_cast %30 : vector<1x8x8xbf16> to vector<8x8xbf16>
    %c1 = arith.constant 1 : index
    %c0_23 = arith.constant 0 : index
    %c0_24 = arith.constant 0 : index
    %32 = vector.load %arg6[%c1, %c0_23, %c0_24] : memref<4x8x32xbf16, #tpu.memory_space<vmem>>, vector<1x8x32xbf16>
    %33 = vector.shape_cast %32 : vector<1x8x32xbf16> to vector<8x32xbf16>
    %cst_25 = arith.constant dense<0.000000e+00> : vector<8x32xf32>
    %34 = tpu.matmul %31, %33, %cst_25 {dimension_numbers = #tpu.dot_dimension_numbers<[1], [0], [0], [1], [0, 0, 1, 1], [], []>} : vector<8x8xbf16>, vector<8x32xbf16>, vector<8x32xf32> -> vector<8x32xf32>
    %35 = arith.addf %29, %34 : vector<8x32xf32>
    %36 = vector.extract_strided_slice %21 {offsets = [2, 0, 0], sizes = [1, 8, 8], strides = [1, 1, 1]} : vector<4x8x8xbf16> to vector<1x8x8xbf16>
    %37 = vector.shape_cast %36 : vector<1x8x8xbf16> to vector<8x8xbf16>
    %c2 = arith.constant 2 : index
    %c0_26 = arith.constant 0 : index
    %c0_27 = arith.constant 0 : index
    %38 = vector.load %arg6[%c2, %c0_26, %c0_27] : memref<4x8x32xbf16, #tpu.memory_space<vmem>>, vector<1x8x32xbf16>
    %39 = vector.shape_cast %38 : vector<1x8x32xbf16> to vector<8x32xbf16>
    %cst_28 = arith.constant dense<0.000000e+00> : vector<8x32xf32>
    %40 = tpu.matmul %37, %39, %cst_28 {dimension_numbers = #tpu.dot_dimension_numbers<[1], [0], [0], [1], [0, 0, 1, 1], [], []>} : vector<8x8xbf16>, vector<8x32xbf16>, vector<8x32xf32> -> vector<8x32xf32>
    %41 = arith.addf %35, %40 : vector<8x32xf32>
    %42 = vector.extract_strided_slice %21 {offsets = [3, 0, 0], sizes = [1, 8, 8], strides = [1, 1, 1]} : vector<4x8x8xbf16> to vector<1x8x8xbf16>
    %43 = vector.shape_cast %42 : vector<1x8x8xbf16> to vector<8x8xbf16>
    %c3 = arith.constant 3 : index
    %c0_29 = arith.constant 0 : index
    %c0_30 = arith.constant 0 : index
    %44 = vector.load %arg6[%c3, %c0_29, %c0_30] : memref<4x8x32xbf16, #tpu.memory_space<vmem>>, vector<1x8x32xbf16>
    %45 = vector.shape_cast %44 : vector<1x8x32xbf16> to vector<8x32xbf16>
    %cst_31 = arith.constant dense<0.000000e+00> : vector<8x32xf32>
    %46 = tpu.matmul %43, %45, %cst_31 {dimension_numbers = #tpu.dot_dimension_numbers<[1], [0], [0], [1], [0, 0, 1, 1], [], []>} : vector<8x8xbf16>, vector<8x32xbf16>, vector<8x32xf32> -> vector<8x32xf32>
    %47 = arith.addf %41, %46 : vector<8x32xf32>
    %c0_32 = arith.constant 0 : index
    %c0_33 = arith.constant 0 : index
    %48 = vector.load %arg8[%c0_32, %c0_33] : memref<1x32xf32, #tpu.memory_space<vmem>>, vector<1x32xf32>
    %c0_34 = arith.constant 0 : index
    %c0_35 = arith.constant 0 : index
    %49 = vector.load %arg9[%c0_34, %c0_35] : memref<1x32xf32, #tpu.memory_space<vmem>>, vector<1x32xf32>
    %cst_36 = arith.constant dense<0.000000e+00> : vector<8xf32>
    %50 = vector.multi_reduction <add>, %47, %cst_36 [1] : vector<8x32xf32> to vector<8xf32>
    %51 = vector.shape_cast %50 : vector<8xf32> to vector<8x1xf32>
    %cst_37 = arith.constant 3.200000e+01 : f32
    %52 = vector.broadcast %cst_37 : f32 to vector<8x1xf32>
    %53 = arith.divf %51, %52 : vector<8x1xf32>
    %54 = vector.broadcast %53 : vector<8x1xf32> to vector<8x32xf32>
    %55 = arith.subf %47, %54 : vector<8x32xf32>
    %56 = arith.mulf %55, %55 : vector<8x32xf32>
    %cst_38 = arith.constant dense<0.000000e+00> : vector<8xf32>
    %57 = vector.multi_reduction <add>, %56, %cst_38 [1] : vector<8x32xf32> to vector<8xf32>
    %58 = vector.shape_cast %57 : vector<8xf32> to vector<8x1xf32>
    %cst_39 = arith.constant 3.200000e+01 : f32
    %59 = vector.broadcast %cst_39 : f32 to vector<8x1xf32>
    %60 = arith.divf %58, %59 : vector<8x1xf32>
    %cst_40 = arith.constant 9.99999974E-6 : f32
    %61 = vector.broadcast %cst_40 : f32 to vector<8x1xf32>
    %62 = arith.addf %60, %61 : vector<8x1xf32>
    %63 = math.rsqrt %62 : vector<8x1xf32>
    %64 = vector.broadcast %63 : vector<8x1xf32> to vector<8x32xf32>
    %65 = arith.mulf %55, %64 : vector<8x32xf32>
    %66 = vector.broadcast %48 : vector<1x32xf32> to vector<8x32xf32>
    %67 = arith.mulf %65, %66 : vector<8x32xf32>
    %68 = vector.broadcast %49 : vector<1x32xf32> to vector<8x32xf32>
    %69 = arith.addf %67, %68 : vector<8x32xf32>
    %70 = arith.addf %1, %69 : vector<8x32xf32>
    %71 = arith.truncf %70 : vector<8x32xf32> to vector<8x32xbf16>
    %c0_41 = arith.constant 0 : index
    %c0_42 = arith.constant 0 : index
    %72 = vector.load %arg10[%c0_41, %c0_42] : memref<32x128xbf16, #tpu.memory_space<vmem>>, vector<32x128xbf16>
    %cst_43 = arith.constant dense<0.000000e+00> : vector<8x128xf32>
    %73 = tpu.matmul %71, %72, %cst_43 {dimension_numbers = #tpu.dot_dimension_numbers<[1], [0], [0], [1], [0, 0, 1, 1], [], []>} : vector<8x32xbf16>, vector<32x128xbf16>, vector<8x128xf32> -> vector<8x128xf32>
    %c0_44 = arith.constant 0 : index
    %c0_45 = arith.constant 0 : index
    %74 = vector.load %arg11[%c0_44, %c0_45] : memref<1x128xf32, #tpu.memory_space<vmem>>, vector<1x128xf32>
    %75 = vector.broadcast %74 : vector<1x128xf32> to vector<8x128xf32>
    %76 = arith.addf %73, %75 : vector<8x128xf32>
    %cst_46 = arith.constant 5.000000e-01 : f32
    %77 = vector.broadcast %cst_46 : f32 to vector<8x128xf32>
    %78 = arith.mulf %77, %76 : vector<8x128xf32>
    %cst_47 = arith.constant 0.707106769 : f32
    %79 = vector.broadcast %cst_47 : f32 to vector<8x128xf32>
    %80 = arith.mulf %76, %79 : vector<8x128xf32>
    %81 = math.erf %80 : vector<8x128xf32>
    %cst_48 = arith.constant 1.000000e+00 : f32
    %82 = vector.broadcast %cst_48 : f32 to vector<8x128xf32>
    %83 = arith.addf %82, %81 : vector<8x128xf32>
    %84 = arith.mulf %78, %83 : vector<8x128xf32>
    %85 = arith.truncf %84 : vector<8x128xf32> to vector<8x128xbf16>
    %c0_49 = arith.constant 0 : index
    %c0_50 = arith.constant 0 : index
    %86 = vector.load %arg12[%c0_49, %c0_50] : memref<128x32xbf16, #tpu.memory_space<vmem>>, vector<128x32xbf16>
    %cst_51 = arith.constant dense<0.000000e+00> : vector<8x32xf32>
    %87 = tpu.matmul %85, %86, %cst_51 {dimension_numbers = #tpu.dot_dimension_numbers<[1], [0], [0], [1], [0, 0, 1, 1], [], []>} : vector<8x128xbf16>, vector<128x32xbf16>, vector<8x32xf32> -> vector<8x32xf32>
    %c0_52 = arith.constant 0 : index
    %c0_53 = arith.constant 0 : index
    %88 = vector.load %arg13[%c0_52, %c0_53] : memref<1x32xf32, #tpu.memory_space<vmem>>, vector<1x32xf32>
    %89 = vector.broadcast %88 : vector<1x32xf32> to vector<8x32xf32>
    %90 = arith.addf %87, %89 : vector<8x32xf32>
    %c0_54 = arith.constant 0 : index
    %c0_55 = arith.constant 0 : index
    %91 = vector.load %arg14[%c0_54, %c0_55] : memref<1x32xf32, #tpu.memory_space<vmem>>, vector<1x32xf32>
    %c0_56 = arith.constant 0 : index
    %c0_57 = arith.constant 0 : index
    %92 = vector.load %arg15[%c0_56, %c0_57] : memref<1x32xf32, #tpu.memory_space<vmem>>, vector<1x32xf32>
    %cst_58 = arith.constant dense<0.000000e+00> : vector<8xf32>
    %93 = vector.multi_reduction <add>, %90, %cst_58 [1] : vector<8x32xf32> to vector<8xf32>
    %94 = vector.shape_cast %93 : vector<8xf32> to vector<8x1xf32>
    %cst_59 = arith.constant 3.200000e+01 : f32
    %95 = vector.broadcast %cst_59 : f32 to vector<8x1xf32>
    %96 = arith.divf %94, %95 : vector<8x1xf32>
    %97 = vector.broadcast %96 : vector<8x1xf32> to vector<8x32xf32>
    %98 = arith.subf %90, %97 : vector<8x32xf32>
    %99 = arith.mulf %98, %98 : vector<8x32xf32>
    %cst_60 = arith.constant dense<0.000000e+00> : vector<8xf32>
    %100 = vector.multi_reduction <add>, %99, %cst_60 [1] : vector<8x32xf32> to vector<8xf32>
    %101 = vector.shape_cast %100 : vector<8xf32> to vector<8x1xf32>
    %cst_61 = arith.constant 3.200000e+01 : f32
    %102 = vector.broadcast %cst_61 : f32 to vector<8x1xf32>
    %103 = arith.divf %101, %102 : vector<8x1xf32>
    %cst_62 = arith.constant 9.99999974E-6 : f32
    %104 = vector.broadcast %cst_62 : f32 to vector<8x1xf32>
    %105 = arith.addf %103, %104 : vector<8x1xf32>
    %106 = math.rsqrt %105 : vector<8x1xf32>
    %107 = vector.broadcast %106 : vector<8x1xf32> to vector<8x32xf32>
    %108 = arith.mulf %98, %107 : vector<8x32xf32>
    %109 = vector.broadcast %91 : vector<1x32xf32> to vector<8x32xf32>
    %110 = arith.mulf %108, %109 : vector<8x32xf32>
    %111 = vector.broadcast %92 : vector<1x32xf32> to vector<8x32xf32>
    %112 = arith.addf %110, %111 : vector<8x32xf32>
    %113 = arith.addf %70, %112 : vector<8x32xf32>
    %c0_63 = arith.constant 0 : index
    %c0_64 = arith.constant 0 : index
    %c0_65 = arith.constant 0 : index
    %114 = vector.load %arg16[%c0_63, %c0_64, %c0_65] : memref<1x8x32xf32, #tpu.memory_space<vmem>>, vector<1x8x32xf32>
    %115 = vector.shape_cast %114 : vector<1x8x32xf32> to vector<8x32xf32>
    %116 = vector.shape_cast %113 : vector<8x32xf32> to vector<1x8x32xf32>
    tpu.vector_store %arg16[%c0_63, %c0_64, %c0_65], %116 {strides = array<i32>} : memref<1x8x32xf32, #tpu.memory_space<vmem>>, vector<1x8x32xf32>,
    return
  }
  func.func @transform_0(%arg0: i32, %arg1: i32) -> (i32, i32, i32) {
    %c0_i32 = arith.constant 0 : i32
    %c0_i32_0 = arith.constant 0 : i32
    return %arg0, %arg1, %c0_i32 : i32, i32, i32
  }
  func.func @transform_1(%arg0: i32, %arg1: i32) -> (i32, i32, i32, i32) {
    %c0_i32 = arith.constant 0 : i32
    %c0_i32_0 = arith.constant 0 : i32
    %c0_i32_1 = arith.constant 0 : i32
    return %arg0, %c0_i32, %arg1, %c0_i32_0 : i32, i32, i32, i32
  }
  func.func @transform_2(%arg0: i32, %arg1: i32) -> (i32, i32, i32, i32) {
    %c0_i32 = arith.constant 0 : i32
    %c0_i32_0 = arith.constant 0 : i32
    %c0_i32_1 = arith.constant 0 : i32
    %c0_i32_2 = arith.constant 0 : i32
    return %arg0, %c0_i32, %c0_i32_0, %c0_i32_1 : i32, i32, i32, i32
  }
  func.func @transform_3(%arg0: i32, %arg1: i32) -> (i32, i32, i32, i32) {
    %c0_i32 = arith.constant 0 : i32
    %c0_i32_0 = arith.constant 0 : i32
    %c0_i32_1 = arith.constant 0 : i32
    %c0_i32_2 = arith.constant 0 : i32
    return %arg0, %c0_i32, %c0_i32_0, %c0_i32_1 : i32, i32, i32, i32
  }
  func.func @transform_4(%arg0: i32, %arg1: i32) -> (i32, i32, i32) {
    %c0_i32 = arith.constant 0 : i32
    %c0_i32_0 = arith.constant 0 : i32
    %c0_i32_1 = arith.constant 0 : i32
    %c0_i32_2 = arith.constant 0 : i32
    return %c0_i32, %c0_i32_0, %c0_i32_1 : i32, i32, i32
  }
  func.func @transform_5(%arg0: i32, %arg1: i32) -> (i32, i32) {
    %c0_i32 = arith.constant 0 : i32
    %c0_i32_0 = arith.constant 0 : i32
    %c0_i32_1 = arith.constant 0 : i32
    return %c0_i32, %c0_i32_0 : i32, i32
  }
  func.func @transform_6(%arg0: i32, %arg1: i32) -> (i32, i32) {
    %c0_i32 = arith.constant 0 : i32
    %c0_i32_0 = arith.constant 0 : i32
    %c0_i32_1 = arith.constant 0 : i32
    return %c0_i32, %c0_i32_0 : i32, i32
  }
  func.func @transform_7(%arg0: i32, %arg1: i32) -> (i32, i32) {
    %c0_i32 = arith.constant 0 : i32
    %c0_i32_0 = arith.constant 0 : i32
    %c0_i32_1 = arith.constant 0 : i32
    return %c0_i32, %c0_i32_0 : i32, i32
  }
  func.func @transform_8(%arg0: i32, %arg1: i32) -> (i32, i32) {
    %c0_i32 = arith.constant 0 : i32
    %c0_i32_0 = arith.constant 0 : i32
    %c0_i32_1 = arith.constant 0 : i32
    return %c0_i32, %c0_i32_0 : i32, i32
  }
  func.func @transform_9(%arg0: i32, %arg1: i32) -> (i32, i32) {
    %c0_i32 = arith.constant 0 : i32
    %c0_i32_0 = arith.constant 0 : i32
    %c0_i32_1 = arith.constant 0 : i32
    return %c0_i32, %c0_i32_0 : i32, i32
  }
  func.func @transform_10(%arg0: i32, %arg1: i32) -> (i32, i32) {
    %c0_i32 = arith.constant 0 : i32
    %c0_i32_0 = arith.constant 0 : i32
    %c0_i32_1 = arith.constant 0 : i32
    return %c0_i32, %c0_i32_0 : i32, i32
  }
  func.func @transform_11(%arg0: i32, %arg1: i32) -> (i32, i32) {
    %c0_i32 = arith.constant 0 : i32
    %c0_i32_0 = arith.constant 0 : i32
    %c0_i32_1 = arith.constant 0 : i32
    return %c0_i32, %c0_i32_0 : i32, i32
  }
  func.func @transform_12(%arg0: i32, %arg1: i32) -> (i32, i32) {
    %c0_i32 = arith.constant 0 : i32
    %c0_i32_0 = arith.constant 0 : i32
    %c0_i32_1 = arith.constant 0 : i32
    return %c0_i32, %c0_i32_0 : i32, i32
  }
  func.func @transform_13(%arg0: i32, %arg1: i32) -> (i32, i32) {
    %c0_i32 = arith.constant 0 : i32
    %c0_i32_0 = arith.constant 0 : i32
    %c0_i32_1 = arith.constant 0 : i32
    return %c0_i32, %c0_i32_0 : i32, i32
  }
  func.func @transform_14(%arg0: i32, %arg1: i32) -> (i32, i32, i32) {
    %c0_i32 = arith.constant 0 : i32
    %c0_i32_0 = arith.constant 0 : i32
    return %arg0, %arg1, %c0_i32 : i32, i32, i32
  }
}

module attributes {stable_mosaic.version = 11 : i64} {
  func.func @respost_block_kernel(%arg0: i32, %arg1: i32, %arg2: memref<1x8x32xf32, #tpu.memory_space<vmem>>, %arg3: memref<1x4x8x8xbf16, #tpu.memory_space<vmem>>, %arg4: memref<1x4x16x8xbf16, #tpu.memory_space<vmem>>, %arg5: memref<1x4x16x8xbf16, #tpu.memory_space<vmem>>, %arg6: memref<4x8x32xbf16, #tpu.memory_space<vmem>>, %arg7: memref<1x32xf32, #tpu.memory_space<vmem>>, %arg8: memref<1x32xf32, #tpu.memory_space<vmem>>, %arg9: memref<1x32xf32, #tpu.memory_space<vmem>>, %arg10: memref<32x128xbf16, #tpu.memory_space<vmem>>, %arg11: memref<1x128xf32, #tpu.memory_space<vmem>>, %arg12: memref<128x32xbf16, #tpu.memory_space<vmem>>, %arg13: memref<1x32xf32, #tpu.memory_space<vmem>>, %arg14: memref<1x32xf32, #tpu.memory_space<vmem>>, %arg15: memref<1x32xf32, #tpu.memory_space<vmem>>, %arg16: memref<1x8x32xf32, #tpu.memory_space<vmem>>) attributes {dimension_semantics = [#tpu.dimension_semantics<parallel>, #tpu.dimension_semantics<parallel>], iteration_bounds = array<i64: 2, 2>, scalar_prefetch = 0 : i64, scratch_operands = 0 : i64, tpu.core_type = #tpu.core_type<tc>, window_params = [{transform_indices = @transform_0, window_bounds = array<i64: 1, 8, 32>}, {transform_indices = @transform_1, window_bounds = array<i64: 1, 4, 8, 8>}, {transform_indices = @transform_2, window_bounds = array<i64: 1, 4, 16, 8>}, {transform_indices = @transform_3, window_bounds = array<i64: 1, 4, 16, 8>}, {pipeline_mode = #tpu.pipeline_mode<synchronous>, transform_indices = @transform_4, window_bounds = array<i64: 4, 8, 32>}, {pipeline_mode = #tpu.pipeline_mode<synchronous>, transform_indices = @transform_5, window_bounds = array<i64: 1, 32>}, {pipeline_mode = #tpu.pipeline_mode<synchronous>, transform_indices = @transform_6, window_bounds = array<i64: 1, 32>}, {pipeline_mode = #tpu.pipeline_mode<synchronous>, transform_indices = @transform_7, window_bounds = array<i64: 1, 32>}, {pipeline_mode = #tpu.pipeline_mode<synchronous>, transform_indices = @transform_8, window_bounds = array<i64: 32, 128>}, {pipeline_mode = #tpu.pipeline_mode<synchronous>, transform_indices = @transform_9, window_bounds = array<i64: 1, 128>}, {pipeline_mode = #tpu.pipeline_mode<synchronous>, transform_indices = @transform_10, window_bounds = array<i64: 128, 32>}, {pipeline_mode = #tpu.pipeline_mode<synchronous>, transform_indices = @transform_11, window_bounds = array<i64: 1, 32>}, {pipeline_mode = #tpu.pipeline_mode<synchronous>, transform_indices = @transform_12, window_bounds = array<i64: 1, 32>}, {pipeline_mode = #tpu.pipeline_mode<synchronous>, transform_indices = @transform_13, window_bounds = array<i64: 1, 32>}, {transform_indices = @transform_14, window_bounds = array<i64: 1, 8, 32>}]} {
    %c0 = arith.constant 0 : index
    %c0_0 = arith.constant 0 : index
    %c0_1 = arith.constant 0 : index
    %0 = vector.load %arg2[%c0, %c0_0, %c0_1] : memref<1x8x32xf32, #tpu.memory_space<vmem>>, vector<1x8x32xf32>
    %1 = vector.shape_cast %0 : vector<1x8x32xf32> to vector<8x32xf32>
    %c0_2 = arith.constant 0 : index
    %c0_3 = arith.constant 0 : index
    %c0_4 = arith.constant 0 : index
    %c0_5 = arith.constant 0 : index
    %2 = vector.load %arg3[%c0_2, %c0_3, %c0_4, %c0_5] : memref<1x4x8x8xbf16, #tpu.memory_space<vmem>>, vector<1x4x8x8xbf16>
    %3 = vector.shape_cast %2 : vector<1x4x8x8xbf16> to vector<4x8x8xbf16>
    %c0_6 = arith.constant 0 : index
    %c0_7 = arith.constant 0 : index
    %c0_8 = arith.constant 0 : index
    %c0_9 = arith.constant 0 : index
    %4 = vector.load %arg4[%c0_6, %c0_7, %c0_8, %c0_9] : memref<1x4x16x8xbf16, #tpu.memory_space<vmem>>, vector<1x4x16x8xbf16>
    %5 = vector.shape_cast %4 : vector<1x4x16x8xbf16> to vector<4x16x8xbf16>
    %c0_10 = arith.constant 0 : index
    %c0_11 = arith.constant 0 : index
    %c0_12 = arith.constant 0 : index
    %c0_13 = arith.constant 0 : index
    %6 = vector.load %arg5[%c0_10, %c0_11, %c0_12, %c0_13] : memref<1x4x16x8xbf16, #tpu.memory_space<vmem>>, vector<1x4x16x8xbf16>
    %7 = vector.shape_cast %6 : vector<1x4x16x8xbf16> to vector<4x16x8xbf16>
    "tpu.trace_start"() <{level = 10 : i32, message = "htd,hnd->htn"}> : () -> ()
    %cst = arith.constant dense<0.000000e+00> : vector<4x8x16xf32>
    %8 = tpu.matmul %3, %5, %cst {dimension_numbers = #tpu.dot_dimension_numbers<[2], [2], [1], [1], [0, 0, 0, 1, 1, 1], [0], [0]>} : vector<4x8x8xbf16>, vector<4x16x8xbf16>, vector<4x8x16xf32> -> vector<4x8x16xf32>
    "tpu.trace_stop"() : () -> ()
    %cst_14 = arith.constant dense<0xFF800000> : vector<4x8xf32>
    %9 = vector.multi_reduction <maximumf>, %8, %cst_14 [2] : vector<4x8x16xf32> to vector<4x8xf32>
    %10 = vector.shape_cast %9 : vector<4x8xf32> to vector<4x8x1xf32>
    %11 = vector.broadcast %10 : vector<4x8x1xf32> to vector<4x8x16xf32>
    %12 = arith.subf %8, %11 : vector<4x8x16xf32>
    %13 = math.exp %12 : vector<4x8x16xf32>
    %cst_15 = arith.constant dense<0.000000e+00> : vector<4x8xf32>
    %14 = vector.multi_reduction <add>, %13, %cst_15 [2] : vector<4x8x16xf32> to vector<4x8xf32>
    %15 = vector.shape_cast %14 : vector<4x8xf32> to vector<4x8x1xf32>
    %16 = tpu.reciprocal %15 {approx = true} : vector<4x8x1xf32> -> vector<4x8x1xf32>
    %17 = vector.broadcast %16 : vector<4x8x1xf32> to vector<4x8x16xf32>
    %18 = arith.mulf %13, %17 : vector<4x8x16xf32>
    %19 = arith.truncf %18 : vector<4x8x16xf32> to vector<4x8x16xbf16>
    "tpu.trace_start"() <{level = 10 : i32, message = "htn,hnd->htd"}> : () -> ()
    %cst_16 = arith.constant dense<0.000000e+00> : vector<4x8x8xf32>
    %20 = tpu.matmul %19, %7, %cst_16 {dimension_numbers = #tpu.dot_dimension_numbers<[2], [1], [1], [2], [0, 0, 0, 1, 1, 2], [0], [0]>} : vector<4x8x16xbf16>, vector<4x16x8xbf16>, vector<4x8x8xf32> -> vector<4x8x8xf32>
    "tpu.trace_stop"() : () -> ()
    %21 = arith.truncf %20 : vector<4x8x8xf32> to vector<4x8x8xbf16>
    %c0_17 = arith.constant 0 : index
    %c0_18 = arith.constant 0 : index
    %22 = vector.load %arg7[%c0_17, %c0_18] : memref<1x32xf32, #tpu.memory_space<vmem>>, vector<1x32xf32>
    %23 = vector.extract_strided_slice %21 {offsets = [0, 0, 0], sizes = [1, 8, 8], strides = [1, 1, 1]} : vector<4x8x8xbf16> to vector<1x8x8xbf16>
    %24 = vector.shape_cast %23 : vector<1x8x8xbf16> to vector<8x8xbf16>
    %c0_19 = arith.constant 0 : index
    %c0_20 = arith.constant 0 : index
    %c0_21 = arith.constant 0 : index
    %25 = vector.load %arg6[%c0_19, %c0_20, %c0_21] : memref<4x8x32xbf16, #tpu.memory_space<vmem>>, vector<1x8x32xbf16>
    %26 = vector.shape_cast %25 : vector<1x8x32xbf16> to vector<8x32xbf16>
    %cst_22 = arith.constant dense<0.000000e+00> : vector<8x32xf32>
    %27 = tpu.matmul %24, %26, %cst_22 {dimension_numbers = #tpu.dot_dimension_numbers<[1], [0], [0], [1], [0, 0, 1, 1], [], []>} : vector<8x8xbf16>, vector<8x32xbf16>, vector<8x32xf32> -> vector<8x32xf32>
    %28 = vector.broadcast %22 : vector<1x32xf32> to vector<8x32xf32>
    %29 = arith.addf %28, %27 : vector<8x32xf32>
    %30 = vector.extract_strided_slice %21 {offsets = [1, 0, 0], sizes = [1, 8, 8], strides = [1, 1, 1]} : vector<4x8x8xbf16> to vector<1x8x8xbf16>
    %31 = vector.shape_cast %30 : vector<1x8x8xbf16> to vector<8x8xbf16>
    %c1 = arith.constant 1 : index
    %c0_23 = arith.constant 0 : index
    %c0_24 = arith.constant 0 : index
    %32 = vector.load %arg6[%c1, %c0_23, %c0_24] : memref<4x8x32xbf16, #tpu.memory_space<vmem>>, vector<1x8x32xbf16>
    %33 = vector.shape_cast %32 : vector<1x8x32xbf16> to vector<8x32xbf16>
    %cst_25 = arith.constant dense<0.000000e+00> : vector<8x32xf32>
    %34 = tpu.matmul %31, %33, %cst_25 {dimension_numbers = #tpu.dot_dimension_numbers<[1], [0], [0], [1], [0, 0, 1, 1], [], []>} : vector<8x8xbf16>, vector<8x32xbf16>, vector<8x32xf32> -> vector<8x32xf32>
    %35 = arith.addf %29, %34 : vector<8x32xf32>
    %36 = vector.extract_strided_slice %21 {offsets = [2, 0, 0], sizes = [1, 8, 8], strides = [1, 1, 1]} : vector<4x8x8xbf16> to vector<1x8x8xbf16>
    %37 = vector.shape_cast %36 : vector<1x8x8xbf16> to vector<8x8xbf16>
    %c2 = arith.constant 2 : index
    %c0_26 = arith.constant 0 : index
    %c0_27 = arith.constant 0 : index
    %38 = vector.load %arg6[%c2, %c0_26, %c0_27] : memref<4x8x32xbf16, #tpu.memory_space<vmem>>, vector<1x8x32xbf16>
    %39 = vector.shape_cast %38 : vector<1x8x32xbf16> to vector<8x32xbf16>
    %cst_28 = arith.constant dense<0.000000e+00> : vector<8x32xf32>
    %40 = tpu.matmul %37, %39, %cst_28 {dimension_numbers = #tpu.dot_dimension_numbers<[1], [0], [0], [1], [0, 0, 1, 1], [], []>} : vector<8x8xbf16>, vector<8x32xbf16>, vector<8x32xf32> -> vector<8x32xf32>
    %41 = arith.addf %35, %40 : vector<8x32xf32>
    %42 = vector.extract_strided_slice %21 {offsets = [3, 0, 0], sizes = [1, 8, 8], strides = [1, 1, 1]} : vector<4x8x8xbf16> to vector<1x8x8xbf16>
    %43 = vector.shape_cast %42 : vector<1x8x8xbf16> to vector<8x8xbf16>
    %c3 = arith.constant 3 : index
    %c0_29 = arith.constant 0 : index
    %c0_30 = arith.constant 0 : index
    %44 = vector.load %arg6[%c3, %c0_29, %c0_30] : memref<4x8x32xbf16, #tpu.memory_space<vmem>>, vector<1x8x32xbf16>
    %45 = vector.shape_cast %44 : vector<1x8x32xbf16> to vector<8x32xbf16>
    %cst_31 = arith.constant dense<0.000000e+00> : vector<8x32xf32>
    %46 = tpu.matmul %43, %45, %cst_31 {dimension_numbers = #tpu.dot_dimension_numbers<[1], [0], [0], [1], [0, 0, 1, 1], [], []>} : vector<8x8xbf16>, vector<8x32xbf16>, vector<8x32xf32> -> vector<8x32xf32>
    %47 = arith.addf %41, %46 : vector<8x32xf32>
    %c0_32 = arith.constant 0 : index
    %c0_33 = arith.constant 0 : index
    %48 = vector.load %arg8[%c0_32, %c0_33] : memref<1x32xf32, #tpu.memory_space<vmem>>, vector<1x32xf32>
    %c0_34 = arith.constant 0 : index
    %c0_35 = arith.constant 0 : index
    %49 = vector.load %arg9[%c0_34, %c0_35] : memref<1x32xf32, #tpu.memory_space<vmem>>, vector<1x32xf32>
    %cst_36 = arith.constant dense<0.000000e+00> : vector<8xf32>
    %50 = vector.multi_reduction <add>, %47, %cst_36 [1] : vector<8x32xf32> to vector<8xf32>
    %51 = vector.shape_cast %50 : vector<8xf32> to vector<8x1xf32>
    %cst_37 = arith.constant 3.200000e+01 : f32
    %52 = vector.broadcast %cst_37 : f32 to vector<8x1xf32>
    %53 = arith.divf %51, %52 : vector<8x1xf32>
    %54 = vector.broadcast %53 : vector<8x1xf32> to vector<8x32xf32>
    %55 = arith.subf %47, %54 : vector<8x32xf32>
    %56 = arith.mulf %55, %55 : vector<8x32xf32>
    %cst_38 = arith.constant dense<0.000000e+00> : vector<8xf32>
    %57 = vector.multi_reduction <add>, %56, %cst_38 [1] : vector<8x32xf32> to vector<8xf32>
    %58 = vector.shape_cast %57 : vector<8xf32> to vector<8x1xf32>
    %cst_39 = arith.constant 3.200000e+01 : f32
    %59 = vector.broadcast %cst_39 : f32 to vector<8x1xf32>
    %60 = arith.divf %58, %59 : vector<8x1xf32>
    %cst_40 = arith.constant 9.99999974E-6 : f32
    %61 = vector.broadcast %cst_40 : f32 to vector<8x1xf32>
    %62 = arith.addf %60, %61 : vector<8x1xf32>
    %63 = math.rsqrt %62 : vector<8x1xf32>
    %64 = vector.broadcast %63 : vector<8x1xf32> to vector<8x32xf32>
    %65 = arith.mulf %55, %64 : vector<8x32xf32>
    %66 = vector.broadcast %48 : vector<1x32xf32> to vector<8x32xf32>
    %67 = arith.mulf %65, %66 : vector<8x32xf32>
    %68 = vector.broadcast %49 : vector<1x32xf32> to vector<8x32xf32>
    %69 = arith.addf %67, %68 : vector<8x32xf32>
    %70 = arith.addf %1, %69 : vector<8x32xf32>
    %71 = arith.truncf %70 : vector<8x32xf32> to vector<8x32xbf16>
    %c0_41 = arith.constant 0 : index
    %c0_42 = arith.constant 0 : index
    %72 = vector.load %arg10[%c0_41, %c0_42] : memref<32x128xbf16, #tpu.memory_space<vmem>>, vector<32x128xbf16>
    %cst_43 = arith.constant dense<0.000000e+00> : vector<8x128xf32>
    %73 = tpu.matmul %71, %72, %cst_43 {dimension_numbers = #tpu.dot_dimension_numbers<[1], [0], [0], [1], [0, 0, 1, 1], [], []>} : vector<8x32xbf16>, vector<32x128xbf16>, vector<8x128xf32> -> vector<8x128xf32>
    %c0_44 = arith.constant 0 : index
    %c0_45 = arith.constant 0 : index
    %74 = vector.load %arg11[%c0_44, %c0_45] : memref<1x128xf32, #tpu.memory_space<vmem>>, vector<1x128xf32>
    %75 = vector.broadcast %74 : vector<1x128xf32> to vector<8x128xf32>
    %76 = arith.addf %73, %75 : vector<8x128xf32>
    %cst_46 = arith.constant 5.000000e-01 : f32
    %77 = vector.broadcast %cst_46 : f32 to vector<8x128xf32>
    %78 = arith.mulf %77, %76 : vector<8x128xf32>
    %cst_47 = arith.constant 0.707106769 : f32
    %79 = vector.broadcast %cst_47 : f32 to vector<8x128xf32>
    %80 = arith.mulf %76, %79 : vector<8x128xf32>
    %81 = math.erf %80 : vector<8x128xf32>
    %cst_48 = arith.constant 1.000000e+00 : f32
    %82 = vector.broadcast %cst_48 : f32 to vector<8x128xf32>
    %83 = arith.addf %82, %81 : vector<8x128xf32>
    %84 = arith.mulf %78, %83 : vector<8x128xf32>
    %85 = arith.truncf %84 : vector<8x128xf32> to vector<8x128xbf16>
    %c0_49 = arith.constant 0 : index
    %c0_50 = arith.constant 0 : index
    %86 = vector.load %arg12[%c0_49, %c0_50] : memref<128x32xbf16, #tpu.memory_space<vmem>>, vector<128x32xbf16>
    %cst_51 = arith.constant dense<0.000000e+00> : vector<8x32xf32>
    %87 = tpu.matmul %85, %86, %cst_51 {dimension_numbers = #tpu.dot_dimension_numbers<[1], [0], [0], [1], [0, 0, 1, 1], [], []>} : vector<8x128xbf16>, vector<128x32xbf16>, vector<8x32xf32> -> vector<8x32xf32>
    %c0_52 = arith.constant 0 : index
    %c0_53 = arith.constant 0 : index
    %88 = vector.load %arg13[%c0_52, %c0_53] : memref<1x32xf32, #tpu.memory_space<vmem>>, vector<1x32xf32>
    %89 = vector.broadcast %88 : vector<1x32xf32> to vector<8x32xf32>
    %90 = arith.addf %87, %89 : vector<8x32xf32>
    %c0_54 = arith.constant 0 : index
    %c0_55 = arith.constant 0 : index
    %91 = vector.load %arg14[%c0_54, %c0_55] : memref<1x32xf32, #tpu.memory_space<vmem>>, vector<1x32xf32>
    %c0_56 = arith.constant 0 : index
    %c0_57 = arith.constant 0 : index
    %92 = vector.load %arg15[%c0_56, %c0_57] : memref<1x32xf32, #tpu.memory_space<vmem>>, vector<1x32xf32>
    %cst_58 = arith.constant dense<0.000000e+00> : vector<8xf32>
    %93 = vector.multi_reduction <add>, %90, %cst_58 [1] : vector<8x32xf32> to vector<8xf32>
    %94 = vector.shape_cast %93 : vector<8xf32> to vector<8x1xf32>
    %cst_59 = arith.constant 3.200000e+01 : f32
    %95 = vector.broadcast %cst_59 : f32 to vector<8x1xf32>
    %96 = arith.divf %94, %95 : vector<8x1xf32>
    %97 = vector.broadcast %96 : vector<8x1xf32> to vector<8x32xf32>
    %98 = arith.subf %90, %97 : vector<8x32xf32>
    %99 = arith.mulf %98, %98 : vector<8x32xf32>
    %cst_60 = arith.constant dense<0.000000e+00> : vector<8xf32>
    %100 = vector.multi_reduction <add>, %99, %cst_60 [1] : vector<8x32xf32> to vector<8xf32>
    %101 = vector.shape_cast %100 : vector<8xf32> to vector<8x1xf32>
    %cst_61 = arith.constant 3.200000e+01 : f32
    %102 = vector.broadcast %cst_61 : f32 to vector<8x1xf32>
    %103 = arith.divf %101, %102 : vector<8x1xf32>
    %cst_62 = arith.constant 9.99999974E-6 : f32
    %104 = vector.broadcast %cst_62 : f32 to vector<8x1xf32>
    %105 = arith.addf %103, %104 : vector<8x1xf32>
    %106 = math.rsqrt %105 : vector<8x1xf32>
    %107 = vector.broadcast %106 : vector<8x1xf32> to vector<8x32xf32>
    %108 = arith.mulf %98, %107 : vector<8x32xf32>
    %109 = vector.broadcast %91 : vector<1x32xf32> to vector<8x32xf32>
    %110 = arith.mulf %108, %109 : vector<8x32xf32>
    %111 = vector.broadcast %92 : vector<1x32xf32> to vector<8x32xf32>
    %112 = arith.addf %110, %111 : vector<8x32xf32>
    %113 = arith.addf %70, %112 : vector<8x32xf32>
    %c0_63 = arith.constant 0 : index
    %c0_64 = arith.constant 0 : index
    %c0_65 = arith.constant 0 : index
    %114 = vector.load %arg16[%c0_63, %c0_64, %c0_65] : memref<1x8x32xf32, #tpu.memory_space<vmem>>, vector<1x8x32xf32>
    %115 = vector.shape_cast %114 : vector<1x8x32xf32> to vector<8x32xf32>
    %116 = vector.shape_cast %113 : vector<8x32xf32> to vector<1x8x32xf32>
    tpu.vector_store %arg16[%c0_63, %c0_64, %c0_65], %116 {strides = array<i32>} : memref<1x8x32xf32, #tpu.memory_space<vmem>>, vector<1x8x32xf32>,
    return
  }
  func.func @transform_0(%arg0: i32, %arg1: i32) -> (i32, i32, i32) {
    %c0_i32 = arith.constant 0 : i32
    %c0_i32_0 = arith.constant 0 : i32
    return %arg0, %arg1, %c0_i32 : i32, i32, i32
  }
  func.func @transform_1(%arg0: i32, %arg1: i32) -> (i32, i32, i32, i32) {
    %c0_i32 = arith.constant 0 : i32
    %c0_i32_0 = arith.constant 0 : i32
    %c0_i32_1 = arith.constant 0 : i32
    return %arg0, %c0_i32, %arg1, %c0_i32_0 : i32, i32, i32, i32
  }
  func.func @transform_2(%arg0: i32, %arg1: i32) -> (i32, i32, i32, i32) {
    %c0_i32 = arith.constant 0 : i32
    %c0_i32_0 = arith.constant 0 : i32
    %c0_i32_1 = arith.constant 0 : i32
    %c0_i32_2 = arith.constant 0 : i32
    return %arg0, %c0_i32, %c0_i32_0, %c0_i32_1 : i32, i32, i32, i32
  }
  func.func @transform_3(%arg0: i32, %arg1: i32) -> (i32, i32, i32, i32) {
    %c0_i32 = arith.constant 0 : i32
    %c0_i32_0 = arith.constant 0 : i32
    %c0_i32_1 = arith.constant 0 : i32
    %c0_i32_2 = arith.constant 0 : i32
    return %arg0, %c0_i32, %c0_i32_0, %c0_i32_1 : i32, i32, i32, i32
  }
  func.func @transform_4(%arg0: i32, %arg1: i32) -> (i32, i32, i32) {
    %c0_i32 = arith.constant 0 : i32
    %c0_i32_0 = arith.constant 0 : i32
    %c0_i32_1 = arith.constant 0 : i32
    %c0_i32_2 = arith.constant 0 : i32
    return %c0_i32, %c0_i32_0, %c0_i32_1 : i32, i32, i32
  }
  func.func @transform_5(%arg0: i32, %arg1: i32) -> (i32, i32) {
    %c0_i32 = arith.constant 0 : i32
    %c0_i32_0 = arith.constant 0 : i32
    %c0_i32_1 = arith.constant 0 : i32
    return %c0_i32, %c0_i32_0 : i32, i32
  }
  func.func @transform_6(%arg0: i32, %arg1: i32) -> (i32, i32) {
    %c0_i32 = arith.constant 0 : i32
    %c0_i32_0 = arith.constant 0 : i32
    %c0_i32_1 = arith.constant 0 : i32
    return %c0_i32, %c0_i32_0 : i32, i32
  }
  func.func @transform_7(%arg0: i32, %arg1: i32) -> (i32, i32) {
    %c0_i32 = arith.constant 0 : i32
    %c0_i32_0 = arith.constant 0 : i32
    %c0_i32_1 = arith.constant 0 : i32
    return %c0_i32, %c0_i32_0 : i32, i32
  }
  func.func @transform_8(%arg0: i32, %arg1: i32) -> (i32, i32) {
    %c0_i32 = arith.constant 0 : i32
    %c0_i32_0 = arith.constant 0 : i32
    %c0_i32_1 = arith.constant 0 : i32
    return %c0_i32, %c0_i32_0 : i32, i32
  }
  func.func @transform_9(%arg0: i32, %arg1: i32) -> (i32, i32) {
    %c0_i32 = arith.constant 0 : i32
    %c0_i32_0 = arith.constant 0 : i32
    %c0_i32_1 = arith.constant 0 : i32
    return %c0_i32, %c0_i32_0 : i32, i32
  }
  func.func @transform_10(%arg0: i32, %arg1: i32) -> (i32, i32) {
    %c0_i32 = arith.constant 0 : i32
    %c0_i32_0 = arith.constant 0 : i32
    %c0_i32_1 = arith.constant 0 : i32
    return %c0_i32, %c0_i32_0 : i32, i32
  }
  func.func @transform_11(%arg0: i32, %arg1: i32) -> (i32, i32) {
    %c0_i32 = arith.constant 0 : i32
    %c0_i32_0 = arith.constant 0 : i32
    %c0_i32_1 = arith.constant 0 : i32
    return %c0_i32, %c0_i32_0 : i32, i32
  }
  func.func @transform_12(%arg0: i32, %arg1: i32) -> (i32, i32) {
    %c0_i32 = arith.constant 0 : i32
    %c0_i32_0 = arith.constant 0 : i32
    %c0_i32_1 = arith.constant 0 : i32
    return %c0_i32, %c0_i32_0 : i32, i32
  }
  func.func @transform_13(%arg0: i32, %arg1: i32) -> (i32, i32) {
    %c0_i32 = arith.constant 0 : i32
    %c0_i32_0 = arith.constant 0 : i32
    %c0_i32_1 = arith.constant 0 : i32
    return %c0_i32, %c0_i32_0 : i32, i32
  }
  func.func @transform_14(%arg0: i32, %arg1: i32) -> (i32, i32, i32) {
    %c0_i32 = arith.constant 0 : i32
    %c0_i32_0 = arith.constant 0 : i32
    return %arg0, %arg1, %c0_i32 : i32, i32, i32
  }
}

</mosaic_0001>

<llo_original>
// kernel: tpu_custom_call.1
$region0: #{tpu_custom_call.1}
  #allocation0 [shape = 'u32[]', space=smem, size = 0x4, offset = 0x4, fixed_abs, tag = 'smem constant byte address 0x4 - core index']
  #allocation1 [shape = 'u32[72,128]{1,0:T(1,128)}', space=vmem, size = 0x9000, scoped, tag = 'internal scratch']
  %s0 = inlined_call_operand.vmem [shape: f32[2,16,32], index: 0, kind: input, shape index: {}]
  %s1 = inlined_call_operand.vmem [shape: bf16[2,4,16,8], index: 1, kind: input, shape index: {}]
  %s2 = inlined_call_operand.vmem [shape: bf16[2,4,16,8], index: 2, kind: input, shape index: {}]
  %s3 = inlined_call_operand.vmem [shape: bf16[2,4,16,8], index: 3, kind: input, shape index: {}]
  %s4 = inlined_call_operand.vmem [shape: bf16[4,8,32], index: 4, kind: input, shape index: {}]
  %s5 = inlined_call_operand.vmem [shape: f32[1,32], index: 5, kind: input, shape index: {}]
  %s6 = inlined_call_operand.vmem [shape: f32[1,32], index: 6, kind: input, shape index: {}]
  %s7 = inlined_call_operand.vmem [shape: f32[1,32], index: 7, kind: input, shape index: {}]
  %s8 = inlined_call_operand.vmem [shape: bf16[32,128], index: 8, kind: input, shape index: {}]
  %s9 = inlined_call_operand.vmem [shape: f32[1,128], index: 9, kind: input, shape index: {}]
  %s10 = inlined_call_operand.vmem [shape: bf16[128,32], index: 10, kind: input, shape index: {}]
  %s11 = inlined_call_operand.vmem [shape: f32[1,32], index: 11, kind: input, shape index: {}]
  %s12 = inlined_call_operand.vmem [shape: f32[1,32], index: 12, kind: input, shape index: {}]
  %s13 = inlined_call_operand.vmem [shape: f32[1,32], index: 13, kind: input, shape index: {}]
  %s14 = inlined_call_operand.hbm [shape: f32[2,16,32], index: 14, kind: output, shape index: {}]
  %s15 = sld [smem:[#allocation0]]
  $region130: #{tpu_custom_call.1} parent=0
    _
  %s17 = ssub.s32 1, %s15
  %s18 = scalar_select 0, %s17, %s15
  $region1: #{tpu_custom_call.1} parent=0
    #allocation2 [shape = 'u8[16384]{0}', space=vmem, size = 0x4000, scoped, tag = 'input window, operand 1']
    #allocation3 [shape = 'u8[8192]{0}', space=vmem, size = 0x2000, scoped, tag = 'output window, operand 0']
    #allocation4 [shape = 's32[2]{0}', space=sflag, size = 0x8, scoped, tag = 'scoped memory for tpu_custom_call.1']
    %19 = vsyncpa [#allocation4], 0
    %s20 = scalar_lea.sflag [#allocation4], 1
    %21 = vsyncpa %s20, 0
    loop: start=0, step=1, limit=6
    $region2: #{tpu_custom_call.1} parent=1 // loop_pre_header
      _
    $region3: #{tpu_custom_call.1} parent=1 // loop_header
      %s23 = sphi 0, %s27
      %p24 = scmp.ge.s32.totalorder %s23, 6
      %s30 = sphi 0, %s42
      %s31 = sphi 0, %s38
      %s32 = sphi 0, %s30
      %s33 = sphi 0, %s31
      %s34 = sphi 0, %s32
      %s35 = sphi 0, %s33
      %s47 = sphi 0, %s49
      %s50 = sphi 0, %s47
      %s51 = sphi 0, %s50
      %s67 = sphi 0, %s51
      %s75 = sphi 0, %s77
      %s78 = sphi 0, %s75
      %s79 = sphi 0, %s78
      %s95 = sphi 0, %s79
      %s101 = sphi 0, %s103
      %s104 = sphi 0, %s101
      %s105 = sphi 0, %s104
      %s121 = sphi 0, %s105
      %s127 = sphi 0, %s129
      %s130 = sphi 0, %s127
      %s131 = sphi 0, %s130
      %s147 = sphi 0, %s131
      %s151 = sphi 0, %s151
      %s153 = sphi 0, %s151
      %s154 = sphi 0, %s153
      %s168 = sphi 0, %s154
      %s172 = sphi 0, %s172
      %s174 = sphi 0, %s172
      %s175 = sphi 0, %s174
      %s189 = sphi 0, %s175
      %s193 = sphi 0, %s193
      %s195 = sphi 0, %s193
      %s196 = sphi 0, %s195
      %s210 = sphi 0, %s196
      %s214 = sphi 0, %s214
      %s216 = sphi 0, %s214
      %s217 = sphi 0, %s216
      %s231 = sphi 0, %s217
      %s235 = sphi 0, %s235
      %s237 = sphi 0, %s235
      %s238 = sphi 0, %s237
      %s252 = sphi 0, %s238
      %s256 = sphi 0, %s256
      %s258 = sphi 0, %s256
      %s259 = sphi 0, %s258
      %s273 = sphi 0, %s259
      %s277 = sphi 0, %s277
      %s279 = sphi 0, %s277
      %s280 = sphi 0, %s279
      %s294 = sphi 0, %s280
      %s298 = sphi 0, %s298
      %s300 = sphi 0, %s298
      %s301 = sphi 0, %s300
      %s315 = sphi 0, %s301
      %s319 = sphi 0, %s319
      %s321 = sphi 0, %s319
      %s322 = sphi 0, %s321
      %s336 = sphi 0, %s322
      %s340 = sphi 0, %s340
      %s342 = sphi 0, %s340
      %s343 = sphi 0, %s342
      %s357 = sphi 0, %s343
      %s365 = sphi 0, %s367
      %s368 = sphi 0, %s365
      %s369 = sphi 0, %s368
      %s385 = sphi 0, %s369
    $region4: #{tpu_custom_call.1} parent=1 // loop_header_branch
      %26 = sbr.rel (%p24) target = $region8
    $region5: #{tpu_custom_call.1} parent=1 // loop_body
      %s28 = ssub.s32 %s23, 1
      %s29 = ssub.s32 %s23, 2
      %s36 = sadd.s32 1, %s31
      %p37 = scmp.ge.s32.totalorder %s36, 2
      %s38 = scalar_select %p37, 0, %s36
      %s39 = sadd.s32 1, %s30
      %s40 = scalar_select %p37, %s39, %s30
      %p41 = scmp.ge.s32.totalorder %s40, 2
      %s42 = scalar_select %p41, 0, %s40
      %s43 = ssub.s32 %s30, %s42
      %s44 = ssub.s32 %s31, %s38
      %s45 = sor.u32 %s43, %s44
      %p46 = scmp.eq.s32.totalorder %s45, 0
      %s48 = sadd.s32 %s47, 1
      %s49 = scalar_select %p46, %s47, %s48
      %p52 = pneg %p46
      %p53 = scmp.eq.s32.totalorder %s23, 3
      %p54 = por %p52, %p53
      %p55 = scmp.ne.s32.totalorder %s47, %s50
      %p56 = scmp.eq.s32.totalorder %s23, 0
      %p57 = por %p55, %p56
      %p58 = scmp.ne.s32.totalorder %s47, %s50
      %p59 = scmp.eq.s32.totalorder %s28, 3
      %p60 = por %p58, %p59
      %p61 = scmp.ne.s32.totalorder %s50, %s51
      %p62 = scmp.eq.s32.totalorder %s28, 0
      %p63 = por %p61, %p62
      %p64 = scmp.ne.s32.totalorder %s50, %s51
      %p65 = scmp.eq.s32.totalorder %s29, 3
      %p66 = por %p64, %p65
      %p68 = scmp.ne.s32.totalorder %s51, %s67
      %p69 = scmp.eq.s32.totalorder %s29, 0
      %p70 = por %p68, %p69
      %s71 = ssub.s32 %s30, %s42
      %s72 = ssub.s32 %s31, %s38
      %s73 = sor.u32 %s71, %s72
      %p74 = scmp.eq.s32.totalorder %s73, 0
      %s76 = sadd.s32 %s75, 1
      %s77 = scalar_select %p74, %s75, %s76
      %p80 = pneg %p74
      %p81 = scmp.eq.s32.totalorder %s23, 3
      %p82 = por %p80, %p81
      %p83 = scmp.ne.s32.totalorder %s75, %s78
      %p84 = scmp.eq.s32.totalorder %s23, 0
      %p85 = por %p83, %p84
      %p86 = scmp.ne.s32.totalorder %s75, %s78
      %p87 = scmp.eq.s32.totalorder %s28, 3
      %p88 = por %p86, %p87
      %p89 = scmp.ne.s32.totalorder %s78, %s79
      %p90 = scmp.eq.s32.totalorder %s28, 0
      %p91 = por %p89, %p90
      %p92 = scmp.ne.s32.totalorder %s78, %s79
      %p93 = scmp.eq.s32.totalorder %s29, 3
      %p94 = por %p92, %p93
      %p96 = scmp.ne.s32.totalorder %s79, %s95
      %p97 = scmp.eq.s32.totalorder %s29, 0
      %p98 = por %p96, %p97
      %s99 = ssub.s32 %s30, %s42
      %p100 = scmp.eq.s32.totalorder %s99, 0
      %s102 = sadd.s32 %s101, 1
      %s103 = scalar_select %p100, %s101, %s102
      %p106 = pneg %p100
      %p107 = scmp.eq.s32.totalorder %s23, 3
      %p108 = por %p106, %p107
      %p109 = scmp.ne.s32.totalorder %s101, %s104
      %p110 = scmp.eq.s32.totalorder %s23, 0
      %p111 = por %p109, %p110
      %p112 = scmp.ne.s32.totalorder %s101, %s104
      %p113 = scmp.eq.s32.totalorder %s28, 3
      %p114 = por %p112, %p113
      %p115 = scmp.ne.s32.totalorder %s104, %s105
      %p116 = scmp.eq.s32.totalorder %s28, 0
      %p117 = por %p115, %p116
      %p118 = scmp.ne.s32.totalorder %s104, %s105
      %p119 = scmp.eq.s32.totalorder %s29, 3
      %p120 = por %p118, %p119
      %p122 = scmp.ne.s32.totalorder %s105, %s121
      %p123 = scmp.eq.s32.totalorder %s29, 0
      %p124 = por %p122, %p123
      %s125 = ssub.s32 %s30, %s42
      %p126 = scmp.eq.s32.totalorder %s125, 0
      %s128 = sadd.s32 %s127, 1
      %s129 = scalar_select %p126, %s127, %s128
      %p132 = pneg %p126
      %p133 = scmp.eq.s32.totalorder %s23, 3
      %p134 = por %p132, %p133
      %p135 = scmp.ne.s32.totalorder %s127, %s130
      %p136 = scmp.eq.s32.totalorder %s23, 0
      %p137 = por %p135, %p136
      %p138 = scmp.ne.s32.totalorder %s127, %s130
      %p139 = scmp.eq.s32.totalorder %s28, 3
      %p140 = por %p138, %p139
      %p141 = scmp.ne.s32.totalorder %s130, %s131
      %p142 = scmp.eq.s32.totalorder %s28, 0
      %p143 = por %p141, %p142
      %p144 = scmp.ne.s32.totalorder %s130, %s131
      %p145 = scmp.eq.s32.totalorder %s29, 3
      %p146 = por %p144, %p145
      %p148 = scmp.ne.s32.totalorder %s131, %s147
      %p149 = scmp.eq.s32.totalorder %s29, 0
      %p150 = por %p148, %p149
      %s152 = sadd.s32 %s151, 1
      %p155 = scmp.eq.s32.totalorder %s23, 3
      %p156 = scmp.ne.s32.totalorder %s151, %s153
      %p157 = scmp.eq.s32.totalorder %s23, 0
      %p158 = por %p156, %p157
      %p159 = scmp.ne.s32.totalorder %s151, %s153
      %p160 = scmp.eq.s32.totalorder %s28, 3
      %p161 = por %p159, %p160
      %p162 = scmp.ne.s32.totalorder %s153, %s154
      %p163 = scmp.eq.s32.totalorder %s28, 0
      %p164 = por %p162, %p163
      %p165 = scmp.ne.s32.totalorder %s153, %s154
      %p166 = scmp.eq.s32.totalorder %s29, 3
      %p167 = por %p165, %p166
      %p169 = scmp.ne.s32.totalorder %s154, %s168
      %p170 = scmp.eq.s32.totalorder %s29, 0
      %p171 = por %p169, %p170
      %s173 = sadd.s32 %s172, 1
      %p176 = scmp.eq.s32.totalorder %s23, 3
      %p177 = scmp.ne.s32.totalorder %s172, %s174
      %p178 = scmp.eq.s32.totalorder %s23, 0
      %p179 = por %p177, %p178
      %p180 = scmp.ne.s32.totalorder %s172, %s174
      %p181 = scmp.eq.s32.totalorder %s28, 3
      %p182 = por %p180, %p181
      %p183 = scmp.ne.s32.totalorder %s174, %s175
      %p184 = scmp.eq.s32.totalorder %s28, 0
      %p185 = por %p183, %p184
      %p186 = scmp.ne.s32.totalorder %s174, %s175
      %p187 = scmp.eq.s32.totalorder %s29, 3
      %p188 = por %p186, %p187
      %p190 = scmp.ne.s32.totalorder %s175, %s189
      %p191 = scmp.eq.s32.totalorder %s29, 0
      %p192 = por %p190, %p191
      %s194 = sadd.s32 %s193, 1
      %p197 = scmp.eq.s32.totalorder %s23, 3
      %p198 = scmp.ne.s32.totalorder %s193, %s195
      %p199 = scmp.eq.s32.totalorder %s23, 0
      %p200 = por %p198, %p199
      %p201 = scmp.ne.s32.totalorder %s193, %s195
      %p202 = scmp.eq.s32.totalorder %s28, 3
      %p203 = por %p201, %p202
      %p204 = scmp.ne.s32.totalorder %s195, %s196
      %p205 = scmp.eq.s32.totalorder %s28, 0
      %p206 = por %p204, %p205
      %p207 = scmp.ne.s32.totalorder %s195, %s196
      %p208 = scmp.eq.s32.totalorder %s29, 3
      %p209 = por %p207, %p208
      %p211 = scmp.ne.s32.totalorder %s196, %s210
      %p212 = scmp.eq.s32.totalorder %s29, 0
      %p213 = por %p211, %p212
      %s215 = sadd.s32 %s214, 1
      %p218 = scmp.eq.s32.totalorder %s23, 3
      %p219 = scmp.ne.s32.totalorder %s214, %s216
      %p220 = scmp.eq.s32.totalorder %s23, 0
      %p221 = por %p219, %p220
      %p222 = scmp.ne.s32.totalorder %s214, %s216
      %p223 = scmp.eq.s32.totalorder %s28, 3
      %p224 = por %p222, %p223
      %p225 = scmp.ne.s32.totalorder %s216, %s217
      %p226 = scmp.eq.s32.totalorder %s28, 0
      %p227 = por %p225, %p226
      %p228 = scmp.ne.s32.totalorder %s216, %s217
      %p229 = scmp.eq.s32.totalorder %s29, 3
      %p230 = por %p228, %p229
      %p232 = scmp.ne.s32.totalorder %s217, %s231
      %p233 = scmp.eq.s32.totalorder %s29, 0
      %p234 = por %p232, %p233
      %s236 = sadd.s32 %s235, 1
      %p239 = scmp.eq.s32.totalorder %s23, 3
      %p240 = scmp.ne.s32.totalorder %s235, %s237
      %p241 = scmp.eq.s32.totalorder %s23, 0
      %p242 = por %p240, %p241
      %p243 = scmp.ne.s32.totalorder %s235, %s237
      %p244 = scmp.eq.s32.totalorder %s28, 3
      %p245 = por %p243, %p244
      %p246 = scmp.ne.s32.totalorder %s237, %s238
      %p247 = scmp.eq.s32.totalorder %s28, 0
      %p248 = por %p246, %p247
      %p249 = scmp.ne.s32.totalorder %s237, %s238
      %p250 = scmp.eq.s32.totalorder %s29, 3
      %p251 = por %p249, %p250
      %p253 = scmp.ne.s32.totalorder %s238, %s252
      %p254 = scmp.eq.s32.totalorder %s29, 0
      %p255 = por %p253, %p254
      %s257 = sadd.s32 %s256, 1
      %p260 = scmp.eq.s32.totalorder %s23, 3
      %p261 = scmp.ne.s32.totalorder %s256, %s258
      %p262 = scmp.eq.s32.totalorder %s23, 0
      %p263 = por %p261, %p262
      %p264 = scmp.ne.s32.totalorder %s256, %s258
      %p265 = scmp.eq.s32.totalorder %s28, 3
      %p266 = por %p264, %p265
      %p267 = scmp.ne.s32.totalorder %s258, %s259
      %p268 = scmp.eq.s32.totalorder %s28, 0
      %p269 = por %p267, %p268
      %p270 = scmp.ne.s32.totalorder %s258, %s259
      %p271 = scmp.eq.s32.totalorder %s29, 3
      %p272 = por %p270, %p271
      %p274 = scmp.ne.s32.totalorder %s259, %s273
      %p275 = scmp.eq.s32.totalorder %s29, 0
      %p276 = por %p274, %p275
      %s278 = sadd.s32 %s277, 1
      %p281 = scmp.eq.s32.totalorder %s23, 3
      %p282 = scmp.ne.s32.totalorder %s277, %s279
      %p283 = scmp.eq.s32.totalorder %s23, 0
      %p284 = por %p282, %p283
      %p285 = scmp.ne.s32.totalorder %s277, %s279
      %p286 = scmp.eq.s32.totalorder %s28, 3
      %p287 = por %p285, %p286
      %p288 = scmp.ne.s32.totalorder %s279, %s280
      %p289 = scmp.eq.s32.totalorder %s28, 0
      %p290 = por %p288, %p289
      %p291 = scmp.ne.s32.totalorder %s279, %s280
      %p292 = scmp.eq.s32.totalorder %s29, 3
      %p293 = por %p291, %p292
      %p295 = scmp.ne.s32.totalorder %s280, %s294
      %p296 = scmp.eq.s32.totalorder %s29, 0
      %p297 = por %p295, %p296
      %s299 = sadd.s32 %s298, 1
      %p302 = scmp.eq.s32.totalorder %s23, 3
      %p303 = scmp.ne.s32.totalorder %s298, %s300
      %p304 = scmp.eq.s32.totalorder %s23, 0
      %p305 = por %p303, %p304
      %p306 = scmp.ne.s32.totalorder %s298, %s300
      %p307 = scmp.eq.s32.totalorder %s28, 3
      %p308 = por %p306, %p307
      %p309 = scmp.ne.s32.totalorder %s300, %s301
      %p310 = scmp.eq.s32.totalorder %s28, 0
      %p311 = por %p309, %p310
      %p312 = scmp.ne.s32.totalorder %s300, %s301
      %p313 = scmp.eq.s32.totalorder %s29, 3
      %p314 = por %p312, %p313
      %p316 = scmp.ne.s32.totalorder %s301, %s315
      %p317 = scmp.eq.s32.totalorder %s29, 0
      %p318 = por %p316, %p317
      %s320 = sadd.s32 %s319, 1
      %p323 = scmp.eq.s32.totalorder %s23, 3
      %p324 = scmp.ne.s32.totalorder %s319, %s321
      %p325 = scmp.eq.s32.totalorder %s23, 0
      %p326 = por %p324, %p325
      %p327 = scmp.ne.s32.totalorder %s319, %s321
      %p328 = scmp.eq.s32.totalorder %s28, 3
      %p329 = por %p327, %p328
      %p330 = scmp.ne.s32.totalorder %s321, %s322
      %p331 = scmp.eq.s32.totalorder %s28, 0
      %p332 = por %p330, %p331
      %p333 = scmp.ne.s32.totalorder %s321, %s322
      %p334 = scmp.eq.s32.totalorder %s29, 3
      %p335 = por %p333, %p334
      %p337 = scmp.ne.s32.totalorder %s322, %s336
      %p338 = scmp.eq.s32.totalorder %s29, 0
      %p339 = por %p337, %p338
      %s341 = sadd.s32 %s340, 1
      %p344 = scmp.eq.s32.totalorder %s23, 3
      %p345 = scmp.ne.s32.totalorder %s340, %s342
      %p346 = scmp.eq.s32.totalorder %s23, 0
      %p347 = por %p345, %p346
      %p348 = scmp.ne.s32.totalorder %s340, %s342
      %p349 = scmp.eq.s32.totalorder %s28, 3
      %p350 = por %p348, %p349
      %p351 = scmp.ne.s32.totalorder %s342, %s343
      %p352 = scmp.eq.s32.totalorder %s28, 0
      %p353 = por %p351, %p352
      %p354 = scmp.ne.s32.totalorder %s342, %s343
      %p355 = scmp.eq.s32.totalorder %s29, 3
      %p356 = por %p354, %p355
      %p358 = scmp.ne.s32.totalorder %s343, %s357
      %p359 = scmp.eq.s32.totalorder %s29, 0
      %p360 = por %p358, %p359
      %s361 = ssub.s32 %s30, %s42
      %s362 = ssub.s32 %s31, %s38
      %s363 = sor.u32 %s361, %s362
      %p364 = scmp.eq.s32.totalorder %s363, 0
      %s366 = sadd.s32 %s365, 1
      %s367 = scalar_select %p364, %s365, %s366
      %p370 = pneg %p364
      %p371 = scmp.eq.s32.totalorder %s23, 3
      %p372 = por %p370, %p371
      %p373 = scmp.ne.s32.totalorder %s365, %s368
      %p374 = scmp.eq.s32.totalorder %s23, 0
      %p375 = por %p373, %p374
      %p376 = scmp.ne.s32.totalorder %s365, %s368
      %p377 = scmp.eq.s32.totalorder %s28, 3
      %p378 = por %p376, %p377
      %p379 = scmp.ne.s32.totalorder %s368, %s369
      %p380 = scmp.eq.s32.totalorder %s28, 0
      %p381 = por %p379, %p380
      %p382 = scmp.ne.s32.totalorder %s368, %s369
      %p383 = scmp.eq.s32.totalorder %s29, 3
      %p384 = por %p382, %p383
      %p386 = scmp.ne.s32.totalorder %s369, %s385
      %p387 = scmp.eq.s32.totalorder %s29, 0
      %p388 = por %p386, %p387
      %p389 = scmp.le.s32.totalorder 1, %s23
      %p390 = scmp.lt.s32.totalorder %s23, 5
      %p391 = pnand %p389, %p390
      %p392 = pneg %p391
      // Predicated region
      $region9: #{tpu_custom_call.1} parent=5 // pred_check
        _
      $region10: #{tpu_custom_call.1} parent=5 // pred_check_branch
        %394 = sbr.rel (%p391) target = $region12
      $region11: #{tpu_custom_call.1} parent=5 // pred_region
        %s395 = ssub.s32 %s23, 1
        // Predicated region
        $region13: #{tpu_custom_call.1} parent=11 // pred_check
          %p396 = pneg %p164
        $region14: #{tpu_custom_call.1} parent=11 // pred_check_branch
          %398 = sbr.rel (%p396) target = $region16
        $region15: #{tpu_custom_call.1} parent=11 // pred_region
          _
        $region16: #{tpu_custom_call.1} parent=11 // pred_fallthru
          _
        // Predicated region
        $region17: #{tpu_custom_call.1} parent=11 // pred_check
          %p399 = pneg %p185
        $region18: #{tpu_custom_call.1} parent=11 // pred_check_branch
          %401 = sbr.rel (%p399) target = $region20
        $region19: #{tpu_custom_call.1} parent=11 // pred_region
          _
        $region20: #{tpu_custom_call.1} parent=11 // pred_fallthru
          _
        // Predicated region
        $region21: #{tpu_custom_call.1} parent=11 // pred_check
          %p402 = pneg %p206
        $region22: #{tpu_custom_call.1} parent=11 // pred_check_branch
          %404 = sbr.rel (%p402) target = $region24
        $region23: #{tpu_custom_call.1} parent=11 // pred_region
          _
        $region24: #{tpu_custom_call.1} parent=11 // pred_fallthru
          _
        // Predicated region
        $region25: #{tpu_custom_call.1} parent=11 // pred_check
          %p405 = pneg %p227
        $region26: #{tpu_custom_call.1} parent=11 // pred_check_branch
          %407 = sbr.rel (%p405) target = $region28
        $region27: #{tpu_custom_call.1} parent=11 // pred_region
          _
        $region28: #{tpu_custom_call.1} parent=11 // pred_fallthru
          _
        // Predicated region
        $region29: #{tpu_custom_call.1} parent=11 // pred_check
          %p408 = pneg %p248
        $region30: #{tpu_custom_call.1} parent=11 // pred_check_branch
          %410 = sbr.rel (%p408) target = $region32
        $region31: #{tpu_custom_call.1} parent=11 // pred_region
          _
        $region32: #{tpu_custom_call.1} parent=11 // pred_fallthru
          _
        // Predicated region
        $region33: #{tpu_custom_call.1} parent=11 // pred_check
          %p411 = pneg %p269
        $region34: #{tpu_custom_call.1} parent=11 // pred_check_branch
          %413 = sbr.rel (%p411) target = $region36
        $region35: #{tpu_custom_call.1} parent=11 // pred_region
          _
        $region36: #{tpu_custom_call.1} parent=11 // pred_fallthru
          _
        // Predicated region
        $region37: #{tpu_custom_call.1} parent=11 // pred_check
          %p414 = pneg %p290
        $region38: #{tpu_custom_call.1} parent=11 // pred_check_branch
          %416 = sbr.rel (%p414) target = $region40
        $region39: #{tpu_custom_call.1} parent=11 // pred_region
          _
        $region40: #{tpu_custom_call.1} parent=11 // pred_fallthru
          _
        // Predicated region
        $region41: #{tpu_custom_call.1} parent=11 // pred_check
          %p417 = pneg %p311
        $region42: #{tpu_custom_call.1} parent=11 // pred_check_branch
          %419 = sbr.rel (%p417) target = $region44
        $region43: #{tpu_custom_call.1} parent=11 // pred_region
          _
        $region44: #{tpu_custom_call.1} parent=11 // pred_fallthru
          _
        // Predicated region
        $region45: #{tpu_custom_call.1} parent=11 // pred_check
          %p420 = pneg %p332
        $region46: #{tpu_custom_call.1} parent=11 // pred_check_branch
          %422 = sbr.rel (%p420) target = $region48
        $region47: #{tpu_custom_call.1} parent=11 // pred_region
          _
        $region48: #{tpu_custom_call.1} parent=11 // pred_fallthru
          _
        // Predicated region
        $region49: #{tpu_custom_call.1} parent=11 // pred_check
          %p423 = pneg %p353
        $region50: #{tpu_custom_call.1} parent=11 // pred_check_branch
          %425 = sbr.rel (%p423) target = $region52
        $region51: #{tpu_custom_call.1} parent=11 // pred_region
          _
        $region52: #{tpu_custom_call.1} parent=11 // pred_fallthru
          _
      $region12: #{tpu_custom_call.1} parent=5 // pred_fallthru
        _
      %p426 = scmp.lt.s32.totalorder %s23, 4
      // Predicated region
      $region53: #{tpu_custom_call.1} parent=5 // pred_check
        %p427 = pneg %p426
      $region54: #{tpu_custom_call.1} parent=5 // pred_check_branch
        %429 = sbr.rel (%p427) target = $region56
      $region55: #{tpu_custom_call.1} parent=5 // pred_region
        // Predicated region
        $region57: #{tpu_custom_call.1} parent=55 // pred_check
          %p430 = pneg %p57
        $region58: #{tpu_custom_call.1} parent=55 // pred_check_branch
          %432 = sbr.rel (%p430) target = $region60
        $region59: #{tpu_custom_call.1} parent=55 // pred_region
          %p433 = scmp.lt.s32.totalorder %s30, 1
          %s434 = scalar_select %p433, %s30, 1
          %p435 = scmp.lt.s32.totalorder %s31, 1
          %s436 = scalar_select %p435, %s31, 1
          %s437 = smul.addr %s434, 2
          %s438 = sadd.s32 %s436, %s437
          %s439 = smul.addr %s438, 8
          %s440 = scalar_lea.vmem %s0, %s439
        $region60: #{tpu_custom_call.1} parent=55 // pred_fallthru
          _
        // Predicated region
        $region61: #{tpu_custom_call.1} parent=55 // pred_check
          %p441 = pneg %p85
        $region62: #{tpu_custom_call.1} parent=55 // pred_check_branch
          %443 = sbr.rel (%p441) target = $region64
        $region63: #{tpu_custom_call.1} parent=55 // pred_region
          %s444 = sand.u32 %s75, 1
          %s445 = sand.u32 %s75, 1
          %s446 = smul.addr %s445, 16
          %s447 = scalar_lea.vmem [#allocation2], %s446
          %s448 = smul.addr %s30, 8
          %s449 = sadd.s32 %s31, %s448
          %s450 = smul.addr %s449, 4
          %s451 = scalar_lea.vmem %s1, %s450
          // Predicated region
          $region65: #{tpu_custom_call.1} parent=63 // pred_check
            _
          $region66: #{tpu_custom_call.1} parent=63 // pred_check_branch
            %453 = sbr.rel (0) target = $region68
          $region67: #{tpu_custom_call.1} parent=63 // pred_region
            // Predicated region
            $region69: #{tpu_custom_call.1} parent=67 // pred_check
              _
            $region70: #{tpu_custom_call.1} parent=67 // pred_check_branch
              %455 = sbr.rel target = $region72
            $region71: #{tpu_custom_call.1} parent=67 // pred_region
              // Predicated region
              $region84: #{tpu_custom_call.1} parent=71 // pred_check
                _
              $region85: #{tpu_custom_call.1} parent=71 // pred_check_branch
                %477 = sbr.rel (0) target = $region87
              $region86: #{tpu_custom_call.1} parent=71 // pred_region
                loop: start=0, step=1, limit=1
                $region88: #{tpu_custom_call.1} parent=86 // loop_pre_header
                  _
                $region89: #{tpu_custom_call.1} parent=86 // loop_header
                  %s479 = sphi 0, %s483
                  %p480 = scmp.ge.s32.totalorder %s479, 1
                  %s484 = sphi %s451, %s451
                  %s485 = sphi %s447, %s447
                $region90: #{tpu_custom_call.1} parent=86 // loop_header_branch
                  %482 = sbr.rel (%p480) target = $region94
                $region91: #{tpu_custom_call.1} parent=86 // loop_body
                  _
                $region92: #{tpu_custom_call.1} parent=86 // loop_footer
                  %s483 = sadd.s32 1, %s479
                $region93: #{tpu_custom_call.1} parent=86 // loop_footer_branch
                  %478 = sbr.rel target = $region89
                $region94: #{tpu_custom_call.1} parent=86 // loop_exit
                  _
                %s487 = ssub.s32 16, 1
                loop: start=0, step=1, limit=1
                $region95: #{tpu_custom_call.1} parent=86 // loop_pre_header
                  _
                $region96: #{tpu_custom_call.1} parent=86 // loop_header
                  %s489 = sphi 0, %s493
                  %p490 = scmp.ge.s32.totalorder %s489, 1
                  %s494 = sphi %s451, %s451
                  %s495 = sphi %s447, %s447
                $region97: #{tpu_custom_call.1} parent=86 // loop_header_branch
                  %492 = sbr.rel (%p490) target = $region101
                $region98: #{tpu_custom_call.1} parent=86 // loop_body
                  %v496 = vld [vmem:[%s494] sm:%s487]
                  %497 = vst [vmem:[%s495] sm:%s487] %v496
                  %v498 = vld [vmem:[%s494 + $0x8] sm:%s487]
                  %499 = vst [vmem:[%s495 + $0x4] sm:%s487] %v498
                  %v500 = vld [vmem:[%s494 + $0x10] sm:%s487]
                  %501 = vst [vmem:[%s495 + $0x8] sm:%s487] %v500
                  %v502 = vld [vmem:[%s494 + $0x18] sm:%s487]
                  %503 = vst [vmem:[%s495 + $0xc] sm:%s487] %v502
                $region99: #{tpu_custom_call.1} parent=86 // loop_footer
                  %s493 = sadd.s32 1, %s489
                $region100: #{tpu_custom_call.1} parent=86 // loop_footer_branch
                  %488 = sbr.rel target = $region96
                $region101: #{tpu_custom_call.1} parent=86 // loop_exit
                  _
              $region87: #{tpu_custom_call.1} parent=71 // pred_fallthru
                _
            $region72: #{tpu_custom_call.1} parent=67 // pred_fallthru
              _
            // Predicated region
            $region73: #{tpu_custom_call.1} parent=67 // pred_check
              _
            $region74: #{tpu_custom_call.1} parent=67 // pred_check_branch
              %457 = sbr.rel (0) target = $region76
            $region75: #{tpu_custom_call.1} parent=67 // pred_region
              %s459 = ssub.s32 16, 1
              loop: start=0, step=1, limit=1
              $region77: #{tpu_custom_call.1} parent=75 // loop_pre_header
                _
              $region78: #{tpu_custom_call.1} parent=75 // loop_header
                %s461 = sphi 0, %s465
                %p462 = scmp.ge.s32.totalorder %s461, 1
                %s466 = sphi %s451, %s451
                %s467 = sphi %s447, %s447
              $region79: #{tpu_custom_call.1} parent=75 // loop_header_branch
                %464 = sbr.rel (%p462) target = $region83
              $region80: #{tpu_custom_call.1} parent=75 // loop_body
                %v468 = vld [vmem:[%s466] sm:%s459]
                %469 = vst [vmem:[%s467] sm:%s459] %v468
                %v470 = vld [vmem:[%s466 + $0x8] sm:%s459]
                %471 = vst [vmem:[%s467 + $0x4] sm:%s459] %v470
                %v472 = vld [vmem:[%s466 + $0x10] sm:%s459]
                %473 = vst [vmem:[%s467 + $0x8] sm:%s459] %v472
                %v474 = vld [vmem:[%s466 + $0x18] sm:%s459]
                %475 = vst [vmem:[%s467 + $0xc] sm:%s459] %v474
              $region81: #{tpu_custom_call.1} parent=75 // loop_footer
                %s465 = sadd.s32 1, %s461
              $region82: #{tpu_custom_call.1} parent=75 // loop_footer_branch
                %460 = sbr.rel target = $region78
              $region83: #{tpu_custom_call.1} parent=75 // loop_exit
                _
            $region76: #{tpu_custom_call.1} parent=67 // pred_fallthru
              _
          $region68: #{tpu_custom_call.1} parent=63 // pred_fallthru
            _
          %504 = vnop
        $region64: #{tpu_custom_call.1} parent=55 // pred_fallthru
          _
        // Predicated region
        $region102: #{tpu_custom_call.1} parent=55 // pred_check
          %p505 = pneg %p111
        $region103: #{tpu_custom_call.1} parent=55 // pred_check_branch
          %507 = sbr.rel (%p505) target = $region105
        $region104: #{tpu_custom_call.1} parent=55 // pred_region
          %p508 = scmp.lt.s32.totalorder %s30, 1
          %s509 = scalar_select %p508, %s30, 1
          %s510 = smul.addr %s509, 8
          %s511 = smul.addr %s510, 4
          %s512 = scalar_lea.vmem %s2, %s511
        $region105: #{tpu_custom_call.1} parent=55 // pred_fallthru
          _
        // Predicated region
        $region106: #{tpu_custom_call.1} parent=55 // pred_check
          %p513 = pneg %p137
        $region107: #{tpu_custom_call.1} parent=55 // pred_check_branch
          %515 = sbr.rel (%p513) target = $region109
        $region108: #{tpu_custom_call.1} parent=55 // pred_region
          %p516 = scmp.lt.s32.totalorder %s30, 1
          %s517 = scalar_select %p516, %s30, 1
          %s518 = smul.addr %s517, 8
          %s519 = smul.addr %s518, 4
          %s520 = scalar_lea.vmem %s3, %s519
        $region109: #{tpu_custom_call.1} parent=55 // pred_fallthru
          _
      $region56: #{tpu_custom_call.1} parent=5 // pred_fallthru
        _
      %p521 = scmp.le.s32.totalorder 1, %s23
      %p522 = scmp.lt.s32.totalorder %s23, 5
      %p523 = pnand %p521, %p522
      %p524 = pneg %p523
      // Predicated region
      $region110: #{tpu_custom_call.1} parent=5 // pred_check
        _
      $region111: #{tpu_custom_call.1} parent=5 // pred_check_branch
        %526 = sbr.rel (%p523) target = $region113
      $region112: #{tpu_custom_call.1} parent=5 // pred_region
        %s527 = ssub.s32 %s23, 1
        %s528 = sand.u32 %s78, 1
        %s529 = sand.u32 %s78, 1
        %s530 = smul.addr %s529, 16
        %s531 = scalar_lea.vmem [#allocation2], %s530
        // Predicated region
        $region114: #{tpu_custom_call.1} parent=112 // pred_check
          %p532 = pneg %p91
        $region115: #{tpu_custom_call.1} parent=112 // pred_check_branch
          %534 = sbr.rel (%p532) target = $region117
        $region116: #{tpu_custom_call.1} parent=112 // pred_region
          _
        $region117: #{tpu_custom_call.1} parent=112 // pred_fallthru
          _
        %p535 = scmp.lt.s32.totalorder %s32, 1
        %s536 = scalar_select %p535, %s32, 1
        %p537 = scmp.lt.s32.totalorder %s33, 1
        %s538 = scalar_select %p537, %s33, 1
        %s539 = smul.addr %s536, 2
        %s540 = sadd.s32 %s538, %s539
        %s541 = smul.addr %s540, 8
        %s542 = scalar_lea.vmem %s0, %s541
        %p543 = pneg %p63
        %p544 = pneg %p60
        %s545 = sand.u32 %s78, 1
        %s546 = sand.u32 %s78, 1
        %s547 = smul.addr %s546, 16
        %s548 = scalar_lea.vmem [#allocation2], %s547
        %p549 = pneg %p91
        %p550 = pneg %p88
        %p551 = scmp.lt.s32.totalorder %s32, 1
        %s552 = scalar_select %p551, %s32, 1
        %s553 = smul.addr %s552, 8
        %s554 = smul.addr %s553, 4
        %s555 = scalar_lea.vmem %s2, %s554
        %p556 = pneg %p117
        %p557 = pneg %p114
        %p558 = scmp.lt.s32.totalorder %s32, 1
        %s559 = scalar_select %p558, %s32, 1
        %s560 = smul.addr %s559, 8
        %s561 = smul.addr %s560, 4
        %s562 = scalar_lea.vmem %s3, %s561
        %p563 = pneg %p143
        %p564 = pneg %p140
        %p565 = pneg %p164
        %p566 = pneg %p161
        %p567 = pneg %p185
        %p568 = pneg %p182
        %p569 = pneg %p206
        %p570 = pneg %p203
        %p571 = pneg %p227
        %p572 = pneg %p224
        %p573 = pneg %p248
        %p574 = pneg %p245
        %p575 = pneg %p269
        %p576 = pneg %p266
        %p577 = pneg %p290
        %p578 = pneg %p287
        %p579 = pneg %p311
        %p580 = pneg %p308
        %p581 = pneg %p332
        %p582 = pneg %p329
        %p583 = pneg %p353
        %p584 = pneg %p350
        %p585 = pneg %p381
        %p586 = pneg %p378
        %s587 = sand.u32 %s368, 1
        %s588 = scalar_lea.sflag [#allocation4], %s587
        %s589 = sand.u32 %s368, 1
        %s590 = smul.addr %s589, 8
        %s591 = scalar_lea.vmem [#allocation3], %s590
        %p592 = scmp.lt.s32.totalorder %s32, 1
        %s593 = scalar_select %p592, %s32, 1
        %p594 = scmp.lt.s32.totalorder %s33, 1
        %s595 = scalar_select %p594, %s33, 1
        %s596 = smul.addr %s593, 2
        %s597 = sadd.s32 %s595, %s596
        %s598 = smul.addr %s597, 8
        %s599 = scalar_lea.vmem %s0, %s598
        %p600 = scmp.lt.s32.totalorder %s32, 1
        %s601 = scalar_select %p600, %s32, 1
        %s602 = smul.addr %s601, 8
        %s603 = smul.addr %s602, 4
        %s604 = scalar_lea.vmem %s2, %s603
        %p605 = scmp.lt.s32.totalorder %s32, 1
        %s606 = scalar_select %p605, %s32, 1
        %s607 = smul.addr %s606, 8
        %s608 = smul.addr %s607, 4
        %s609 = scalar_lea.vmem %s3, %s608
        %v611 = vld [vmem:[%s599] sm:$0xff]
        %v612 = vld [vmem:[%s531] sm:$0xf]
        %v613 = vld [vmem:[%s531 + $0x4] sm:$0xf]
        %v614 = vld [vmem:[%s531 + $0x8] sm:$0xf]
        %v615 = vld [vmem:[%s531 + $0xc] sm:$0xf]
        %v616 = vld [vmem:[%s604] sm:$0xf]
        %v617 = vld [vmem:[%s604 + $0x4] sm:$0xf]
        %v618 = vld [vmem:[%s604 + $0x8] sm:$0xf]
        %v619 = vld [vmem:[%s604 + $0xc] sm:$0xf]
        %v620 = vld [vmem:[%s604 + $0x10] sm:$0xf]
        %v621 = vld [vmem:[%s604 + $0x14] sm:$0xf]
        %v622 = vld [vmem:[%s604 + $0x18] sm:$0xf]
        %v623 = vld [vmem:[%s604 + $0x1c] sm:$0xf]
        %v624 = vld [vmem:[%s609] sm:$0xf]
        %v625 = vld [vmem:[%s609 + $0x4] sm:$0xf]
        %v626 = vld [vmem:[%s609 + $0x8] sm:$0xf]
        %v627 = vld [vmem:[%s609 + $0xc] sm:$0xf]
        %v628 = vld [vmem:[%s609 + $0x10] sm:$0xf]
        %v629 = vld [vmem:[%s609 + $0x14] sm:$0xf]
        %v630 = vld [vmem:[%s609 + $0x18] sm:$0xf]
        %v631 = vld [vmem:[%s609 + $0x1c] sm:$0xf]
        %v634 = vunpack.c.l.b16 %v616
        %v635 = vunpack.c.l.b16 %v617
        %v636 = vpack.c.b16 %v635, %v634
        %vm637 = vcmask 64512
        %v639 = vsel %vm637, %v612, 0
        %v642 = vsel %vm637, %v636, 0
        %644 = vmatpush.bf16.xpose.msra.mxu0 0
        %645 = vmatpush.bf16.xpose.msra.mxu0 0
        %646 = vmatpush.bf16.xpose.msra.mxu0 0
        %647 = vmatpush.bf16.xpose.msra.mxu0 0
        %648 = vmatpush.bf16.xpose.msra.mxu0 0
        %649 = vmatpush.bf16.xpose.msra.mxu0 0
        %650 = vmatpush.bf16.xpose.msra.mxu0 0
        %651 = vmatpush.bf16.xpose.msra.mxu0 %v642
        %652 = vmatmul.bf16.gmra.mxu0 %v639
        %v653 = vpop.f32.mrf.mxu0
        %v654 = vadd.f32 0.0, %v653
        %v655 = vpop.f32.mrf.mxu0
        %656 = vdwg.mxu0
        %v659 = vunpack.c.l.b16 %v618
        %v660 = vunpack.c.l.b16 %v619
        %v661 = vpack.c.b16 %v660, %v659
        %v663 = vsel %vm637, %v613, 0
        %v666 = vsel %vm637, %v661, 0
        %668 = vmatpush.bf16.xpose.msra.mxu0 0
        %669 = vmatpush.bf16.xpose.msra.mxu0 0
        %670 = vmatpush.bf16.xpose.msra.mxu0 0
        %671 = vmatpush.bf16.xpose.msra.mxu0 0
        %672 = vmatpush.bf16.xpose.msra.mxu0 0
        %673 = vmatpush.bf16.xpose.msra.mxu0 0
        %674 = vmatpush.bf16.xpose.msra.mxu0 0
        %675 = vmatpush.bf16.xpose.msra.mxu0 %v666
        %676 = vmatmul.bf16.gmra.mxu0 %v663
        %v677 = vpop.f32.mrf.mxu0
        %v678 = vadd.f32 0.0, %v677
        %v679 = vpop.f32.mrf.mxu0
        %680 = vdwg.mxu0
        %v683 = vunpack.c.l.b16 %v620
        %v684 = vunpack.c.l.b16 %v621
        %v685 = vpack.c.b16 %v684, %v683
        %v687 = vsel %vm637, %v614, 0
        %v690 = vsel %vm637, %v685, 0
        %692 = vmatpush.bf16.xpose.msra.mxu0 0
        %693 = vmatpush.bf16.xpose.msra.mxu0 0
        %694 = vmatpush.bf16.xpose.msra.mxu0 0
        %695 = vmatpush.bf16.xpose.msra.mxu0 0
        %696 = vmatpush.bf16.xpose.msra.mxu0 0
        %697 = vmatpush.bf16.xpose.msra.mxu0 0
        %698 = vmatpush.bf16.xpose.msra.mxu0 0
        %699 = vmatpush.bf16.xpose.msra.mxu0 %v690
        %700 = vmatmul.bf16.gmra.mxu0 %v687
        %v701 = vpop.f32.mrf.mxu0
        %v702 = vadd.f32 0.0, %v701
        %v703 = vpop.f32.mrf.mxu0
        %704 = vdwg.mxu0
        %v707 = vunpack.c.l.b16 %v622
        %v708 = vunpack.c.l.b16 %v623
        %v709 = vpack.c.b16 %v708, %v707
        %v711 = vsel %vm637, %v615, 0
        %v714 = vsel %vm637, %v709, 0
        %716 = vmatpush.bf16.xpose.msra.mxu0 0
        %717 = vmatpush.bf16.xpose.msra.mxu0 0
        %718 = vmatpush.bf16.xpose.msra.mxu0 0
        %719 = vmatpush.bf16.xpose.msra.mxu0 0
        %720 = vmatpush.bf16.xpose.msra.mxu0 0
        %721 = vmatpush.bf16.xpose.msra.mxu0 0
        %722 = vmatpush.bf16.xpose.msra.mxu0 0
        %723 = vmatpush.bf16.xpose.msra.mxu0 %v714
        %724 = vmatmul.bf16.gmra.mxu0 %v711
        %v725 = vpop.f32.mrf.mxu0
        %v726 = vadd.f32 0.0, %v725
        %v727 = vpop.f32.mrf.mxu0
        %728 = vdwg.mxu0
        %vm729 = vcmask 130048
        %v730 = vsel %vm729, %v654, -inf
        %731 = vmax.xlane.f32.xlu0 %v730
        %v732 = vpop.xlane.xlu0 %731
        %v733 = vsel %vm729, %v678, -inf
        %734 = vmax.xlane.f32.xlu0 %v733
        %v735 = vpop.xlane.xlu0 %734
        %v736 = vsel %vm729, %v702, -inf
        %737 = vmax.xlane.f32.xlu0 %v736
        %v738 = vpop.xlane.xlu0 %737
        %v739 = vsel %vm729, %v726, -inf
        %740 = vmax.xlane.f32.xlu0 %v739
        %v741 = vpop.xlane.xlu0 %740
        %v742 = vsub.f32 %v654, %v732
        %v743 = vsub.f32 %v678, %v735
        %v744 = vsub.f32 %v702, %v738
        %v745 = vsub.f32 %v726, %v741
        %v746 = vmul.f32 %v742, 1.442695
        %v747 = vpow.pop %v746
        %v748 = vmul.f32 %v743, 1.442695
        %v749 = vpow.pop %v748
        %v750 = vmul.f32 %v744, 1.442695
        %v751 = vpow.pop %v750
        %v752 = vmul.f32 %v745, 1.442695
        %v753 = vpow.pop %v752
        %v754 = vsel %vm729, %v747, 0.0
        %755 = vadd.xlane.f32.xlu0 %v754
        %v756 = vpop.xlane.xlu0 %755
        %v757 = vsel %vm729, %v749, 0.0
        %758 = vadd.xlane.f32.xlu0 %v757
        %v759 = vpop.xlane.xlu0 %758
        %v760 = vsel %vm729, %v751, 0.0
        %761 = vadd.xlane.f32.xlu0 %v760
        %v762 = vpop.xlane.xlu0 %761
        %v763 = vsel %vm729, %v753, 0.0
        %764 = vadd.xlane.f32.xlu0 %v763
        %v765 = vpop.xlane.xlu0 %764
        %v766 = vrcp.pop %v756
        %v767 = vrcp.pop %v759
        %v768 = vrcp.pop %v762
        %v769 = vrcp.pop %v765
        %v770 = vmul.f32 %v747, %v766
        %v771 = vmul.f32 %v749, %v767
        %v772 = vmul.f32 %v751, %v768
        %v773 = vmul.f32 %v753, %v769
        %v774 = vpack.c.bf16 %v770, %v770
        %v775 = vpack.c.bf16 %v771, %v771
        %v776 = vpack.c.bf16 %v772, %v772
        %v777 = vpack.c.bf16 %v773, %v773
        %v780 = vunpack.c.l.b16 %v624
        %v781 = vunpack.c.l.b16 %v625
        %v782 = vpack.c.b16 %v781, %v780
        %v785 = vsel %vm729, %v774, 0
        %787 = vmatpush.bf16.msra.mxu0 0
        %788 = vmatpush.bf16.msra.mxu0 0
        %789 = vmatpush.bf16.msra.mxu0 0
        %790 = vmatpush.bf16.msra.mxu0 0
        %791 = vmatpush.bf16.msra.mxu0 0
        %792 = vmatpush.bf16.msra.mxu0 0
        %793 = vmatpush.bf16.msra.mxu0 0
        %794 = vmatpush.bf16.msra.mxu0 %v782
        %795 = vmatmul.bf16.gmra.mxu0 %v785
        %v796 = vpop.f32.mrf.mxu0
        %v797 = vadd.f32 0.0, %v796
        %v798 = vpop.f32.mrf.mxu0
        %799 = vdwg.mxu0
        %v802 = vunpack.c.l.b16 %v626
        %v803 = vunpack.c.l.b16 %v627
        %v804 = vpack.c.b16 %v803, %v802
        %v807 = vsel %vm729, %v775, 0
        %809 = vmatpush.bf16.msra.mxu0 0
        %810 = vmatpush.bf16.msra.mxu0 0
        %811 = vmatpush.bf16.msra.mxu0 0
        %812 = vmatpush.bf16.msra.mxu0 0
        %813 = vmatpush.bf16.msra.mxu0 0
        %814 = vmatpush.bf16.msra.mxu0 0
        %815 = vmatpush.bf16.msra.mxu0 0
        %816 = vmatpush.bf16.msra.mxu0 %v804
        %817 = vmatmul.bf16.gmra.mxu0 %v807
        %v818 = vpop.f32.mrf.mxu0
        %v819 = vadd.f32 0.0, %v818
        %v820 = vpop.f32.mrf.mxu0
        %821 = vdwg.mxu0
        %v824 = vunpack.c.l.b16 %v628
        %v825 = vunpack.c.l.b16 %v629
        %v826 = vpack.c.b16 %v825, %v824
        %v829 = vsel %vm729, %v776, 0
        %831 = vmatpush.bf16.msra.mxu0 0
        %832 = vmatpush.bf16.msra.mxu0 0
        %833 = vmatpush.bf16.msra.mxu0 0
        %834 = vmatpush.bf16.msra.mxu0 0
        %835 = vmatpush.bf16.msra.mxu0 0
        %836 = vmatpush.bf16.msra.mxu0 0
        %837 = vmatpush.bf16.msra.mxu0 0
        %838 = vmatpush.bf16.msra.mxu0 %v826
        %839 = vmatmul.bf16.gmra.mxu0 %v829
        %v840 = vpop.f32.mrf.mxu0
        %v841 = vadd.f32 0.0, %v840
        %v842 = vpop.f32.mrf.mxu0
        %843 = vdwg.mxu0
        %v846 = vunpack.c.l.b16 %v630
        %v847 = vunpack.c.l.b16 %v631
        %v848 = vpack.c.b16 %v847, %v846
        %v851 = vsel %vm729, %v777, 0
        %853 = vmatpush.bf16.msra.mxu0 0
        %854 = vmatpush.bf16.msra.mxu0 0
        %855 = vmatpush.bf16.msra.mxu0 0
        %856 = vmatpush.bf16.msra.mxu0 0
        %857 = vmatpush.bf16.msra.mxu0 0
        %858 = vmatpush.bf16.msra.mxu0 0
        %859 = vmatpush.bf16.msra.mxu0 0
        %860 = vmatpush.bf16.msra.mxu0 %v848
        %861 = vmatmul.bf16.gmra.mxu0 %v851
        %v862 = vpop.f32.mrf.mxu0
        %v863 = vadd.f32 0.0, %v862
        %v864 = vpop.f32.mrf.mxu0
        %865 = vdwg.mxu0
        %v866 = vpack.c.bf16 %v797, %v797
        %v867 = vpack.c.bf16 %v819, %v819
        %v868 = vpack.c.bf16 %v841, %v841
        %v869 = vpack.c.bf16 %v863, %v863
        %v870 = vld [vmem:[%s5] sm:$0x1]
        %v871 = vld [vmem:[%s4] sm:$0xf]
        %v873 = vsel %vm637, %v866, 0
        %vm875 = vcmask 1043456
        %v877 = vsel %vm875, %v871, 0
        %879 = vmatpush.bf16.msra.mxu0 0
        %880 = vmatpush.bf16.msra.mxu0 0
        %881 = vmatpush.bf16.msra.mxu0 0
        %882 = vmatpush.bf16.msra.mxu0 0
        %883 = vmatpush.bf16.msra.mxu0 0
        %884 = vmatpush.bf16.msra.mxu0 0
        %885 = vmatpush.bf16.msra.mxu0 0
        %886 = vmatpush.bf16.msra.mxu0 %v877
        %887 = vmatmul.bf16.gmra.mxu0 %v873
        %v888 = vpop.f32.mrf.mxu0
        %v889 = vadd.f32 0.0, %v888
        %v890 = vpop.f32.mrf.mxu0
        %891 = vdwg.mxu0
        %v893 = vperm.slane %v870, 0
        %v895 = vadd.f32 %v893, %v889
        %s896 = scalar_lea.vmem %s4, 4
        %v897 = vld [vmem:[%s896] sm:$0xf]
        %v899 = vsel %vm637, %v867, 0
        %v902 = vsel %vm875, %v897, 0
        %904 = vmatpush.bf16.msra.mxu0 0
        %905 = vmatpush.bf16.msra.mxu0 0
        %906 = vmatpush.bf16.msra.mxu0 0
        %907 = vmatpush.bf16.msra.mxu0 0
        %908 = vmatpush.bf16.msra.mxu0 0
        %909 = vmatpush.bf16.msra.mxu0 0
        %910 = vmatpush.bf16.msra.mxu0 0
        %911 = vmatpush.bf16.msra.mxu0 %v902
        %912 = vmatmul.bf16.gmra.mxu0 %v899
        %v913 = vpop.f32.mrf.mxu0
        %v914 = vadd.f32 0.0, %v913
        %v915 = vpop.f32.mrf.mxu0
        %916 = vdwg.mxu0
        %v917 = vadd.f32 %v895, %v914
        %s918 = scalar_lea.vmem %s4, 8
        %v919 = vld [vmem:[%s918] sm:$0xf]
        %v921 = vsel %vm637, %v868, 0
        %v924 = vsel %vm875, %v919, 0
        %926 = vmatpush.bf16.msra.mxu0 0
        %927 = vmatpush.bf16.msra.mxu0 0
        %928 = vmatpush.bf16.msra.mxu0 0
        %929 = vmatpush.bf16.msra.mxu0 0
        %930 = vmatpush.bf16.msra.mxu0 0
        %931 = vmatpush.bf16.msra.mxu0 0
        %932 = vmatpush.bf16.msra.mxu0 0
        %933 = vmatpush.bf16.msra.mxu0 %v924
        %934 = vmatmul.bf16.gmra.mxu0 %v921
        %v935 = vpop.f32.mrf.mxu0
        %v936 = vadd.f32 0.0, %v935
        %v937 = vpop.f32.mrf.mxu0
        %938 = vdwg.mxu0
        %v939 = vadd.f32 %v917, %v936
        %s940 = scalar_lea.vmem %s4, 12
        %v941 = vld [vmem:[%s940] sm:$0xf]
        %v943 = vsel %vm637, %v869, 0
        %v946 = vsel %vm875, %v941, 0
        %948 = vmatpush.bf16.msra.mxu0 0
        %949 = vmatpush.bf16.msra.mxu0 0
        %950 = vmatpush.bf16.msra.mxu0 0
        %951 = vmatpush.bf16.msra.mxu0 0
        %952 = vmatpush.bf16.msra.mxu0 0
        %953 = vmatpush.bf16.msra.mxu0 0
        %954 = vmatpush.bf16.msra.mxu0 0
        %955 = vmatpush.bf16.msra.mxu0 %v946
        %956 = vmatmul.bf16.gmra.mxu0 %v943
        %v957 = vpop.f32.mrf.mxu0
        %v958 = vadd.f32 0.0, %v957
        %v959 = vpop.f32.mrf.mxu0
        %960 = vdwg.mxu0
        %v961 = vadd.f32 %v939, %v958
        %v962 = vld [vmem:[%s6] sm:$0x1]
        %v963 = vld [vmem:[%s7] sm:$0x1]
        %vm964 = vcmask 261120
        %v965 = vsel %vm964, %v961, 0.0
        %966 = vadd.xlane.f32.xlu0 %v965
        %v967 = vpop.xlane.xlu0 %966
        %v968 = vrcp.pop 32.0
        %v969 = vmul.f32 32.0, %v968
        %v970 = vsub.f32 1.0, %v969
        %v971 = vmul.f32 %v968, %v970
        %v972 = vadd.f32 %v968, %v971
        %vm973 = vweird.f32 %v968
        %v974 = vsel %vm973, %v968, %v972
        %v975 = vmul.f32 %v967, %v974
        %v976 = vsub.f32 %v961, %v975
        %v977 = vmul.f32 %v976, %v976
        %v978 = vsel %vm964, %v977, 0.0
        %979 = vadd.xlane.f32.xlu0 %v978
        %v980 = vpop.xlane.xlu0 %979
        %v981 = vmul.f32 %v980, %v974
        %v982 = vadd.f32 %v981, 1e-05
        %v983 = vrsqrt.pop %v982
        %v984 = vmul.f32 %v983, %v982
        %v985 = vmul.f32 %v984, %v983
        %v986 = vmul.f32 0.5, %v985
        %v987 = vsub.f32 1.5, %v986
        %v988 = vmul.f32 %v983, %v987
        %vm989 = vweird.f32 %v982
        %vm990 = vweird.f32 %v983
        %vm991 = vmor %vm989, %vm990
        %v992 = vsel %vm991, %v983, %v988
        %v993 = vmul.f32 %v976, %v992
        %v995 = vperm.slane %v962, 0
        %v997 = vmul.f32 %v993, %v995
        %v999 = vperm.slane %v963, 0
        %v1001 = vadd.f32 %v997, %v999
        %v1002 = vadd.f32 %v611, %v1001
        %v1003 = vpack.c.bf16 %v1002, %v1002
        %v1004 = vld [vmem:[%s8] sm:$0xf]
        %v1005 = vld [vmem:[%s8 + $0x4] sm:$0xf]
        %v1006 = vld [vmem:[%s8 + $0x8] sm:$0xf]
        %v1007 = vld [vmem:[%s8 + $0xc] sm:$0xf]
        %v1008 = vld [vmem:[%s9] sm:$0x1]
        %v1010 = vperm.slane %v1008, 0
        %v1016 = vunpack.c.l.b16 %v1004
        %v1017 = vunpack.c.l.b16 %v1005
        %v1018 = vunpack.c.l.b16 %v1006
        %v1019 = vunpack.c.l.b16 %v1007
        %v1020 = vpack.c.b16 %v1017, %v1016
        %v1021 = vpack.c.b16 %v1019, %v1018
        %v1025 = vsel %vm964, %v1003, 0
        %1027 = vmatpush.bf16.msra.mxu0 0
        %1028 = vmatpush.bf16.msra.mxu0 0
        %1029 = vmatpush.bf16.msra.mxu0 0
        %1030 = vmatpush.bf16.msra.mxu0 0
        %1031 = vmatpush.bf16.msra.mxu0 0
        %1032 = vmatpush.bf16.msra.mxu0 0
        %1033 = vmatpush.bf16.msra.mxu0 %v1021
        %1034 = vmatpush.bf16.msra.mxu0 %v1020
        %1035 = vmatmul.bf16.gmra.mxu0 %v1025
        %v1036 = vpop.f32.mrf.mxu0
        %v1037 = vadd.f32 %v1010, %v1036
        %v1038 = vpop.f32.mrf.mxu0
        %1039 = vdwg.mxu0
        %v1040 = vmul.f32 %v1037, 0.5
        %v1041 = vmul.f32 %v1037, 0.70710677
        %v1042 = vmul.f32 %v1041, %v1041
        %v1043 = vmin.f32 16.0, %v1042
        %v1044 = vmul.f32 %v1043, 2.1237322e-06
        %v1045 = vadd.f32 %v1044, 0.00028619796
        %v1046 = vmul.f32 %v1043, %v1045
        %v1047 = vadd.f32 %v1046, 0.0036580483
        %v1048 = vmul.f32 %v1043, %v1047
        %v1049 = vadd.f32 %v1048, 0.05243302
        %v1050 = vmul.f32 %v1043, %v1049
        %v1051 = vadd.f32 %v1050, 0.18741608
        %v1052 = vmul.f32 %v1043, %v1051
        %v1053 = vadd.f32 %v1052, 1.1283791
        %v1054 = vmul.f32 %v1041, %v1053
        %v1055 = vmul.f32 %v1043, 3.8918573e-05
        %v1056 = vadd.f32 %v1055, 0.001143296
        %v1057 = vmul.f32 %v1043, %v1056
        %v1058 = vadd.f32 %v1057, 0.014752088
        %v1059 = vmul.f32 %v1043, %v1058
        %v1060 = vadd.f32 %v1059, 0.112945676
        %v1061 = vmul.f32 %v1043, %v1060
        %v1062 = vadd.f32 %v1061, 0.4994258
        %v1063 = vmul.f32 %v1043, %v1062
        %v1064 = vadd.f32 %v1063, 1.0
        %v1065 = vrcp.pop %v1064
        %v1066 = vmul.f32 %v1064, %v1065
        %v1067 = vsub.f32 1.0, %v1066
        %v1068 = vmul.f32 %v1065, %v1067
        %v1069 = vadd.f32 %v1065, %v1068
        %vm1070 = vweird.f32 %v1064
        %vm1071 = vweird.f32 %v1065
        %vm1072 = vmor %vm1070, %vm1071
        %v1073 = vsel %vm1072, %v1065, %v1069
        %v1074 = vand.u32 2147483647, %v1064
        %vm1075 = vcmp.eq.f32.partialorder %v1074, 8.507059e+37
        %v1076 = vand.u32 %v1064, 2147483648
        %v1077 = vor.u32 1.1754944e-38, %v1076
        %v1078 = vsel %vm1075, %v1077, %v1073
        %v1079 = vmul.f32 %v1054, %v1078
        %v1080 = vmin.f32 %v1079, 1.0
        %v1081 = vmax.f32 %v1080, -1.0
        %v1082 = vadd.f32 %v1081, 1.0
        %v1083 = vmul.f32 %v1040, %v1082
        %v1084 = vpack.c.bf16 %v1083, %v1083
        %v1085 = vld [vmem:[%s10] sm:$0xf]
        %v1086 = vld [vmem:[%s10 + $0x4] sm:$0xf]
        %v1087 = vld [vmem:[%s10 + $0x8] sm:$0xf]
        %v1088 = vld [vmem:[%s10 + $0xc] sm:$0xf]
        %v1089 = vld [vmem:[%s10 + $0x10] sm:$0xf]
        %v1090 = vld [vmem:[%s10 + $0x14] sm:$0xf]
        %v1091 = vld [vmem:[%s10 + $0x18] sm:$0xf]
        %v1092 = vld [vmem:[%s10 + $0x1c] sm:$0xf]
        %v1093 = vld [vmem:[%s10 + $0x20] sm:$0xf]
        %v1094 = vld [vmem:[%s10 + $0x24] sm:$0xf]
        %v1095 = vld [vmem:[%s10 + $0x28] sm:$0xf]
        %v1096 = vld [vmem:[%s10 + $0x2c] sm:$0xf]
        %v1097 = vld [vmem:[%s10 + $0x30] sm:$0xf]
        %v1098 = vld [vmem:[%s10 + $0x34] sm:$0xf]
        %v1099 = vld [vmem:[%s10 + $0x38] sm:$0xf]
        %v1100 = vld [vmem:[%s10 + $0x3c] sm:$0xf]
        %v1101 = vld [vmem:[%s11] sm:$0x1]
        %v1103 = vperm.slane %v1101, 0
        %v1121 = vunpack.c.l.b16 %v1085
        %v1122 = vunpack.c.l.b16 %v1086
        %v1123 = vunpack.c.l.b16 %v1087
        %v1124 = vunpack.c.l.b16 %v1088
        %v1125 = vunpack.c.l.b16 %v1089
        %v1126 = vunpack.c.l.b16 %v1090
        %v1127 = vunpack.c.l.b16 %v1091
        %v1128 = vunpack.c.l.b16 %v1092
        %v1129 = vunpack.c.l.b16 %v1093
        %v1130 = vunpack.c.l.b16 %v1094
        %v1131 = vunpack.c.l.b16 %v1095
        %v1132 = vunpack.c.l.b16 %v1096
        %v1133 = vunpack.c.l.b16 %v1097
        %v1134 = vunpack.c.l.b16 %v1098
        %v1135 = vunpack.c.l.b16 %v1099
        %v1136 = vunpack.c.l.b16 %v1100
        %v1137 = vpack.c.b16 %v1122, %v1121
        %v1138 = vpack.c.b16 %v1124, %v1123
        %v1139 = vpack.c.b16 %v1126, %v1125
        %v1140 = vpack.c.b16 %v1128, %v1127
        %v1141 = vpack.c.b16 %v1130, %v1129
        %v1142 = vpack.c.b16 %v1132, %v1131
        %v1143 = vpack.c.b16 %v1134, %v1133
        %v1144 = vpack.c.b16 %v1136, %v1135
        %1153 = vmatpush.bf16.msra.mxu0 %v1144
        %1154 = vmatpush.bf16.msra.mxu0 %v1143
        %1155 = vmatpush.bf16.msra.mxu0 %v1142
        %1156 = vmatpush.bf16.msra.mxu0 %v1141
        %1157 = vmatpush.bf16.msra.mxu0 %v1140
        %1158 = vmatpush.bf16.msra.mxu0 %v1139
        %1159 = vmatpush.bf16.msra.mxu0 %v1138
        %1160 = vmatpush.bf16.msra.mxu0 %v1137
        %1161 = vmatmul.bf16.gmra.mxu0 %v1084
        %v1162 = vpop.f32.mrf.mxu0
        %v1163 = vadd.f32 %v1103, %v1162
        %v1164 = vpop.f32.mrf.mxu0
        %1165 = vdwg.mxu0
        %v1166 = vld [vmem:[%s12] sm:$0x1]
        %v1167 = vld [vmem:[%s13] sm:$0x1]
        %v1168 = vsel %vm964, %v1163, 0.0
        %1169 = vadd.xlane.f32.xlu0 %v1168
        %v1170 = vpop.xlane.xlu0 %1169
        %v1171 = vmul.f32 %v1170, %v974
        %v1172 = vsub.f32 %v1163, %v1171
        %v1173 = vmul.f32 %v1172, %v1172
        %v1174 = vsel %vm964, %v1173, 0.0
        %1175 = vadd.xlane.f32.xlu0 %v1174
        %v1176 = vpop.xlane.xlu0 %1175
        %v1177 = vmul.f32 %v1176, %v974
        %v1178 = vadd.f32 %v1177, 1e-05
        %v1179 = vrsqrt.pop %v1178
        %v1180 = vmul.f32 %v1179, %v1178
        %v1181 = vmul.f32 %v1180, %v1179
        %v1182 = vmul.f32 0.5, %v1181
        %v1183 = vsub.f32 1.5, %v1182
        %v1184 = vmul.f32 %v1179, %v1183
        %vm1185 = vweird.f32 %v1178
        %vm1186 = vweird.f32 %v1179
        %vm1187 = vmor %vm1185, %vm1186
        %v1188 = vsel %vm1187, %v1179, %v1184
        %v1189 = vmul.f32 %v1172, %v1188
        %v1191 = vperm.slane %v1166, 0
        %v1193 = vmul.f32 %v1189, %v1191
        %v1195 = vperm.slane %v1167, 0
        %v1197 = vadd.f32 %v1193, %v1195
        %v1198 = vadd.f32 %v1002, %v1197
        %1199 = vst.msk [vmem:[%s591] sm:$0xff] %vm964, %v1198
        %s1200 = sand.u32 %s368, 1
        %s1201 = scalar_lea.sflag [#allocation4], %s1200
        %s1202 = sand.u32 %s368, 1
        %s1203 = smul.addr %s1202, 8
        %s1204 = scalar_lea.vmem [#allocation3], %s1203
        // Predicated region
        $region118: #{tpu_custom_call.1} parent=112 // pred_check
          %p1205 = pneg %p378
        $region119: #{tpu_custom_call.1} parent=112 // pred_check_branch
          %1207 = sbr.rel (%p1205) target = $region121
        $region120: #{tpu_custom_call.1} parent=112 // pred_region
          %1209 = vsyncadd %s1201, 0
          %s1210 = smul.addr %s32, 2
          %s1211 = sadd.s32 %s33, %s1210
          %s1212 = smul.addr %s1211, 8
          %s1213 = scalar_lea.hbm %s14, %s1212
          %s1215 = sshll.u32 %s1204, 4
          %s1216 = int_to_ptr.vmem [resolvable:$true] %s1215
          %s1217 = sshll.u32 %s1213, 4
          %s1218 = int_to_ptr.hbm [resolvable:$true] %s1217
          %1220 = dma.vmem_to_hbm [thread:$0]  %s1216, 128, %s1218, %s1201
        $region121: #{tpu_custom_call.1} parent=112 // pred_fallthru
          _
      $region113: #{tpu_custom_call.1} parent=5 // pred_fallthru
        _
      %p1221 = scmp.le.s32.totalorder 2, %s23
      // Predicated region
      $region122: #{tpu_custom_call.1} parent=5 // pred_check
        %p1222 = pneg %p1221
      $region123: #{tpu_custom_call.1} parent=5 // pred_check_branch
        %1224 = sbr.rel (%p1222) target = $region125
      $region124: #{tpu_custom_call.1} parent=5 // pred_region
        %s1225 = ssub.s32 %s23, 2
        // Predicated region
        $region126: #{tpu_custom_call.1} parent=124 // pred_check
          %p1226 = pneg %p384
        $region127: #{tpu_custom_call.1} parent=124 // pred_check_branch
          %1228 = sbr.rel (%p1226) target = $region129
        $region128: #{tpu_custom_call.1} parent=124 // pred_region
          %s1229 = sand.u32 %s369, 1
          %s1230 = scalar_lea.sflag [#allocation4], %s1229
          %s1231 = sand.u32 %s369, 1
          %s1232 = smul.addr %s1231, 8
          %s1233 = scalar_lea.vmem [#allocation3], %s1232
          %1235 = dma.done %s1230, 128
        $region129: #{tpu_custom_call.1} parent=124 // pred_fallthru
          _
      $region125: #{tpu_custom_call.1} parent=5 // pred_fallthru
        _
    $region6: #{tpu_custom_call.1} parent=1 // loop_footer
      %s27 = sadd.s32 1, %s23
    $region7: #{tpu_custom_call.1} parent=1 // loop_footer_branch
      %22 = sbr.rel target = $region3
    $region8: #{tpu_custom_call.1} parent=1 // loop_exit
      _
    %1236 = vsyncpa [#allocation4], 1
    %s1237 = scalar_lea.sflag [#allocation4], 1
    %1238 = vsyncpa %s1237, 1

// kernel: tpu_custom_call.1
$region0: #{tpu_custom_call.1}
  #allocation0 [shape = 'u32[]', space=smem, size = 0x4, offset = 0x4, fixed_abs, tag = 'smem constant byte address 0x4 - core index']
  #allocation1 [shape = 'u32[72,128]{1,0:T(1,128)}', space=vmem, size = 0x9000, scoped, tag = 'internal scratch']
  %s0 = inlined_call_operand.vmem [shape: f32[2,16,32], index: 0, kind: input, shape index: {}]
  %s1 = inlined_call_operand.vmem [shape: bf16[2,4,16,8], index: 1, kind: input, shape index: {}]
  %s2 = inlined_call_operand.vmem [shape: bf16[2,4,16,8], index: 2, kind: input, shape index: {}]
  %s3 = inlined_call_operand.vmem [shape: bf16[2,4,16,8], index: 3, kind: input, shape index: {}]
  %s4 = inlined_call_operand.vmem [shape: bf16[4,8,32], index: 4, kind: input, shape index: {}]
  %s5 = inlined_call_operand.vmem [shape: f32[1,32], index: 5, kind: input, shape index: {}]
  %s6 = inlined_call_operand.vmem [shape: f32[1,32], index: 6, kind: input, shape index: {}]
  %s7 = inlined_call_operand.vmem [shape: f32[1,32], index: 7, kind: input, shape index: {}]
  %s8 = inlined_call_operand.vmem [shape: bf16[32,128], index: 8, kind: input, shape index: {}]
  %s9 = inlined_call_operand.vmem [shape: f32[1,128], index: 9, kind: input, shape index: {}]
  %s10 = inlined_call_operand.vmem [shape: bf16[128,32], index: 10, kind: input, shape index: {}]
  %s11 = inlined_call_operand.vmem [shape: f32[1,32], index: 11, kind: input, shape index: {}]
  %s12 = inlined_call_operand.vmem [shape: f32[1,32], index: 12, kind: input, shape index: {}]
  %s13 = inlined_call_operand.vmem [shape: f32[1,32], index: 13, kind: input, shape index: {}]
  %s14 = inlined_call_operand.hbm [shape: f32[2,16,32], index: 14, kind: output, shape index: {}]
  %s15 = sld [smem:[#allocation0]]
  $region130: #{tpu_custom_call.1} parent=0
    _
  %s17 = ssub.s32 1, %s15
  %s18 = scalar_select 0, %s17, %s15
  $region1: #{tpu_custom_call.1} parent=0
    #allocation2 [shape = 'u8[16384]{0}', space=vmem, size = 0x4000, scoped, tag = 'input window, operand 1']
    #allocation3 [shape = 'u8[8192]{0}', space=vmem, size = 0x2000, scoped, tag = 'output window, operand 0']
    #allocation4 [shape = 's32[2]{0}', space=sflag, size = 0x8, scoped, tag = 'scoped memory for tpu_custom_call.1']
    %19 = vsyncpa [#allocation4], 0
    %s20 = scalar_lea.sflag [#allocation4], 1
    %21 = vsyncpa %s20, 0
    loop: start=0, step=1, limit=6
    $region2: #{tpu_custom_call.1} parent=1 // loop_pre_header
      _
    $region3: #{tpu_custom_call.1} parent=1 // loop_header
      %s23 = sphi 0, %s27
      %p24 = scmp.ge.s32.totalorder %s23, 6
      %s30 = sphi 0, %s42
      %s31 = sphi 0, %s38
      %s32 = sphi 0, %s30
      %s33 = sphi 0, %s31
      %s34 = sphi 0, %s32
      %s35 = sphi 0, %s33
      %s47 = sphi 0, %s49
      %s50 = sphi 0, %s47
      %s51 = sphi 0, %s50
      %s67 = sphi 0, %s51
      %s75 = sphi 0, %s77
      %s78 = sphi 0, %s75
      %s79 = sphi 0, %s78
      %s95 = sphi 0, %s79
      %s101 = sphi 0, %s103
      %s104 = sphi 0, %s101
      %s105 = sphi 0, %s104
      %s121 = sphi 0, %s105
      %s127 = sphi 0, %s129
      %s130 = sphi 0, %s127
      %s131 = sphi 0, %s130
      %s147 = sphi 0, %s131
      %s151 = sphi 0, %s151
      %s153 = sphi 0, %s151
      %s154 = sphi 0, %s153
      %s168 = sphi 0, %s154
      %s172 = sphi 0, %s172
      %s174 = sphi 0, %s172
      %s175 = sphi 0, %s174
      %s189 = sphi 0, %s175
      %s193 = sphi 0, %s193
      %s195 = sphi 0, %s193
      %s196 = sphi 0, %s195
      %s210 = sphi 0, %s196
      %s214 = sphi 0, %s214
      %s216 = sphi 0, %s214
      %s217 = sphi 0, %s216
      %s231 = sphi 0, %s217
      %s235 = sphi 0, %s235
      %s237 = sphi 0, %s235
      %s238 = sphi 0, %s237
      %s252 = sphi 0, %s238
      %s256 = sphi 0, %s256
      %s258 = sphi 0, %s256
      %s259 = sphi 0, %s258
      %s273 = sphi 0, %s259
      %s277 = sphi 0, %s277
      %s279 = sphi 0, %s277
      %s280 = sphi 0, %s279
      %s294 = sphi 0, %s280
      %s298 = sphi 0, %s298
      %s300 = sphi 0, %s298
      %s301 = sphi 0, %s300
      %s315 = sphi 0, %s301
      %s319 = sphi 0, %s319
      %s321 = sphi 0, %s319
      %s322 = sphi 0, %s321
      %s336 = sphi 0, %s322
      %s340 = sphi 0, %s340
      %s342 = sphi 0, %s340
      %s343 = sphi 0, %s342
      %s357 = sphi 0, %s343
      %s365 = sphi 0, %s367
      %s368 = sphi 0, %s365
      %s369 = sphi 0, %s368
      %s385 = sphi 0, %s369
    $region4: #{tpu_custom_call.1} parent=1 // loop_header_branch
      %26 = sbr.rel (%p24) target = $region8
    $region5: #{tpu_custom_call.1} parent=1 // loop_body
      %s28 = ssub.s32 %s23, 1
      %s29 = ssub.s32 %s23, 2
      %s36 = sadd.s32 1, %s31
      %p37 = scmp.ge.s32.totalorder %s36, 2
      %s38 = scalar_select %p37, 0, %s36
      %s39 = sadd.s32 1, %s30
      %s40 = scalar_select %p37, %s39, %s30
      %p41 = scmp.ge.s32.totalorder %s40, 2
      %s42 = scalar_select %p41, 0, %s40
      %s43 = ssub.s32 %s30, %s42
      %s44 = ssub.s32 %s31, %s38
      %s45 = sor.u32 %s43, %s44
      %p46 = scmp.eq.s32.totalorder %s45, 0
      %s48 = sadd.s32 %s47, 1
      %s49 = scalar_select %p46, %s47, %s48
      %p52 = pneg %p46
      %p53 = scmp.eq.s32.totalorder %s23, 3
      %p54 = por %p52, %p53
      %p55 = scmp.ne.s32.totalorder %s47, %s50
      %p56 = scmp.eq.s32.totalorder %s23, 0
      %p57 = por %p55, %p56
      %p58 = scmp.ne.s32.totalorder %s47, %s50
      %p59 = scmp.eq.s32.totalorder %s28, 3
      %p60 = por %p58, %p59
      %p61 = scmp.ne.s32.totalorder %s50, %s51
      %p62 = scmp.eq.s32.totalorder %s28, 0
      %p63 = por %p61, %p62
      %p64 = scmp.ne.s32.totalorder %s50, %s51
      %p65 = scmp.eq.s32.totalorder %s29, 3
      %p66 = por %p64, %p65
      %p68 = scmp.ne.s32.totalorder %s51, %s67
      %p69 = scmp.eq.s32.totalorder %s29, 0
      %p70 = por %p68, %p69
      %s71 = ssub.s32 %s30, %s42
      %s72 = ssub.s32 %s31, %s38
      %s73 = sor.u32 %s71, %s72
      %p74 = scmp.eq.s32.totalorder %s73, 0
      %s76 = sadd.s32 %s75, 1
      %s77 = scalar_select %p74, %s75, %s76
      %p80 = pneg %p74
      %p81 = scmp.eq.s32.totalorder %s23, 3
      %p82 = por %p80, %p81
      %p83 = scmp.ne.s32.totalorder %s75, %s78
      %p84 = scmp.eq.s32.totalorder %s23, 0
      %p85 = por %p83, %p84
      %p86 = scmp.ne.s32.totalorder %s75, %s78
      %p87 = scmp.eq.s32.totalorder %s28, 3
      %p88 = por %p86, %p87
      %p89 = scmp.ne.s32.totalorder %s78, %s79
      %p90 = scmp.eq.s32.totalorder %s28, 0
      %p91 = por %p89, %p90
      %p92 = scmp.ne.s32.totalorder %s78, %s79
      %p93 = scmp.eq.s32.totalorder %s29, 3
      %p94 = por %p92, %p93
      %p96 = scmp.ne.s32.totalorder %s79, %s95
      %p97 = scmp.eq.s32.totalorder %s29, 0
      %p98 = por %p96, %p97
      %s99 = ssub.s32 %s30, %s42
      %p100 = scmp.eq.s32.totalorder %s99, 0
      %s102 = sadd.s32 %s101, 1
      %s103 = scalar_select %p100, %s101, %s102
      %p106 = pneg %p100
      %p107 = scmp.eq.s32.totalorder %s23, 3
      %p108 = por %p106, %p107
      %p109 = scmp.ne.s32.totalorder %s101, %s104
      %p110 = scmp.eq.s32.totalorder %s23, 0
      %p111 = por %p109, %p110
      %p112 = scmp.ne.s32.totalorder %s101, %s104
      %p113 = scmp.eq.s32.totalorder %s28, 3
      %p114 = por %p112, %p113
      %p115 = scmp.ne.s32.totalorder %s104, %s105
      %p116 = scmp.eq.s32.totalorder %s28, 0
      %p117 = por %p115, %p116
      %p118 = scmp.ne.s32.totalorder %s104, %s105
      %p119 = scmp.eq.s32.totalorder %s29, 3
      %p120 = por %p118, %p119
      %p122 = scmp.ne.s32.totalorder %s105, %s121
      %p123 = scmp.eq.s32.totalorder %s29, 0
      %p124 = por %p122, %p123
      %s125 = ssub.s32 %s30, %s42
      %p126 = scmp.eq.s32.totalorder %s125, 0
      %s128 = sadd.s32 %s127, 1
      %s129 = scalar_select %p126, %s127, %s128
      %p132 = pneg %p126
      %p133 = scmp.eq.s32.totalorder %s23, 3
      %p134 = por %p132, %p133
      %p135 = scmp.ne.s32.totalorder %s127, %s130
      %p136 = scmp.eq.s32.totalorder %s23, 0
      %p137 = por %p135, %p136
      %p138 = scmp.ne.s32.totalorder %s127, %s130
      %p139 = scmp.eq.s32.totalorder %s28, 3
      %p140 = por %p138, %p139
      %p141 = scmp.ne.s32.totalorder %s130, %s131
      %p142 = scmp.eq.s32.totalorder %s28, 0
      %p143 = por %p141, %p142
      %p144 = scmp.ne.s32.totalorder %s130, %s131
      %p145 = scmp.eq.s32.totalorder %s29, 3
      %p146 = por %p144, %p145
      %p148 = scmp.ne.s32.totalorder %s131, %s147
      %p149 = scmp.eq.s32.totalorder %s29, 0
      %p150 = por %p148, %p149
      %s152 = sadd.s32 %s151, 1
      %p155 = scmp.eq.s32.totalorder %s23, 3
      %p156 = scmp.ne.s32.totalorder %s151, %s153
      %p157 = scmp.eq.s32.totalorder %s23, 0
      %p158 = por %p156, %p157
      %p159 = scmp.ne.s32.totalorder %s151, %s153
      %p160 = scmp.eq.s32.totalorder %s28, 3
      %p161 = por %p159, %p160
      %p162 = scmp.ne.s32.totalorder %s153, %s154
      %p163 = scmp.eq.s32.totalorder %s28, 0
      %p164 = por %p162, %p163
      %p165 = scmp.ne.s32.totalorder %s153, %s154
      %p166 = scmp.eq.s32.totalorder %s29, 3
      %p167 = por %p165, %p166
      %p169 = scmp.ne.s32.totalorder %s154, %s168
      %p170 = scmp.eq.s32.totalorder %s29, 0
      %p171 = por %p169, %p170
      %s173 = sadd.s32 %s172, 1
      %p176 = scmp.eq.s32.totalorder %s23, 3
      %p177 = scmp.ne.s32.totalorder %s172, %s174
      %p178 = scmp.eq.s32.totalorder %s23, 0
      %p179 = por %p177, %p178
      %p180 = scmp.ne.s32.totalorder %s172, %s174
      %p181 = scmp.eq.s32.totalorder %s28, 3
      %p182 = por %p180, %p181
      %p183 = scmp.ne.s32.totalorder %s174, %s175
      %p184 = scmp.eq.s32.totalorder %s28, 0
      %p185 = por %p183, %p184
      %p186 = scmp.ne.s32.totalorder %s174, %s175
      %p187 = scmp.eq.s32.totalorder %s29, 3
      %p188 = por %p186, %p187
      %p190 = scmp.ne.s32.totalorder %s175, %s189
      %p191 = scmp.eq.s32.totalorder %s29, 0
      %p192 = por %p190, %p191
      %s194 = sadd.s32 %s193, 1
      %p197 = scmp.eq.s32.totalorder %s23, 3
      %p198 = scmp.ne.s32.totalorder %s193, %s195
      %p199 = scmp.eq.s32.totalorder %s23, 0
      %p200 = por %p198, %p199
      %p201 = scmp.ne.s32.totalorder %s193, %s195
      %p202 = scmp.eq.s32.totalorder %s28, 3
      %p203 = por %p201, %p202
      %p204 = scmp.ne.s32.totalorder %s195, %s196
      %p205 = scmp.eq.s32.totalorder %s28, 0
      %p206 = por %p204, %p205
      %p207 = scmp.ne.s32.totalorder %s195, %s196
      %p208 = scmp.eq.s32.totalorder %s29, 3
      %p209 = por %p207, %p208
      %p211 = scmp.ne.s32.totalorder %s196, %s210
      %p212 = scmp.eq.s32.totalorder %s29, 0
      %p213 = por %p211, %p212
      %s215 = sadd.s32 %s214, 1
      %p218 = scmp.eq.s32.totalorder %s23, 3
      %p219 = scmp.ne.s32.totalorder %s214, %s216
      %p220 = scmp.eq.s32.totalorder %s23, 0
      %p221 = por %p219, %p220
      %p222 = scmp.ne.s32.totalorder %s214, %s216
      %p223 = scmp.eq.s32.totalorder %s28, 3
      %p224 = por %p222, %p223
      %p225 = scmp.ne.s32.totalorder %s216, %s217
      %p226 = scmp.eq.s32.totalorder %s28, 0
      %p227 = por %p225, %p226
      %p228 = scmp.ne.s32.totalorder %s216, %s217
      %p229 = scmp.eq.s32.totalorder %s29, 3
      %p230 = por %p228, %p229
      %p232 = scmp.ne.s32.totalorder %s217, %s231
      %p233 = scmp.eq.s32.totalorder %s29, 0
      %p234 = por %p232, %p233
      %s236 = sadd.s32 %s235, 1
      %p239 = scmp.eq.s32.totalorder %s23, 3
      %p240 = scmp.ne.s32.totalorder %s235, %s237
      %p241 = scmp.eq.s32.totalorder %s23, 0
      %p242 = por %p240, %p241
      %p243 = scmp.ne.s32.totalorder %s235, %s237
      %p244 = scmp.eq.s32.totalorder %s28, 3
      %p245 = por %p243, %p244
      %p246 = scmp.ne.s32.totalorder %s237, %s238
      %p247 = scmp.eq.s32.totalorder %s28, 0
      %p248 = por %p246, %p247
      %p249 = scmp.ne.s32.totalorder %s237, %s238
      %p250 = scmp.eq.s32.totalorder %s29, 3
      %p251 = por %p249, %p250
      %p253 = scmp.ne.s32.totalorder %s238, %s252
      %p254 = scmp.eq.s32.totalorder %s29, 0
      %p255 = por %p253, %p254
      %s257 = sadd.s32 %s256, 1
      %p260 = scmp.eq.s32.totalorder %s23, 3
      %p261 = scmp.ne.s32.totalorder %s256, %s258
      %p262 = scmp.eq.s32.totalorder %s23, 0
      %p263 = por %p261, %p262
      %p264 = scmp.ne.s32.totalorder %s256, %s258
      %p265 = scmp.eq.s32.totalorder %s28, 3
      %p266 = por %p264, %p265
      %p267 = scmp.ne.s32.totalorder %s258, %s259
      %p268 = scmp.eq.s32.totalorder %s28, 0
      %p269 = por %p267, %p268
      %p270 = scmp.ne.s32.totalorder %s258, %s259
      %p271 = scmp.eq.s32.totalorder %s29, 3
      %p272 = por %p270, %p271
      %p274 = scmp.ne.s32.totalorder %s259, %s273
      %p275 = scmp.eq.s32.totalorder %s29, 0
      %p276 = por %p274, %p275
      %s278 = sadd.s32 %s277, 1
      %p281 = scmp.eq.s32.totalorder %s23, 3
      %p282 = scmp.ne.s32.totalorder %s277, %s279
      %p283 = scmp.eq.s32.totalorder %s23, 0
      %p284 = por %p282, %p283
      %p285 = scmp.ne.s32.totalorder %s277, %s279
      %p286 = scmp.eq.s32.totalorder %s28, 3
      %p287 = por %p285, %p286
      %p288 = scmp.ne.s32.totalorder %s279, %s280
      %p289 = scmp.eq.s32.totalorder %s28, 0
      %p290 = por %p288, %p289
      %p291 = scmp.ne.s32.totalorder %s279, %s280
      %p292 = scmp.eq.s32.totalorder %s29, 3
      %p293 = por %p291, %p292
      %p295 = scmp.ne.s32.totalorder %s280, %s294
      %p296 = scmp.eq.s32.totalorder %s29, 0
      %p297 = por %p295, %p296
      %s299 = sadd.s32 %s298, 1
      %p302 = scmp.eq.s32.totalorder %s23, 3
      %p303 = scmp.ne.s32.totalorder %s298, %s300
      %p304 = scmp.eq.s32.totalorder %s23, 0
      %p305 = por %p303, %p304
      %p306 = scmp.ne.s32.totalorder %s298, %s300
      %p307 = scmp.eq.s32.totalorder %s28, 3
      %p308 = por %p306, %p307
      %p309 = scmp.ne.s32.totalorder %s300, %s301
      %p310 = scmp.eq.s32.totalorder %s28, 0
      %p311 = por %p309, %p310
      %p312 = scmp.ne.s32.totalorder %s300, %s301
      %p313 = scmp.eq.s32.totalorder %s29, 3
      %p314 = por %p312, %p313
      %p316 = scmp.ne.s32.totalorder %s301, %s315
      %p317 = scmp.eq.s32.totalorder %s29, 0
      %p318 = por %p316, %p317
      %s320 = sadd.s32 %s319, 1
      %p323 = scmp.eq.s32.totalorder %s23, 3
      %p324 = scmp.ne.s32.totalorder %s319, %s321
      %p325 = scmp.eq.s32.totalorder %s23, 0
      %p326 = por %p324, %p325
      %p327 = scmp.ne.s32.totalorder %s319, %s321
      %p328 = scmp.eq.s32.totalorder %s28, 3
      %p329 = por %p327, %p328
      %p330 = scmp.ne.s32.totalorder %s321, %s322
      %p331 = scmp.eq.s32.totalorder %s28, 0
      %p332 = por %p330, %p331
      %p333 = scmp.ne.s32.totalorder %s321, %s322
      %p334 = scmp.eq.s32.totalorder %s29, 3
      %p335 = por %p333, %p334
      %p337 = scmp.ne.s32.totalorder %s322, %s336
      %p338 = scmp.eq.s32.totalorder %s29, 0
      %p339 = por %p337, %p338
      %s341 = sadd.s32 %s340, 1
      %p344 = scmp.eq.s32.totalorder %s23, 3
      %p345 = scmp.ne.s32.totalorder %s340, %s342
      %p346 = scmp.eq.s32.totalorder %s23, 0
      %p347 = por %p345, %p346
      %p348 = scmp.ne.s32.totalorder %s340, %s342
      %p349 = scmp.eq.s32.totalorder %s28, 3
      %p350 = por %p348, %p349
      %p351 = scmp.ne.s32.totalorder %s342, %s343
      %p352 = scmp.eq.s32.totalorder %s28, 0
      %p353 = por %p351, %p352
      %p354 = scmp.ne.s32.totalorder %s342, %s343
      %p355 = scmp.eq.s32.totalorder %s29, 3
      %p356 = por %p354, %p355
      %p358 = scmp.ne.s32.totalorder %s343, %s357
      %p359 = scmp.eq.s32.totalorder %s29, 0
      %p360 = por %p358, %p359
      %s361 = ssub.s32 %s30, %s42
      %s362 = ssub.s32 %s31, %s38
      %s363 = sor.u32 %s361, %s362
      %p364 = scmp.eq.s32.totalorder %s363, 0
      %s366 = sadd.s32 %s365, 1
      %s367 = scalar_select %p364, %s365, %s366
      %p370 = pneg %p364
      %p371 = scmp.eq.s32.totalorder %s23, 3
      %p372 = por %p370, %p371
      %p373 = scmp.ne.s32.totalorder %s365, %s368
      %p374 = scmp.eq.s32.totalorder %s23, 0
      %p375 = por %p373, %p374
      %p376 = scmp.ne.s32.totalorder %s365, %s368
      %p377 = scmp.eq.s32.totalorder %s28, 3
      %p378 = por %p376, %p377
      %p379 = scmp.ne.s32.totalorder %s368, %s369
      %p380 = scmp.eq.s32.totalorder %s28, 0
      %p381 = por %p379, %p380
      %p382 = scmp.ne.s32.totalorder %s368, %s369
      %p383 = scmp.eq.s32.totalorder %s29, 3
      %p384 = por %p382, %p383
      %p386 = scmp.ne.s32.totalorder %s369, %s385
      %p387 = scmp.eq.s32.totalorder %s29, 0
      %p388 = por %p386, %p387
      %p389 = scmp.le.s32.totalorder 1, %s23
      %p390 = scmp.lt.s32.totalorder %s23, 5
      %p391 = pnand %p389, %p390
      %p392 = pneg %p391
      // Predicated region
      $region9: #{tpu_custom_call.1} parent=5 // pred_check
        _
      $region10: #{tpu_custom_call.1} parent=5 // pred_check_branch
        %394 = sbr.rel (%p391) target = $region12
      $region11: #{tpu_custom_call.1} parent=5 // pred_region
        %s395 = ssub.s32 %s23, 1
        // Predicated region
        $region13: #{tpu_custom_call.1} parent=11 // pred_check
          %p396 = pneg %p164
        $region14: #{tpu_custom_call.1} parent=11 // pred_check_branch
          %398 = sbr.rel (%p396) target = $region16
        $region15: #{tpu_custom_call.1} parent=11 // pred_region
          _
        $region16: #{tpu_custom_call.1} parent=11 // pred_fallthru
          _
        // Predicated region
        $region17: #{tpu_custom_call.1} parent=11 // pred_check
          %p399 = pneg %p185
        $region18: #{tpu_custom_call.1} parent=11 // pred_check_branch
          %401 = sbr.rel (%p399) target = $region20
        $region19: #{tpu_custom_call.1} parent=11 // pred_region
          _
        $region20: #{tpu_custom_call.1} parent=11 // pred_fallthru
          _
        // Predicated region
        $region21: #{tpu_custom_call.1} parent=11 // pred_check
          %p402 = pneg %p206
        $region22: #{tpu_custom_call.1} parent=11 // pred_check_branch
          %404 = sbr.rel (%p402) target = $region24
        $region23: #{tpu_custom_call.1} parent=11 // pred_region
          _
        $region24: #{tpu_custom_call.1} parent=11 // pred_fallthru
          _
        // Predicated region
        $region25: #{tpu_custom_call.1} parent=11 // pred_check
          %p405 = pneg %p227
        $region26: #{tpu_custom_call.1} parent=11 // pred_check_branch
          %407 = sbr.rel (%p405) target = $region28
        $region27: #{tpu_custom_call.1} parent=11 // pred_region
          _
        $region28: #{tpu_custom_call.1} parent=11 // pred_fallthru
          _
        // Predicated region
        $region29: #{tpu_custom_call.1} parent=11 // pred_check
          %p408 = pneg %p248
        $region30: #{tpu_custom_call.1} parent=11 // pred_check_branch
          %410 = sbr.rel (%p408) target = $region32
        $region31: #{tpu_custom_call.1} parent=11 // pred_region
          _
        $region32: #{tpu_custom_call.1} parent=11 // pred_fallthru
          _
        // Predicated region
        $region33: #{tpu_custom_call.1} parent=11 // pred_check
          %p411 = pneg %p269
        $region34: #{tpu_custom_call.1} parent=11 // pred_check_branch
          %413 = sbr.rel (%p411) target = $region36
        $region35: #{tpu_custom_call.1} parent=11 // pred_region
          _
        $region36: #{tpu_custom_call.1} parent=11 // pred_fallthru
          _
        // Predicated region
        $region37: #{tpu_custom_call.1} parent=11 // pred_check
          %p414 = pneg %p290
        $region38: #{tpu_custom_call.1} parent=11 // pred_check_branch
          %416 = sbr.rel (%p414) target = $region40
        $region39: #{tpu_custom_call.1} parent=11 // pred_region
          _
        $region40: #{tpu_custom_call.1} parent=11 // pred_fallthru
          _
        // Predicated region
        $region41: #{tpu_custom_call.1} parent=11 // pred_check
          %p417 = pneg %p311
        $region42: #{tpu_custom_call.1} parent=11 // pred_check_branch
          %419 = sbr.rel (%p417) target = $region44
        $region43: #{tpu_custom_call.1} parent=11 // pred_region
          _
        $region44: #{tpu_custom_call.1} parent=11 // pred_fallthru
          _
        // Predicated region
        $region45: #{tpu_custom_call.1} parent=11 // pred_check
          %p420 = pneg %p332
        $region46: #{tpu_custom_call.1} parent=11 // pred_check_branch
          %422 = sbr.rel (%p420) target = $region48
        $region47: #{tpu_custom_call.1} parent=11 // pred_region
          _
        $region48: #{tpu_custom_call.1} parent=11 // pred_fallthru
          _
        // Predicated region
        $region49: #{tpu_custom_call.1} parent=11 // pred_check
          %p423 = pneg %p353
        $region50: #{tpu_custom_call.1} parent=11 // pred_check_branch
          %425 = sbr.rel (%p423) target = $region52
        $region51: #{tpu_custom_call.1} parent=11 // pred_region
          _
        $region52: #{tpu_custom_call.1} parent=11 // pred_fallthru
          _
      $region12: #{tpu_custom_call.1} parent=5 // pred_fallthru
        _
      %p426 = scmp.lt.s32.totalorder %s23, 4
      // Predicated region
      $region53: #{tpu_custom_call.1} parent=5 // pred_check
        %p427 = pneg %p426
      $region54: #{tpu_custom_call.1} parent=5 // pred_check_branch
        %429 = sbr.rel (%p427) target = $region56
      $region55: #{tpu_custom_call.1} parent=5 // pred_region
        // Predicated region
        $region57: #{tpu_custom_call.1} parent=55 // pred_check
          %p430 = pneg %p57
        $region58: #{tpu_custom_call.1} parent=55 // pred_check_branch
          %432 = sbr.rel (%p430) target = $region60
        $region59: #{tpu_custom_call.1} parent=55 // pred_region
          %p433 = scmp.lt.s32.totalorder %s30, 1
          %s434 = scalar_select %p433, %s30, 1
          %p435 = scmp.lt.s32.totalorder %s31, 1
          %s436 = scalar_select %p435, %s31, 1
          %s437 = smul.addr %s434, 2
          %s438 = sadd.s32 %s436, %s437
          %s439 = smul.addr %s438, 8
          %s440 = scalar_lea.vmem %s0, %s439
        $region60: #{tpu_custom_call.1} parent=55 // pred_fallthru
          _
        // Predicated region
        $region61: #{tpu_custom_call.1} parent=55 // pred_check
          %p441 = pneg %p85
        $region62: #{tpu_custom_call.1} parent=55 // pred_check_branch
          %443 = sbr.rel (%p441) target = $region64
        $region63: #{tpu_custom_call.1} parent=55 // pred_region
          %s444 = sand.u32 %s75, 1
          %s445 = sand.u32 %s75, 1
          %s446 = smul.addr %s445, 16
          %s447 = scalar_lea.vmem [#allocation2], %s446
          %s448 = smul.addr %s30, 8
          %s449 = sadd.s32 %s31, %s448
          %s450 = smul.addr %s449, 4
          %s451 = scalar_lea.vmem %s1, %s450
          // Predicated region
          $region65: #{tpu_custom_call.1} parent=63 // pred_check
            _
          $region66: #{tpu_custom_call.1} parent=63 // pred_check_branch
            %453 = sbr.rel (0) target = $region68
          $region67: #{tpu_custom_call.1} parent=63 // pred_region
            // Predicated region
            $region69: #{tpu_custom_call.1} parent=67 // pred_check
              _
            $region70: #{tpu_custom_call.1} parent=67 // pred_check_branch
              %455 = sbr.rel target = $region72
            $region71: #{tpu_custom_call.1} parent=67 // pred_region
              // Predicated region
              $region84: #{tpu_custom_call.1} parent=71 // pred_check
                _
              $region85: #{tpu_custom_call.1} parent=71 // pred_check_branch
                %477 = sbr.rel (0) target = $region87
              $region86: #{tpu_custom_call.1} parent=71 // pred_region
                loop: start=0, step=1, limit=1
                $region88: #{tpu_custom_call.1} parent=86 // loop_pre_header
                  _
                $region89: #{tpu_custom_call.1} parent=86 // loop_header
                  %s479 = sphi 0, %s483
                  %p480 = scmp.ge.s32.totalorder %s479, 1
                  %s484 = sphi %s451, %s451
                  %s485 = sphi %s447, %s447
                $region90: #{tpu_custom_call.1} parent=86 // loop_header_branch
                  %482 = sbr.rel (%p480) target = $region94
                $region91: #{tpu_custom_call.1} parent=86 // loop_body
                  _
                $region92: #{tpu_custom_call.1} parent=86 // loop_footer
                  %s483 = sadd.s32 1, %s479
                $region93: #{tpu_custom_call.1} parent=86 // loop_footer_branch
                  %478 = sbr.rel target = $region89
                $region94: #{tpu_custom_call.1} parent=86 // loop_exit
                  _
                %s487 = ssub.s32 16, 1
                loop: start=0, step=1, limit=1
                $region95: #{tpu_custom_call.1} parent=86 // loop_pre_header
                  _
                $region96: #{tpu_custom_call.1} parent=86 // loop_header
                  %s489 = sphi 0, %s493
                  %p490 = scmp.ge.s32.totalorder %s489, 1
                  %s494 = sphi %s451, %s451
                  %s495 = sphi %s447, %s447
                $region97: #{tpu_custom_call.1} parent=86 // loop_header_branch
                  %492 = sbr.rel (%p490) target = $region101
                $region98: #{tpu_custom_call.1} parent=86 // loop_body
                  %v496 = vld [vmem:[%s494] sm:%s487]
                  %497 = vst [vmem:[%s495] sm:%s487] %v496
                  %v498 = vld [vmem:[%s494 + $0x8] sm:%s487]
                  %499 = vst [vmem:[%s495 + $0x4] sm:%s487] %v498
                  %v500 = vld [vmem:[%s494 + $0x10] sm:%s487]
                  %501 = vst [vmem:[%s495 + $0x8] sm:%s487] %v500
                  %v502 = vld [vmem:[%s494 + $0x18] sm:%s487]
                  %503 = vst [vmem:[%s495 + $0xc] sm:%s487] %v502
                $region99: #{tpu_custom_call.1} parent=86 // loop_footer
                  %s493 = sadd.s32 1, %s489
                $region100: #{tpu_custom_call.1} parent=86 // loop_footer_branch
                  %488 = sbr.rel target = $region96
                $region101: #{tpu_custom_call.1} parent=86 // loop_exit
                  _
              $region87: #{tpu_custom_call.1} parent=71 // pred_fallthru
                _
            $region72: #{tpu_custom_call.1} parent=67 // pred_fallthru
              _
            // Predicated region
            $region73: #{tpu_custom_call.1} parent=67 // pred_check
              _
            $region74: #{tpu_custom_call.1} parent=67 // pred_check_branch
              %457 = sbr.rel (0) target = $region76
            $region75: #{tpu_custom_call.1} parent=67 // pred_region
              %s459 = ssub.s32 16, 1
              loop: start=0, step=1, limit=1
              $region77: #{tpu_custom_call.1} parent=75 // loop_pre_header
                _
              $region78: #{tpu_custom_call.1} parent=75 // loop_header
                %s461 = sphi 0, %s465
                %p462 = scmp.ge.s32.totalorder %s461, 1
                %s466 = sphi %s451, %s451
                %s467 = sphi %s447, %s447
              $region79: #{tpu_custom_call.1} parent=75 // loop_header_branch
                %464 = sbr.rel (%p462) target = $region83
              $region80: #{tpu_custom_call.1} parent=75 // loop_body
                %v468 = vld [vmem:[%s466] sm:%s459]
                %469 = vst [vmem:[%s467] sm:%s459] %v468
                %v470 = vld [vmem:[%s466 + $0x8] sm:%s459]
                %471 = vst [vmem:[%s467 + $0x4] sm:%s459] %v470
                %v472 = vld [vmem:[%s466 + $0x10] sm:%s459]
                %473 = vst [vmem:[%s467 + $0x8] sm:%s459] %v472
                %v474 = vld [vmem:[%s466 + $0x18] sm:%s459]
                %475 = vst [vmem:[%s467 + $0xc] sm:%s459] %v474
              $region81: #{tpu_custom_call.1} parent=75 // loop_footer
                %s465 = sadd.s32 1, %s461
              $region82: #{tpu_custom_call.1} parent=75 // loop_footer_branch
                %460 = sbr.rel target = $region78
              $region83: #{tpu_custom_call.1} parent=75 // loop_exit
                _
            $region76: #{tpu_custom_call.1} parent=67 // pred_fallthru
              _
          $region68: #{tpu_custom_call.1} parent=63 // pred_fallthru
            _
          %504 = vnop
        $region64: #{tpu_custom_call.1} parent=55 // pred_fallthru
          _
        // Predicated region
        $region102: #{tpu_custom_call.1} parent=55 // pred_check
          %p505 = pneg %p111
        $region103: #{tpu_custom_call.1} parent=55 // pred_check_branch
          %507 = sbr.rel (%p505) target = $region105
        $region104: #{tpu_custom_call.1} parent=55 // pred_region
          %p508 = scmp.lt.s32.totalorder %s30, 1
          %s509 = scalar_select %p508, %s30, 1
          %s510 = smul.addr %s509, 8
          %s511 = smul.addr %s510, 4
          %s512 = scalar_lea.vmem %s2, %s511
        $region105: #{tpu_custom_call.1} parent=55 // pred_fallthru
          _
        // Predicated region
        $region106: #{tpu_custom_call.1} parent=55 // pred_check
          %p513 = pneg %p137
        $region107: #{tpu_custom_call.1} parent=55 // pred_check_branch
          %515 = sbr.rel (%p513) target = $region109
        $region108: #{tpu_custom_call.1} parent=55 // pred_region
          %p516 = scmp.lt.s32.totalorder %s30, 1
          %s517 = scalar_select %p516, %s30, 1
          %s518 = smul.addr %s517, 8
          %s519 = smul.addr %s518, 4
          %s520 = scalar_lea.vmem %s3, %s519
        $region109: #{tpu_custom_call.1} parent=55 // pred_fallthru
          _
      $region56: #{tpu_custom_call.1} parent=5 // pred_fallthru
        _
      %p521 = scmp.le.s32.totalorder 1, %s23
      %p522 = scmp.lt.s32.totalorder %s23, 5
      %p523 = pnand %p521, %p522
      %p524 = pneg %p523
      // Predicated region
      $region110: #{tpu_custom_call.1} parent=5 // pred_check
        _
      $region111: #{tpu_custom_call.1} parent=5 // pred_check_branch
        %526 = sbr.rel (%p523) target = $region113
      $region112: #{tpu_custom_call.1} parent=5 // pred_region
        %s527 = ssub.s32 %s23, 1
        %s528 = sand.u32 %s78, 1
        %s529 = sand.u32 %s78, 1
        %s530 = smul.addr %s529, 16
        %s531 = scalar_lea.vmem [#allocation2], %s530
        // Predicated region
        $region114: #{tpu_custom_call.1} parent=112 // pred_check
          %p532 = pneg %p91
        $region115: #{tpu_custom_call.1} parent=112 // pred_check_branch
          %534 = sbr.rel (%p532) target = $region117
        $region116: #{tpu_custom_call.1} parent=112 // pred_region
          _
        $region117: #{tpu_custom_call.1} parent=112 // pred_fallthru
          _
        %p535 = scmp.lt.s32.totalorder %s32, 1
        %s536 = scalar_select %p535, %s32, 1
        %p537 = scmp.lt.s32.totalorder %s33, 1
        %s538 = scalar_select %p537, %s33, 1
        %s539 = smul.addr %s536, 2
        %s540 = sadd.s32 %s538, %s539
        %s541 = smul.addr %s540, 8
        %s542 = scalar_lea.vmem %s0, %s541
        %p543 = pneg %p63
        %p544 = pneg %p60
        %s545 = sand.u32 %s78, 1
        %s546 = sand.u32 %s78, 1
        %s547 = smul.addr %s546, 16
        %s548 = scalar_lea.vmem [#allocation2], %s547
        %p549 = pneg %p91
        %p550 = pneg %p88
        %p551 = scmp.lt.s32.totalorder %s32, 1
        %s552 = scalar_select %p551, %s32, 1
        %s553 = smul.addr %s552, 8
        %s554 = smul.addr %s553, 4
        %s555 = scalar_lea.vmem %s2, %s554
        %p556 = pneg %p117
        %p557 = pneg %p114
        %p558 = scmp.lt.s32.totalorder %s32, 1
        %s559 = scalar_select %p558, %s32, 1
        %s560 = smul.addr %s559, 8
        %s561 = smul.addr %s560, 4
        %s562 = scalar_lea.vmem %s3, %s561
        %p563 = pneg %p143
        %p564 = pneg %p140
        %p565 = pneg %p164
        %p566 = pneg %p161
        %p567 = pneg %p185
        %p568 = pneg %p182
        %p569 = pneg %p206
        %p570 = pneg %p203
        %p571 = pneg %p227
        %p572 = pneg %p224
        %p573 = pneg %p248
        %p574 = pneg %p245
        %p575 = pneg %p269
        %p576 = pneg %p266
        %p577 = pneg %p290
        %p578 = pneg %p287
        %p579 = pneg %p311
        %p580 = pneg %p308
        %p581 = pneg %p332
        %p582 = pneg %p329
        %p583 = pneg %p353
        %p584 = pneg %p350
        %p585 = pneg %p381
        %p586 = pneg %p378
        %s587 = sand.u32 %s368, 1
        %s588 = scalar_lea.sflag [#allocation4], %s587
        %s589 = sand.u32 %s368, 1
        %s590 = smul.addr %s589, 8
        %s591 = scalar_lea.vmem [#allocation3], %s590
        %p592 = scmp.lt.s32.totalorder %s32, 1
        %s593 = scalar_select %p592, %s32, 1
        %p594 = scmp.lt.s32.totalorder %s33, 1
        %s595 = scalar_select %p594, %s33, 1
        %s596 = smul.addr %s593, 2
        %s597 = sadd.s32 %s595, %s596
        %s598 = smul.addr %s597, 8
        %s599 = scalar_lea.vmem %s0, %s598
        %p600 = scmp.lt.s32.totalorder %s32, 1
        %s601 = scalar_select %p600, %s32, 1
        %s602 = smul.addr %s601, 8
        %s603 = smul.addr %s602, 4
        %s604 = scalar_lea.vmem %s2, %s603
        %p605 = scmp.lt.s32.totalorder %s32, 1
        %s606 = scalar_select %p605, %s32, 1
        %s607 = smul.addr %s606, 8
        %s608 = smul.addr %s607, 4
        %s609 = scalar_lea.vmem %s3, %s608
        %v611 = vld [vmem:[%s599] sm:$0xff]
        %v612 = vld [vmem:[%s531] sm:$0xf]
        %v613 = vld [vmem:[%s531 + $0x4] sm:$0xf]
        %v614 = vld [vmem:[%s531 + $0x8] sm:$0xf]
        %v615 = vld [vmem:[%s531 + $0xc] sm:$0xf]
        %v616 = vld [vmem:[%s604] sm:$0xf]
        %v617 = vld [vmem:[%s604 + $0x4] sm:$0xf]
        %v618 = vld [vmem:[%s604 + $0x8] sm:$0xf]
        %v619 = vld [vmem:[%s604 + $0xc] sm:$0xf]
        %v620 = vld [vmem:[%s604 + $0x10] sm:$0xf]
        %v621 = vld [vmem:[%s604 + $0x14] sm:$0xf]
        %v622 = vld [vmem:[%s604 + $0x18] sm:$0xf]
        %v623 = vld [vmem:[%s604 + $0x1c] sm:$0xf]
        %v624 = vld [vmem:[%s609] sm:$0xf]
        %v625 = vld [vmem:[%s609 + $0x4] sm:$0xf]
        %v626 = vld [vmem:[%s609 + $0x8] sm:$0xf]
        %v627 = vld [vmem:[%s609 + $0xc] sm:$0xf]
        %v628 = vld [vmem:[%s609 + $0x10] sm:$0xf]
        %v629 = vld [vmem:[%s609 + $0x14] sm:$0xf]
        %v630 = vld [vmem:[%s609 + $0x18] sm:$0xf]
        %v631 = vld [vmem:[%s609 + $0x1c] sm:$0xf]
        %v634 = vunpack.c.l.b16 %v616
        %v635 = vunpack.c.l.b16 %v617
        %v636 = vpack.c.b16 %v635, %v634
        %vm637 = vcmask 64512
        %v639 = vsel %vm637, %v612, 0
        %v642 = vsel %vm637, %v636, 0
        %644 = vmatpush.bf16.xpose.msra.mxu0 0
        %645 = vmatpush.bf16.xpose.msra.mxu0 0
        %646 = vmatpush.bf16.xpose.msra.mxu0 0
        %647 = vmatpush.bf16.xpose.msra.mxu0 0
        %648 = vmatpush.bf16.xpose.msra.mxu0 0
        %649 = vmatpush.bf16.xpose.msra.mxu0 0
        %650 = vmatpush.bf16.xpose.msra.mxu0 0
        %651 = vmatpush.bf16.xpose.msra.mxu0 %v642
        %652 = vmatmul.bf16.gmra.mxu0 %v639
        %v653 = vpop.f32.mrf.mxu0
        %v654 = vadd.f32 0.0, %v653
        %v655 = vpop.f32.mrf.mxu0
        %656 = vdwg.mxu0
        %v659 = vunpack.c.l.b16 %v618
        %v660 = vunpack.c.l.b16 %v619
        %v661 = vpack.c.b16 %v660, %v659
        %v663 = vsel %vm637, %v613, 0
        %v666 = vsel %vm637, %v661, 0
        %668 = vmatpush.bf16.xpose.msra.mxu0 0
        %669 = vmatpush.bf16.xpose.msra.mxu0 0
        %670 = vmatpush.bf16.xpose.msra.mxu0 0
        %671 = vmatpush.bf16.xpose.msra.mxu0 0
        %672 = vmatpush.bf16.xpose.msra.mxu0 0
        %673 = vmatpush.bf16.xpose.msra.mxu0 0
        %674 = vmatpush.bf16.xpose.msra.mxu0 0
        %675 = vmatpush.bf16.xpose.msra.mxu0 %v666
        %676 = vmatmul.bf16.gmra.mxu0 %v663
        %v677 = vpop.f32.mrf.mxu0
        %v678 = vadd.f32 0.0, %v677
        %v679 = vpop.f32.mrf.mxu0
        %680 = vdwg.mxu0
        %v683 = vunpack.c.l.b16 %v620
        %v684 = vunpack.c.l.b16 %v621
        %v685 = vpack.c.b16 %v684, %v683
        %v687 = vsel %vm637, %v614, 0
        %v690 = vsel %vm637, %v685, 0
        %692 = vmatpush.bf16.xpose.msra.mxu0 0
        %693 = vmatpush.bf16.xpose.msra.mxu0 0
        %694 = vmatpush.bf16.xpose.msra.mxu0 0
        %695 = vmatpush.bf16.xpose.msra.mxu0 0
        %696 = vmatpush.bf16.xpose.msra.mxu0 0
        %697 = vmatpush.bf16.xpose.msra.mxu0 0
        %698 = vmatpush.bf16.xpose.msra.mxu0 0
        %699 = vmatpush.bf16.xpose.msra.mxu0 %v690
        %700 = vmatmul.bf16.gmra.mxu0 %v687
        %v701 = vpop.f32.mrf.mxu0
        %v702 = vadd.f32 0.0, %v701
        %v703 = vpop.f32.mrf.mxu0
        %704 = vdwg.mxu0
        %v707 = vunpack.c.l.b16 %v622
        %v708 = vunpack.c.l.b16 %v623
        %v709 = vpack.c.b16 %v708, %v707
        %v711 = vsel %vm637, %v615, 0
        %v714 = vsel %vm637, %v709, 0
        %716 = vmatpush.bf16.xpose.msra.mxu0 0
        %717 = vmatpush.bf16.xpose.msra.mxu0 0
        %718 = vmatpush.bf16.xpose.msra.mxu0 0
        %719 = vmatpush.bf16.xpose.msra.mxu0 0
        %720 = vmatpush.bf16.xpose.msra.mxu0 0
        %721 = vmatpush.bf16.xpose.msra.mxu0 0
        %722 = vmatpush.bf16.xpose.msra.mxu0 0
        %723 = vmatpush.bf16.xpose.msra.mxu0 %v714
        %724 = vmatmul.bf16.gmra.mxu0 %v711
        %v725 = vpop.f32.mrf.mxu0
        %v726 = vadd.f32 0.0, %v725
        %v727 = vpop.f32.mrf.mxu0
        %728 = vdwg.mxu0
        %vm729 = vcmask 130048
        %v730 = vsel %vm729, %v654, -inf
        %731 = vmax.xlane.f32.xlu0 %v730
        %v732 = vpop.xlane.xlu0 %731
        %v733 = vsel %vm729, %v678, -inf
        %734 = vmax.xlane.f32.xlu0 %v733
        %v735 = vpop.xlane.xlu0 %734
        %v736 = vsel %vm729, %v702, -inf
        %737 = vmax.xlane.f32.xlu0 %v736
        %v738 = vpop.xlane.xlu0 %737
        %v739 = vsel %vm729, %v726, -inf
        %740 = vmax.xlane.f32.xlu0 %v739
        %v741 = vpop.xlane.xlu0 %740
        %v742 = vsub.f32 %v654, %v732
        %v743 = vsub.f32 %v678, %v735
        %v744 = vsub.f32 %v702, %v738
        %v745 = vsub.f32 %v726, %v741
        %v746 = vmul.f32 %v742, 1.442695
        %v747 = vpow.pop %v746
        %v748 = vmul.f32 %v743, 1.442695
        %v749 = vpow.pop %v748
        %v750 = vmul.f32 %v744, 1.442695
        %v751 = vpow.pop %v750
        %v752 = vmul.f32 %v745, 1.442695
        %v753 = vpow.pop %v752
        %v754 = vsel %vm729, %v747, 0.0
        %755 = vadd.xlane.f32.xlu0 %v754
        %v756 = vpop.xlane.xlu0 %755
        %v757 = vsel %vm729, %v749, 0.0
        %758 = vadd.xlane.f32.xlu0 %v757
        %v759 = vpop.xlane.xlu0 %758
        %v760 = vsel %vm729, %v751, 0.0
        %761 = vadd.xlane.f32.xlu0 %v760
        %v762 = vpop.xlane.xlu0 %761
        %v763 = vsel %vm729, %v753, 0.0
        %764 = vadd.xlane.f32.xlu0 %v763
        %v765 = vpop.xlane.xlu0 %764
        %v766 = vrcp.pop %v756
        %v767 = vrcp.pop %v759
        %v768 = vrcp.pop %v762
        %v769 = vrcp.pop %v765
        %v770 = vmul.f32 %v747, %v766
        %v771 = vmul.f32 %v749, %v767
        %v772 = vmul.f32 %v751, %v768
        %v773 = vmul.f32 %v753, %v769
        %v774 = vpack.c.bf16 %v770, %v770
        %v775 = vpack.c.bf16 %v771, %v771
        %v776 = vpack.c.bf16 %v772, %v772
        %v777 = vpack.c.bf16 %v773, %v773
        %v780 = vunpack.c.l.b16 %v624
        %v781 = vunpack.c.l.b16 %v625
        %v782 = vpack.c.b16 %v781, %v780
        %v785 = vsel %vm729, %v774, 0
        %787 = vmatpush.bf16.msra.mxu0 0
        %788 = vmatpush.bf16.msra.mxu0 0
        %789 = vmatpush.bf16.msra.mxu0 0
        %790 = vmatpush.bf16.msra.mxu0 0
        %791 = vmatpush.bf16.msra.mxu0 0
        %792 = vmatpush.bf16.msra.mxu0 0
        %793 = vmatpush.bf16.msra.mxu0 0
        %794 = vmatpush.bf16.msra.mxu0 %v782
        %795 = vmatmul.bf16.gmra.mxu0 %v785
        %v796 = vpop.f32.mrf.mxu0
        %v797 = vadd.f32 0.0, %v796
        %v798 = vpop.f32.mrf.mxu0
        %799 = vdwg.mxu0
        %v802 = vunpack.c.l.b16 %v626
        %v803 = vunpack.c.l.b16 %v627
        %v804 = vpack.c.b16 %v803, %v802
        %v807 = vsel %vm729, %v775, 0
        %809 = vmatpush.bf16.msra.mxu0 0
        %810 = vmatpush.bf16.msra.mxu0 0
        %811 = vmatpush.bf16.msra.mxu0 0
        %812 = vmatpush.bf16.msra.mxu0 0
        %813 = vmatpush.bf16.msra.mxu0 0
        %814 = vmatpush.bf16.msra.mxu0 0
        %815 = vmatpush.bf16.msra.mxu0 0
        %816 = vmatpush.bf16.msra.mxu0 %v804
        %817 = vmatmul.bf16.gmra.mxu0 %v807
        %v818 = vpop.f32.mrf.mxu0
        %v819 = vadd.f32 0.0, %v818
        %v820 = vpop.f32.mrf.mxu0
        %821 = vdwg.mxu0
        %v824 = vunpack.c.l.b16 %v628
        %v825 = vunpack.c.l.b16 %v629
        %v826 = vpack.c.b16 %v825, %v824
        %v829 = vsel %vm729, %v776, 0
        %831 = vmatpush.bf16.msra.mxu0 0
        %832 = vmatpush.bf16.msra.mxu0 0
        %833 = vmatpush.bf16.msra.mxu0 0
        %834 = vmatpush.bf16.msra.mxu0 0
        %835 = vmatpush.bf16.msra.mxu0 0
        %836 = vmatpush.bf16.msra.mxu0 0
        %837 = vmatpush.bf16.msra.mxu0 0
        %838 = vmatpush.bf16.msra.mxu0 %v826
        %839 = vmatmul.bf16.gmra.mxu0 %v829
        %v840 = vpop.f32.mrf.mxu0
        %v841 = vadd.f32 0.0, %v840
        %v842 = vpop.f32.mrf.mxu0
        %843 = vdwg.mxu0
        %v846 = vunpack.c.l.b16 %v630
        %v847 = vunpack.c.l.b16 %v631
        %v848 = vpack.c.b16 %v847, %v846
        %v851 = vsel %vm729, %v777, 0
        %853 = vmatpush.bf16.msra.mxu0 0
        %854 = vmatpush.bf16.msra.mxu0 0
        %855 = vmatpush.bf16.msra.mxu0 0
        %856 = vmatpush.bf16.msra.mxu0 0
        %857 = vmatpush.bf16.msra.mxu0 0
        %858 = vmatpush.bf16.msra.mxu0 0
        %859 = vmatpush.bf16.msra.mxu0 0
        %860 = vmatpush.bf16.msra.mxu0 %v848
        %861 = vmatmul.bf16.gmra.mxu0 %v851
        %v862 = vpop.f32.mrf.mxu0
        %v863 = vadd.f32 0.0, %v862
        %v864 = vpop.f32.mrf.mxu0
        %865 = vdwg.mxu0
        %v866 = vpack.c.bf16 %v797, %v797
        %v867 = vpack.c.bf16 %v819, %v819
        %v868 = vpack.c.bf16 %v841, %v841
        %v869 = vpack.c.bf16 %v863, %v863
        %v870 = vld [vmem:[%s5] sm:$0x1]
        %v871 = vld [vmem:[%s4] sm:$0xf]
        %v873 = vsel %vm637, %v866, 0
        %vm875 = vcmask 1043456
        %v877 = vsel %vm875, %v871, 0
        %879 = vmatpush.bf16.msra.mxu0 0
        %880 = vmatpush.bf16.msra.mxu0 0
        %881 = vmatpush.bf16.msra.mxu0 0
        %882 = vmatpush.bf16.msra.mxu0 0
        %883 = vmatpush.bf16.msra.mxu0 0
        %884 = vmatpush.bf16.msra.mxu0 0
        %885 = vmatpush.bf16.msra.mxu0 0
        %886 = vmatpush.bf16.msra.mxu0 %v877
        %887 = vmatmul.bf16.gmra.mxu0 %v873
        %v888 = vpop.f32.mrf.mxu0
        %v889 = vadd.f32 0.0, %v888
        %v890 = vpop.f32.mrf.mxu0
        %891 = vdwg.mxu0
        %v893 = vperm.slane %v870, 0
        %v895 = vadd.f32 %v893, %v889
        %s896 = scalar_lea.vmem %s4, 4
        %v897 = vld [vmem:[%s896] sm:$0xf]
        %v899 = vsel %vm637, %v867, 0
        %v902 = vsel %vm875, %v897, 0
        %904 = vmatpush.bf16.msra.mxu0 0
        %905 = vmatpush.bf16.msra.mxu0 0
        %906 = vmatpush.bf16.msra.mxu0 0
        %907 = vmatpush.bf16.msra.mxu0 0
        %908 = vmatpush.bf16.msra.mxu0 0
        %909 = vmatpush.bf16.msra.mxu0 0
        %910 = vmatpush.bf16.msra.mxu0 0
        %911 = vmatpush.bf16.msra.mxu0 %v902
        %912 = vmatmul.bf16.gmra.mxu0 %v899
        %v913 = vpop.f32.mrf.mxu0
        %v914 = vadd.f32 0.0, %v913
        %v915 = vpop.f32.mrf.mxu0
        %916 = vdwg.mxu0
        %v917 = vadd.f32 %v895, %v914
        %s918 = scalar_lea.vmem %s4, 8
        %v919 = vld [vmem:[%s918] sm:$0xf]
        %v921 = vsel %vm637, %v868, 0
        %v924 = vsel %vm875, %v919, 0
        %926 = vmatpush.bf16.msra.mxu0 0
        %927 = vmatpush.bf16.msra.mxu0 0
        %928 = vmatpush.bf16.msra.mxu0 0
        %929 = vmatpush.bf16.msra.mxu0 0
        %930 = vmatpush.bf16.msra.mxu0 0
        %931 = vmatpush.bf16.msra.mxu0 0
        %932 = vmatpush.bf16.msra.mxu0 0
        %933 = vmatpush.bf16.msra.mxu0 %v924
        %934 = vmatmul.bf16.gmra.mxu0 %v921
        %v935 = vpop.f32.mrf.mxu0
        %v936 = vadd.f32 0.0, %v935
        %v937 = vpop.f32.mrf.mxu0
        %938 = vdwg.mxu0
        %v939 = vadd.f32 %v917, %v936
        %s940 = scalar_lea.vmem %s4, 12
        %v941 = vld [vmem:[%s940] sm:$0xf]
        %v943 = vsel %vm637, %v869, 0
        %v946 = vsel %vm875, %v941, 0
        %948 = vmatpush.bf16.msra.mxu0 0
        %949 = vmatpush.bf16.msra.mxu0 0
        %950 = vmatpush.bf16.msra.mxu0 0
        %951 = vmatpush.bf16.msra.mxu0 0
        %952 = vmatpush.bf16.msra.mxu0 0
        %953 = vmatpush.bf16.msra.mxu0 0
        %954 = vmatpush.bf16.msra.mxu0 0
        %955 = vmatpush.bf16.msra.mxu0 %v946
        %956 = vmatmul.bf16.gmra.mxu0 %v943
        %v957 = vpop.f32.mrf.mxu0
        %v958 = vadd.f32 0.0, %v957
        %v959 = vpop.f32.mrf.mxu0
        %960 = vdwg.mxu0
        %v961 = vadd.f32 %v939, %v958
        %v962 = vld [vmem:[%s6] sm:$0x1]
        %v963 = vld [vmem:[%s7] sm:$0x1]
        %vm964 = vcmask 261120
        %v965 = vsel %vm964, %v961, 0.0
        %966 = vadd.xlane.f32.xlu0 %v965
        %v967 = vpop.xlane.xlu0 %966
        %v968 = vrcp.pop 32.0
        %v969 = vmul.f32 32.0, %v968
        %v970 = vsub.f32 1.0, %v969
        %v971 = vmul.f32 %v968, %v970
        %v972 = vadd.f32 %v968, %v971
        %vm973 = vweird.f32 %v968
        %v974 = vsel %vm973, %v968, %v972
        %v975 = vmul.f32 %v967, %v974
        %v976 = vsub.f32 %v961, %v975
        %v977 = vmul.f32 %v976, %v976
        %v978 = vsel %vm964, %v977, 0.0
        %979 = vadd.xlane.f32.xlu0 %v978
        %v980 = vpop.xlane.xlu0 %979
        %v981 = vmul.f32 %v980, %v974
        %v982 = vadd.f32 %v981, 1e-05
        %v983 = vrsqrt.pop %v982
        %v984 = vmul.f32 %v983, %v982
        %v985 = vmul.f32 %v984, %v983
        %v986 = vmul.f32 0.5, %v985
        %v987 = vsub.f32 1.5, %v986
        %v988 = vmul.f32 %v983, %v987
        %vm989 = vweird.f32 %v982
        %vm990 = vweird.f32 %v983
        %vm991 = vmor %vm989, %vm990
        %v992 = vsel %vm991, %v983, %v988
        %v993 = vmul.f32 %v976, %v992
        %v995 = vperm.slane %v962, 0
        %v997 = vmul.f32 %v993, %v995
        %v999 = vperm.slane %v963, 0
        %v1001 = vadd.f32 %v997, %v999
        %v1002 = vadd.f32 %v611, %v1001
        %v1003 = vpack.c.bf16 %v1002, %v1002
        %v1004 = vld [vmem:[%s8] sm:$0xf]
        %v1005 = vld [vmem:[%s8 + $0x4] sm:$0xf]
        %v1006 = vld [vmem:[%s8 + $0x8] sm:$0xf]
        %v1007 = vld [vmem:[%s8 + $0xc] sm:$0xf]
        %v1008 = vld [vmem:[%s9] sm:$0x1]
        %v1010 = vperm.slane %v1008, 0
        %v1016 = vunpack.c.l.b16 %v1004
        %v1017 = vunpack.c.l.b16 %v1005
        %v1018 = vunpack.c.l.b16 %v1006
        %v1019 = vunpack.c.l.b16 %v1007
        %v1020 = vpack.c.b16 %v1017, %v1016
        %v1021 = vpack.c.b16 %v1019, %v1018
        %v1025 = vsel %vm964, %v1003, 0
        %1027 = vmatpush.bf16.msra.mxu0 0
        %1028 = vmatpush.bf16.msra.mxu0 0
        %1029 = vmatpush.bf16.msra.mxu0 0
        %1030 = vmatpush.bf16.msra.mxu0 0
        %1031 = vmatpush.bf16.msra.mxu0 0
        %1032 = vmatpush.bf16.msra.mxu0 0
        %1033 = vmatpush.bf16.msra.mxu0 %v1021
        %1034 = vmatpush.bf16.msra.mxu0 %v1020
        %1035 = vmatmul.bf16.gmra.mxu0 %v1025
        %v1036 = vpop.f32.mrf.mxu0
        %v1037 = vadd.f32 %v1010, %v1036
        %v1038 = vpop.f32.mrf.mxu0
        %1039 = vdwg.mxu0
        %v1040 = vmul.f32 %v1037, 0.5
        %v1041 = vmul.f32 %v1037, 0.70710677
        %v1042 = vmul.f32 %v1041, %v1041
        %v1043 = vmin.f32 16.0, %v1042
        %v1044 = vmul.f32 %v1043, 2.1237322e-06
        %v1045 = vadd.f32 %v1044, 0.00028619796
        %v1046 = vmul.f32 %v1043, %v1045
        %v1047 = vadd.f32 %v1046, 0.0036580483
        %v1048 = vmul.f32 %v1043, %v1047
        %v1049 = vadd.f32 %v1048, 0.05243302
        %v1050 = vmul.f32 %v1043, %v1049
        %v1051 = vadd.f32 %v1050, 0.18741608
        %v1052 = vmul.f32 %v1043, %v1051
        %v1053 = vadd.f32 %v1052, 1.1283791
        %v1054 = vmul.f32 %v1041, %v1053
        %v1055 = vmul.f32 %v1043, 3.8918573e-05
        %v1056 = vadd.f32 %v1055, 0.001143296
        %v1057 = vmul.f32 %v1043, %v1056
        %v1058 = vadd.f32 %v1057, 0.014752088
        %v1059 = vmul.f32 %v1043, %v1058
        %v1060 = vadd.f32 %v1059, 0.112945676
        %v1061 = vmul.f32 %v1043, %v1060
        %v1062 = vadd.f32 %v1061, 0.4994258
        %v1063 = vmul.f32 %v1043, %v1062
        %v1064 = vadd.f32 %v1063, 1.0
        %v1065 = vrcp.pop %v1064
        %v1066 = vmul.f32 %v1064, %v1065
        %v1067 = vsub.f32 1.0, %v1066
        %v1068 = vmul.f32 %v1065, %v1067
        %v1069 = vadd.f32 %v1065, %v1068
        %vm1070 = vweird.f32 %v1064
        %vm1071 = vweird.f32 %v1065
        %vm1072 = vmor %vm1070, %vm1071
        %v1073 = vsel %vm1072, %v1065, %v1069
        %v1074 = vand.u32 2147483647, %v1064
        %vm1075 = vcmp.eq.f32.partialorder %v1074, 8.507059e+37
        %v1076 = vand.u32 %v1064, 2147483648
        %v1077 = vor.u32 1.1754944e-38, %v1076
        %v1078 = vsel %vm1075, %v1077, %v1073
        %v1079 = vmul.f32 %v1054, %v1078
        %v1080 = vmin.f32 %v1079, 1.0
        %v1081 = vmax.f32 %v1080, -1.0
        %v1082 = vadd.f32 %v1081, 1.0
        %v1083 = vmul.f32 %v1040, %v1082
        %v1084 = vpack.c.bf16 %v1083, %v1083
        %v1085 = vld [vmem:[%s10] sm:$0xf]
        %v1086 = vld [vmem:[%s10 + $0x4] sm:$0xf]
        %v1087 = vld [vmem:[%s10 + $0x8] sm:$0xf]
        %v1088 = vld [vmem:[%s10 + $0xc] sm:$0xf]
        %v1089 = vld [vmem:[%s10 + $0x10] sm:$0xf]
        %v1090 = vld [vmem:[%s10 + $0x14] sm:$0xf]
        %v1091 = vld [vmem:[%s10 + $0x18] sm:$0xf]
        %v1092 = vld [vmem:[%s10 + $0x1c] sm:$0xf]
        %v1093 = vld [vmem:[%s10 + $0x20] sm:$0xf]
        %v1094 = vld [vmem:[%s10 + $0x24] sm:$0xf]
        %v1095 = vld [vmem:[%s10 + $0x28] sm:$0xf]
        %v1096 = vld [vmem:[%s10 + $0x2c] sm:$0xf]
        %v1097 = vld [vmem:[%s10 + $0x30] sm:$0xf]
        %v1098 = vld [vmem:[%s10 + $0x34] sm:$0xf]
        %v1099 = vld [vmem:[%s10 + $0x38] sm:$0xf]
        %v1100 = vld [vmem:[%s10 + $0x3c] sm:$0xf]
        %v1101 = vld [vmem:[%s11] sm:$0x1]
        %v1103 = vperm.slane %v1101, 0
        %v1121 = vunpack.c.l.b16 %v1085
        %v1122 = vunpack.c.l.b16 %v1086
        %v1123 = vunpack.c.l.b16 %v1087
        %v1124 = vunpack.c.l.b16 %v1088
        %v1125 = vunpack.c.l.b16 %v1089
        %v1126 = vunpack.c.l.b16 %v1090
        %v1127 = vunpack.c.l.b16 %v1091
        %v1128 = vunpack.c.l.b16 %v1092
        %v1129 = vunpack.c.l.b16 %v1093
        %v1130 = vunpack.c.l.b16 %v1094
        %v1131 = vunpack.c.l.b16 %v1095
        %v1132 = vunpack.c.l.b16 %v1096
        %v1133 = vunpack.c.l.b16 %v1097
        %v1134 = vunpack.c.l.b16 %v1098
        %v1135 = vunpack.c.l.b16 %v1099
        %v1136 = vunpack.c.l.b16 %v1100
        %v1137 = vpack.c.b16 %v1122, %v1121
        %v1138 = vpack.c.b16 %v1124, %v1123
        %v1139 = vpack.c.b16 %v1126, %v1125
        %v1140 = vpack.c.b16 %v1128, %v1127
        %v1141 = vpack.c.b16 %v1130, %v1129
        %v1142 = vpack.c.b16 %v1132, %v1131
        %v1143 = vpack.c.b16 %v1134, %v1133
        %v1144 = vpack.c.b16 %v1136, %v1135
        %1153 = vmatpush.bf16.msra.mxu0 %v1144
        %1154 = vmatpush.bf16.msra.mxu0 %v1143
        %1155 = vmatpush.bf16.msra.mxu0 %v1142
        %1156 = vmatpush.bf16.msra.mxu0 %v1141
        %1157 = vmatpush.bf16.msra.mxu0 %v1140
        %1158 = vmatpush.bf16.msra.mxu0 %v1139
        %1159 = vmatpush.bf16.msra.mxu0 %v1138
        %1160 = vmatpush.bf16.msra.mxu0 %v1137
        %1161 = vmatmul.bf16.gmra.mxu0 %v1084
        %v1162 = vpop.f32.mrf.mxu0
        %v1163 = vadd.f32 %v1103, %v1162
        %v1164 = vpop.f32.mrf.mxu0
        %1165 = vdwg.mxu0
        %v1166 = vld [vmem:[%s12] sm:$0x1]
        %v1167 = vld [vmem:[%s13] sm:$0x1]
        %v1168 = vsel %vm964, %v1163, 0.0
        %1169 = vadd.xlane.f32.xlu0 %v1168
        %v1170 = vpop.xlane.xlu0 %1169
        %v1171 = vmul.f32 %v1170, %v974
        %v1172 = vsub.f32 %v1163, %v1171
        %v1173 = vmul.f32 %v1172, %v1172
        %v1174 = vsel %vm964, %v1173, 0.0
        %1175 = vadd.xlane.f32.xlu0 %v1174
        %v1176 = vpop.xlane.xlu0 %1175
        %v1177 = vmul.f32 %v1176, %v974
        %v1178 = vadd.f32 %v1177, 1e-05
        %v1179 = vrsqrt.pop %v1178
        %v1180 = vmul.f32 %v1179, %v1178
        %v1181 = vmul.f32 %v1180, %v1179
        %v1182 = vmul.f32 0.5, %v1181
        %v1183 = vsub.f32 1.5, %v1182
        %v1184 = vmul.f32 %v1179, %v1183
        %vm1185 = vweird.f32 %v1178
        %vm1186 = vweird.f32 %v1179
        %vm1187 = vmor %vm1185, %vm1186
        %v1188 = vsel %vm1187, %v1179, %v1184
        %v1189 = vmul.f32 %v1172, %v1188
        %v1191 = vperm.slane %v1166, 0
        %v1193 = vmul.f32 %v1189, %v1191
        %v1195 = vperm.slane %v1167, 0
        %v1197 = vadd.f32 %v1193, %v1195
        %v1198 = vadd.f32 %v1002, %v1197
        %1199 = vst.msk [vmem:[%s591] sm:$0xff] %vm964, %v1198
        %s1200 = sand.u32 %s368, 1
        %s1201 = scalar_lea.sflag [#allocation4], %s1200
        %s1202 = sand.u32 %s368, 1
        %s1203 = smul.addr %s1202, 8
        %s1204 = scalar_lea.vmem [#allocation3], %s1203
        // Predicated region
        $region118: #{tpu_custom_call.1} parent=112 // pred_check
          %p1205 = pneg %p378
        $region119: #{tpu_custom_call.1} parent=112 // pred_check_branch
          %1207 = sbr.rel (%p1205) target = $region121
        $region120: #{tpu_custom_call.1} parent=112 // pred_region
          %1209 = vsyncadd %s1201, 0
          %s1210 = smul.addr %s32, 2
          %s1211 = sadd.s32 %s33, %s1210
          %s1212 = smul.addr %s1211, 8
          %s1213 = scalar_lea.hbm %s14, %s1212
          %s1215 = sshll.u32 %s1204, 4
          %s1216 = int_to_ptr.vmem [resolvable:$true] %s1215
          %s1217 = sshll.u32 %s1213, 4
          %s1218 = int_to_ptr.hbm [resolvable:$true] %s1217
          %1220 = dma.vmem_to_hbm [thread:$0]  %s1216, 128, %s1218, %s1201
        $region121: #{tpu_custom_call.1} parent=112 // pred_fallthru
          _
      $region113: #{tpu_custom_call.1} parent=5 // pred_fallthru
        _
      %p1221 = scmp.le.s32.totalorder 2, %s23
      // Predicated region
      $region122: #{tpu_custom_call.1} parent=5 // pred_check
        %p1222 = pneg %p1221
      $region123: #{tpu_custom_call.1} parent=5 // pred_check_branch
        %1224 = sbr.rel (%p1222) target = $region125
      $region124: #{tpu_custom_call.1} parent=5 // pred_region
        %s1225 = ssub.s32 %s23, 2
        // Predicated region
        $region126: #{tpu_custom_call.1} parent=124 // pred_check
          %p1226 = pneg %p384
        $region127: #{tpu_custom_call.1} parent=124 // pred_check_branch
          %1228 = sbr.rel (%p1226) target = $region129
        $region128: #{tpu_custom_call.1} parent=124 // pred_region
          %s1229 = sand.u32 %s369, 1
          %s1230 = scalar_lea.sflag [#allocation4], %s1229
          %s1231 = sand.u32 %s369, 1
          %s1232 = smul.addr %s1231, 8
          %s1233 = scalar_lea.vmem [#allocation3], %s1232
          %1235 = dma.done %s1230, 128
        $region129: #{tpu_custom_call.1} parent=124 // pred_fallthru
          _
      $region125: #{tpu_custom_call.1} parent=5 // pred_fallthru
        _
    $region6: #{tpu_custom_call.1} parent=1 // loop_footer
      %s27 = sadd.s32 1, %s23
    $region7: #{tpu_custom_call.1} parent=1 // loop_footer_branch
      %22 = sbr.rel target = $region3
    $region8: #{tpu_custom_call.1} parent=1 // loop_exit
      _
    %1236 = vsyncpa [#allocation4], 1
    %s1237 = scalar_lea.sflag [#allocation4], 1
    %1238 = vsyncpa %s1237, 1

</llo_original>
